<compile_context>
chip_gen: v7x
topology: tpu7x:2x2x1
jax: 0.10.0
libtpu: 0.0.40
codegen_flags: <defaults>
</compile_context>

<pallas_src>
import jax
import jax.numpy as jnp
from jax.experimental import pallas as pl
from jax.experimental.pallas import tpu as pltpu


def _round_up(a, m):
    return ((a + m - 1) // m) * m


def _ceil_div(a, b):
    return (a + b - 1) // b


def _pick_batch_tile(B, *, unit=256, max_rows=2048, prefer_even_steps=False):
    """Adaptive batch tile.

    Per-grid-step fixed overhead (~0.35 us) exceeds per-tile compute at small
    tiles, so use as few steps as possible (<= max_rows rows each).  On v7x
    (prefer_even_steps) keep an even number of steps so the "parallel" grid
    axis can shard across the two TensorCores.
    """
    if B <= unit:
        return unit
    if not prefer_even_steps and B <= max_rows:
        return _round_up(B, unit)                  # single step (v5e/v6e, small B)
    if B <= 2 * max_rows:
        return _round_up(_ceil_div(B, 2), unit)    # exactly two steps
    n_steps = _ceil_div(B, max_rows)
    if prefer_even_steps:
        n_steps = _round_up(n_steps, 2)
    return _round_up(_ceil_div(B, n_steps), unit)


def _make_mlp_kernel(n_sub, bf16_epilogue):
    def mlp_kernel(x_ref,
                   w0_ref, b0_ref,
                   w1_ref, b1_ref,
                   w2_ref, b2_ref,
                   w3_ref, b3_ref,
                   w4_ref, b4_ref,
                   o_ref):
        bt, in_dim = x_ref.shape
        out_dim = w4_ref.shape[0]
        rs = bt // n_sub

        # Static unrolled loop over independent row sub-blocks: the MXU work of
        # one sub-block overlaps the VPU epilogue / layer-0 FMAs of the other.
        for s in range(n_sub):
            rows = pl.ds(s * rs, rs)
            x = x_ref[rows, :]                       # (rs, in_dim) f32

            # ---- Layer 0: Linear(in_dim -> hidden) + ReLU on the VPU --------
            # K = in_dim (=2) would waste the MXU; broadcast FMAs instead.
            h = x[:, 0:1] * w0_ref[0:1, :]
            for k in range(1, in_dim):               # tiny static unrolled loop
                h = h + x[:, k:k + 1] * w0_ref[k:k + 1, :]
            h = jnp.maximum(h + b0_ref[...], 0.0)
            if bf16_epilogue:
                h = h.astype(jnp.bfloat16)

            # ---- Hidden layers: bf16 MXU matmuls, f32 accumulation, ReLU ----
            for w_ref, b_ref in ((w1_ref, b1_ref),
                                 (w2_ref, b2_ref),
                                 (w3_ref, b3_ref)):
                acc = jnp.dot(h.astype(jnp.bfloat16), w_ref[...],
                              preferred_element_type=jnp.float32)
                if bf16_epilogue:
                    # bias-add + ReLU in bf16 (native bf16 VALU on v6e/v7x);
                    # halves the vregs touched by the saturating VALU slot.
                    h = jnp.maximum(acc.astype(jnp.bfloat16) + b_ref[...], 0.0)
                else:
                    h = jnp.maximum(acc + b_ref[...], 0.0)

            # ---- Output layer: Linear(hidden -> out_dim), no activation -----
            # out_dim is tiny (1): broadcast-multiply + XLU lane reduction,
            # narrow (rs, out_dim) store instead of a padded 128-wide matmul.
            hf = h.astype(jnp.float32)
            cols = [jnp.sum(hf * w4_ref[c:c + 1, :], axis=-1, keepdims=True)
                    for c in range(out_dim)]
            out = cols[0] if out_dim == 1 else jnp.concatenate(cols, axis=-1)
            o_ref[rows, :] = (out + b4_ref[...]).astype(o_ref.dtype)

    return mlp_kernel


def mlp_forward(x, params, *, batch_tile=None, bf16_epilogue=None, n_sub=2):
    """x: (B, in_dim) float32.

    params: list of 5 (W_t, b) pairs with W_t (in_features, out_features)
    (i.e. PyTorch weight pre-transposed) and b (1, out_features), float32.
    """
    B, in_dim = x.shape
    out_dim = params[-1][0].shape[1]

    kind = jax.devices()[0].device_kind.lower()
    if bf16_epilogue is None:
        bf16_epilogue = ('v6' in kind) or ('v7' in kind)   # needs bf16 VALU
    prefer_even = 'v7' in kind                             # 2 TensorCores/chip

    bt = batch_tile if batch_tile is not None else _pick_batch_tile(
        B, prefer_even_steps=prefer_even)
    assert bt % (8 * n_sub) == 0, "batch tile must split into aligned sub-blocks"

    # ---- one-time parameter layout / dtype prep (constant-folded under jit) -
    w0, b0 = params[0]
    kp = [w0.astype(jnp.float32), b0.astype(jnp.float32)]
    bias_dt = jnp.bfloat16 if bf16_epilogue else jnp.float32
    for (w, b) in params[1:-1]:
        kp += [w.astype(jnp.bfloat16), b.astype(bias_dt)]
    w4, b4 = params[-1]                      # (hidden, out_dim), (1, out_dim)
    kp += [w4.T.astype(jnp.float32),         # (out_dim, hidden) rows for the lane-reduce
           b4.astype(jnp.float32)]

    # ---- pad batch to a multiple of the tile --------------------------------
    b_pad = _round_up(B, bt)
    if b_pad != B:
        x = jnp.pad(x, ((0, b_pad - B), (0, 0)))
    grid = (b_pad // bt,)

    def const_spec(arr):
        # Constant block index across the grid: Pallas keeps the block
        # VMEM-resident, no per-step re-DMA.
        return pl.BlockSpec(arr.shape, lambda i: (0, 0))

    in_specs = [pl.BlockSpec((bt, in_dim), lambda i: (i, 0))]
    in_specs += [const_spec(p) for p in kp]

    out = pl.pallas_call(
        _make_mlp_kernel(n_sub, bf16_epilogue),
        out_shape=jax.ShapeDtypeStruct((b_pad, out_dim), jnp.float32),
        grid_spec=pltpu.PrefetchScalarGridSpec(
            num_scalar_prefetch=0,
            grid=grid,
            in_specs=in_specs,
            out_specs=pl.BlockSpec((bt, out_dim), lambda i: (i, 0)),
        ),
        compiler_params=pltpu.CompilerParams(
            dimension_semantics=("parallel",),
        ),
    )(x, *kp)

    return out if b_pad == B else out[:B]


def init_params(key, in_dim=2, hidden_dim=256, out_dim=1):
    """Deterministic init matching the PyTorch MLP layer shapes.

    Weights are returned pre-transposed to (in_features, out_features)."""
    dims = [(in_dim, hidden_dim),
            (hidden_dim, hidden_dim),
            (hidden_dim, hidden_dim),
            (hidden_dim, hidden_dim),
            (hidden_dim, out_dim)]
    params = []
    for (fan_in, fan_out) in dims:
        key, kw, kb = jax.random.split(key, 3)
        bound = 1.0 / jnp.sqrt(fan_in)  # PyTorch nn.Linear default uniform bound
        w_t = jax.random.uniform(kw, (fan_in, fan_out), jnp.float32, -bound, bound)
        b = jax.random.uniform(kb, (1, fan_out), jnp.float32, -bound, bound)
        params.append((w_t, b))
    return params


def mlp_reference(x, params, *, bf16_hidden_weights=False):
    """Pure-JAX reference.  With bf16_hidden_weights=True, the hidden-layer
    weights are round-tripped through bf16 to match the kernel's quantization
    (remaining kernel error is bf16 activation/epilogue rounding only)."""
    h = x
    n = len(params)
    for i, (w, b) in enumerate(params):
        if bf16_hidden_weights and 1 <= i < n - 1:
            w = w.astype(jnp.bfloat16).astype(jnp.float32)
        h = h @ w + b
        if i < n - 1:
            h = jnp.maximum(h, 0.0)
    return h


if __name__ == "__main__":
    key = jax.random.PRNGKey(0)
    k_x, k_p = jax.random.split(key)

    B, in_dim, hidden_dim, out_dim = 512, 2, 256, 1
    x = jax.random.normal(k_x, (B, in_dim), jnp.float32)
    params = init_params(k_p, in_dim=in_dim, hidden_dim=hidden_dim, out_dim=out_dim)

    # Adaptive tile: single 512-row step on v5e/v6e, 2 x 256 (one per TC) on v7x.
    y = mlp_forward(x, params)
    y = jax.block_until_ready(y)
    assert y.shape == (B, out_dim)

    # Validate against the quantization-matched reference (hidden weights in
    # bf16, everything else f32); remaining error is bf16 rounding only.
    y_ref = mlp_reference(x, params, bf16_hidden_weights=True)
    assert jnp.allclose(y, y_ref, atol=5e-2, rtol=5e-2), "mismatch vs reference"

    print("KERNEL_OK")
</pallas_src>

<mosaic_0001>
module attributes {stable_mosaic.version = 11 : i64} {
  func.func @mlp_kernel(%arg0: i32, %arg1: memref<512x2xf32, #tpu.memory_space<vmem>>, %arg2: memref<2x256xf32, #tpu.memory_space<vmem>>, %arg3: memref<1x256xf32, #tpu.memory_space<vmem>>, %arg4: memref<256x256xbf16, #tpu.memory_space<vmem>>, %arg5: memref<1x256xf32, #tpu.memory_space<vmem>>, %arg6: memref<256x256xbf16, #tpu.memory_space<vmem>>, %arg7: memref<1x256xf32, #tpu.memory_space<vmem>>, %arg8: memref<256x256xbf16, #tpu.memory_space<vmem>>, %arg9: memref<1x256xf32, #tpu.memory_space<vmem>>, %arg10: memref<1x256xf32, #tpu.memory_space<vmem>>, %arg11: memref<1x1xf32, #tpu.memory_space<vmem>>, %arg12: memref<512x1xf32, #tpu.memory_space<vmem>>) attributes {dimension_semantics = [#tpu.dimension_semantics<parallel>], iteration_bounds = array<i64: 1>, scalar_prefetch = 0 : i64, scratch_operands = 0 : i64, tpu.core_type = #tpu.core_type<tc>, window_params = [{transform_indices = @transform_0, window_bounds = array<i64: 512, 2>}, {pipeline_mode = #tpu.pipeline_mode<synchronous>, transform_indices = @transform_1, window_bounds = array<i64: 2, 256>}, {pipeline_mode = #tpu.pipeline_mode<synchronous>, transform_indices = @transform_2, window_bounds = array<i64: 1, 256>}, {pipeline_mode = #tpu.pipeline_mode<synchronous>, transform_indices = @transform_3, window_bounds = array<i64: 256, 256>}, {pipeline_mode = #tpu.pipeline_mode<synchronous>, transform_indices = @transform_4, window_bounds = array<i64: 1, 256>}, {pipeline_mode = #tpu.pipeline_mode<synchronous>, transform_indices = @transform_5, window_bounds = array<i64: 256, 256>}, {pipeline_mode = #tpu.pipeline_mode<synchronous>, transform_indices = @transform_6, window_bounds = array<i64: 1, 256>}, {pipeline_mode = #tpu.pipeline_mode<synchronous>, transform_indices = @transform_7, window_bounds = array<i64: 256, 256>}, {pipeline_mode = #tpu.pipeline_mode<synchronous>, transform_indices = @transform_8, window_bounds = array<i64: 1, 256>}, {pipeline_mode = #tpu.pipeline_mode<synchronous>, transform_indices = @transform_9, window_bounds = array<i64: 1, 256>}, {pipeline_mode = #tpu.pipeline_mode<synchronous>, transform_indices = @transform_10, window_bounds = array<i64: 1, 1>}, {transform_indices = @transform_11, window_bounds = array<i64: 512, 1>}]} {
    %c0 = arith.constant 0 : index
    %c0_0 = arith.constant 0 : index
    %0 = vector.load %arg1[%c0, %c0_0] : memref<512x2xf32, #tpu.memory_space<vmem>>, vector<256x2xf32>
    %1 = vector.extract_strided_slice %0 {offsets = [0, 0], sizes = [256, 1], strides = [1, 1]} : vector<256x2xf32> to vector<256x1xf32>
    %c0_1 = arith.constant 0 : index
    %c0_2 = arith.constant 0 : index
    %2 = vector.load %arg2[%c0_1, %c0_2] : memref<2x256xf32, #tpu.memory_space<vmem>>, vector<1x256xf32>
    %3 = vector.broadcast %1 : vector<256x1xf32> to vector<256x256xf32>
    %4 = vector.broadcast %2 : vector<1x256xf32> to vector<256x256xf32>
    %5 = arith.mulf %3, %4 : vector<256x256xf32>
    %6 = vector.extract_strided_slice %0 {offsets = [0, 1], sizes = [256, 1], strides = [1, 1]} : vector<256x2xf32> to vector<256x1xf32>
    %c1 = arith.constant 1 : index
    %c0_3 = arith.constant 0 : index
    %7 = vector.load %arg2[%c1, %c0_3] : memref<2x256xf32, #tpu.memory_space<vmem>>, vector<1x256xf32>
    %8 = vector.broadcast %6 : vector<256x1xf32> to vector<256x256xf32>
    %9 = vector.broadcast %7 : vector<1x256xf32> to vector<256x256xf32>
    %10 = arith.mulf %8, %9 : vector<256x256xf32>
    %11 = arith.addf %5, %10 : vector<256x256xf32>
    %c0_4 = arith.constant 0 : index
    %c0_5 = arith.constant 0 : index
    %12 = vector.load %arg3[%c0_4, %c0_5] : memref<1x256xf32, #tpu.memory_space<vmem>>, vector<1x256xf32>
    %13 = vector.broadcast %12 : vector<1x256xf32> to vector<256x256xf32>
    %14 = arith.addf %11, %13 : vector<256x256xf32>
    %cst = arith.constant 0.000000e+00 : f32
    %15 = vector.broadcast %cst : f32 to vector<256x256xf32>
    %16 = arith.maximumf %14, %15 : vector<256x256xf32>
    %17 = arith.truncf %16 : vector<256x256xf32> to vector<256x256xbf16>
    %c0_6 = arith.constant 0 : index
    %c0_7 = arith.constant 0 : index
    %18 = vector.load %arg4[%c0_6, %c0_7] : memref<256x256xbf16, #tpu.memory_space<vmem>>, vector<256x256xbf16>
    %cst_8 = arith.constant dense<0.000000e+00> : vector<256x256xf32>
    %19 = tpu.matmul %17, %18, %cst_8 {dimension_numbers = #tpu.dot_dimension_numbers<[1], [0], [0], [1], [0, 0, 1, 1], [], []>} : vector<256x256xbf16>, vector<256x256xbf16>, vector<256x256xf32> -> vector<256x256xf32>
    %c0_9 = arith.constant 0 : index
    %c0_10 = arith.constant 0 : index
    %20 = vector.load %arg5[%c0_9, %c0_10] : memref<1x256xf32, #tpu.memory_space<vmem>>, vector<1x256xf32>
    %21 = vector.broadcast %20 : vector<1x256xf32> to vector<256x256xf32>
    %22 = arith.addf %19, %21 : vector<256x256xf32>
    %cst_11 = arith.constant 0.000000e+00 : f32
    %23 = vector.broadcast %cst_11 : f32 to vector<256x256xf32>
    %24 = arith.maximumf %22, %23 : vector<256x256xf32>
    %25 = arith.truncf %24 : vector<256x256xf32> to vector<256x256xbf16>
    %c0_12 = arith.constant 0 : index
    %c0_13 = arith.constant 0 : index
    %26 = vector.load %arg6[%c0_12, %c0_13] : memref<256x256xbf16, #tpu.memory_space<vmem>>, vector<256x256xbf16>
    %cst_14 = arith.constant dense<0.000000e+00> : vector<256x256xf32>
    %27 = tpu.matmul %25, %26, %cst_14 {dimension_numbers = #tpu.dot_dimension_numbers<[1], [0], [0], [1], [0, 0, 1, 1], [], []>} : vector<256x256xbf16>, vector<256x256xbf16>, vector<256x256xf32> -> vector<256x256xf32>
    %c0_15 = arith.constant 0 : index
    %c0_16 = arith.constant 0 : index
    %28 = vector.load %arg7[%c0_15, %c0_16] : memref<1x256xf32, #tpu.memory_space<vmem>>, vector<1x256xf32>
    %29 = vector.broadcast %28 : vector<1x256xf32> to vector<256x256xf32>
    %30 = arith.addf %27, %29 : vector<256x256xf32>
    %cst_17 = arith.constant 0.000000e+00 : f32
    %31 = vector.broadcast %cst_17 : f32 to vector<256x256xf32>
    %32 = arith.maximumf %30, %31 : vector<256x256xf32>
    %33 = arith.truncf %32 : vector<256x256xf32> to vector<256x256xbf16>
    %c0_18 = arith.constant 0 : index
    %c0_19 = arith.constant 0 : index
    %34 = vector.load %arg8[%c0_18, %c0_19] : memref<256x256xbf16, #tpu.memory_space<vmem>>, vector<256x256xbf16>
    %cst_20 = arith.constant dense<0.000000e+00> : vector<256x256xf32>
    %35 = tpu.matmul %33, %34, %cst_20 {dimension_numbers = #tpu.dot_dimension_numbers<[1], [0], [0], [1], [0, 0, 1, 1], [], []>} : vector<256x256xbf16>, vector<256x256xbf16>, vector<256x256xf32> -> vector<256x256xf32>
    %c0_21 = arith.constant 0 : index
    %c0_22 = arith.constant 0 : index
    %36 = vector.load %arg9[%c0_21, %c0_22] : memref<1x256xf32, #tpu.memory_space<vmem>>, vector<1x256xf32>
    %37 = vector.broadcast %36 : vector<1x256xf32> to vector<256x256xf32>
    %38 = arith.addf %35, %37 : vector<256x256xf32>
    %cst_23 = arith.constant 0.000000e+00 : f32
    %39 = vector.broadcast %cst_23 : f32 to vector<256x256xf32>
    %40 = arith.maximumf %38, %39 : vector<256x256xf32>
    %c0_24 = arith.constant 0 : index
    %c0_25 = arith.constant 0 : index
    %41 = vector.load %arg10[%c0_24, %c0_25] : memref<1x256xf32, #tpu.memory_space<vmem>>, vector<1x256xf32>
    %42 = vector.broadcast %41 : vector<1x256xf32> to vector<256x256xf32>
    %43 = arith.mulf %40, %42 : vector<256x256xf32>
    %cst_26 = arith.constant dense<0.000000e+00> : vector<256xf32>
    %44 = vector.multi_reduction <add>, %43, %cst_26 [1] : vector<256x256xf32> to vector<256xf32>
    %45 = vector.shape_cast %44 : vector<256xf32> to vector<256x1xf32>
    %c0_27 = arith.constant 0 : index
    %c0_28 = arith.constant 0 : index
    %46 = vector.load %arg11[%c0_27, %c0_28] : memref<1x1xf32, #tpu.memory_space<vmem>>, vector<1x1xf32>
    %47 = vector.broadcast %46 : vector<1x1xf32> to vector<256x1xf32>
    %48 = arith.addf %45, %47 : vector<256x1xf32>
    %c0_29 = arith.constant 0 : index
    %c0_30 = arith.constant 0 : index
    %49 = vector.load %arg12[%c0_29, %c0_30] : memref<512x1xf32, #tpu.memory_space<vmem>>, vector<256x1xf32>
    tpu.vector_store %arg12[%c0_29, %c0_30], %48 {strides = array<i32>} : memref<512x1xf32, #tpu.memory_space<vmem>>, vector<256x1xf32>,
    %c256 = arith.constant 256 : index
    %c0_31 = arith.constant 0 : index
    %50 = vector.load %arg1[%c256, %c0_31] : memref<512x2xf32, #tpu.memory_space<vmem>>, vector<256x2xf32>
    %51 = vector.extract_strided_slice %50 {offsets = [0, 0], sizes = [256, 1], strides = [1, 1]} : vector<256x2xf32> to vector<256x1xf32>
    %c0_32 = arith.constant 0 : index
    %c0_33 = arith.constant 0 : index
    %52 = vector.load %arg2[%c0_32, %c0_33] : memref<2x256xf32, #tpu.memory_space<vmem>>, vector<1x256xf32>
    %53 = vector.broadcast %51 : vector<256x1xf32> to vector<256x256xf32>
    %54 = vector.broadcast %52 : vector<1x256xf32> to vector<256x256xf32>
    %55 = arith.mulf %53, %54 : vector<256x256xf32>
    %56 = vector.extract_strided_slice %50 {offsets = [0, 1], sizes = [256, 1], strides = [1, 1]} : vector<256x2xf32> to vector<256x1xf32>
    %c1_34 = arith.constant 1 : index
    %c0_35 = arith.constant 0 : index
    %57 = vector.load %arg2[%c1_34, %c0_35] : memref<2x256xf32, #tpu.memory_space<vmem>>, vector<1x256xf32>
    %58 = vector.broadcast %56 : vector<256x1xf32> to vector<256x256xf32>
    %59 = vector.broadcast %57 : vector<1x256xf32> to vector<256x256xf32>
    %60 = arith.mulf %58, %59 : vector<256x256xf32>
    %61 = arith.addf %55, %60 : vector<256x256xf32>
    %c0_36 = arith.constant 0 : index
    %c0_37 = arith.constant 0 : index
    %62 = vector.load %arg3[%c0_36, %c0_37] : memref<1x256xf32, #tpu.memory_space<vmem>>, vector<1x256xf32>
    %63 = vector.broadcast %62 : vector<1x256xf32> to vector<256x256xf32>
    %64 = arith.addf %61, %63 : vector<256x256xf32>
    %cst_38 = arith.constant 0.000000e+00 : f32
    %65 = vector.broadcast %cst_38 : f32 to vector<256x256xf32>
    %66 = arith.maximumf %64, %65 : vector<256x256xf32>
    %67 = arith.truncf %66 : vector<256x256xf32> to vector<256x256xbf16>
    %c0_39 = arith.constant 0 : index
    %c0_40 = arith.constant 0 : index
    %68 = vector.load %arg4[%c0_39, %c0_40] : memref<256x256xbf16, #tpu.memory_space<vmem>>, vector<256x256xbf16>
    %cst_41 = arith.constant dense<0.000000e+00> : vector<256x256xf32>
    %69 = tpu.matmul %67, %68, %cst_41 {dimension_numbers = #tpu.dot_dimension_numbers<[1], [0], [0], [1], [0, 0, 1, 1], [], []>} : vector<256x256xbf16>, vector<256x256xbf16>, vector<256x256xf32> -> vector<256x256xf32>
    %c0_42 = arith.constant 0 : index
    %c0_43 = arith.constant 0 : index
    %70 = vector.load %arg5[%c0_42, %c0_43] : memref<1x256xf32, #tpu.memory_space<vmem>>, vector<1x256xf32>
    %71 = vector.broadcast %70 : vector<1x256xf32> to vector<256x256xf32>
    %72 = arith.addf %69, %71 : vector<256x256xf32>
    %cst_44 = arith.constant 0.000000e+00 : f32
    %73 = vector.broadcast %cst_44 : f32 to vector<256x256xf32>
    %74 = arith.maximumf %72, %73 : vector<256x256xf32>
    %75 = arith.truncf %74 : vector<256x256xf32> to vector<256x256xbf16>
    %c0_45 = arith.constant 0 : index
    %c0_46 = arith.constant 0 : index
    %76 = vector.load %arg6[%c0_45, %c0_46] : memref<256x256xbf16, #tpu.memory_space<vmem>>, vector<256x256xbf16>
    %cst_47 = arith.constant dense<0.000000e+00> : vector<256x256xf32>
    %77 = tpu.matmul %75, %76, %cst_47 {dimension_numbers = #tpu.dot_dimension_numbers<[1], [0], [0], [1], [0, 0, 1, 1], [], []>} : vector<256x256xbf16>, vector<256x256xbf16>, vector<256x256xf32> -> vector<256x256xf32>
    %c0_48 = arith.constant 0 : index
    %c0_49 = arith.constant 0 : index
    %78 = vector.load %arg7[%c0_48, %c0_49] : memref<1x256xf32, #tpu.memory_space<vmem>>, vector<1x256xf32>
    %79 = vector.broadcast %78 : vector<1x256xf32> to vector<256x256xf32>
    %80 = arith.addf %77, %79 : vector<256x256xf32>
    %cst_50 = arith.constant 0.000000e+00 : f32
    %81 = vector.broadcast %cst_50 : f32 to vector<256x256xf32>
    %82 = arith.maximumf %80, %81 : vector<256x256xf32>
    %83 = arith.truncf %82 : vector<256x256xf32> to vector<256x256xbf16>
    %c0_51 = arith.constant 0 : index
    %c0_52 = arith.constant 0 : index
    %84 = vector.load %arg8[%c0_51, %c0_52] : memref<256x256xbf16, #tpu.memory_space<vmem>>, vector<256x256xbf16>
    %cst_53 = arith.constant dense<0.000000e+00> : vector<256x256xf32>
    %85 = tpu.matmul %83, %84, %cst_53 {dimension_numbers = #tpu.dot_dimension_numbers<[1], [0], [0], [1], [0, 0, 1, 1], [], []>} : vector<256x256xbf16>, vector<256x256xbf16>, vector<256x256xf32> -> vector<256x256xf32>
    %c0_54 = arith.constant 0 : index
    %c0_55 = arith.constant 0 : index
    %86 = vector.load %arg9[%c0_54, %c0_55] : memref<1x256xf32, #tpu.memory_space<vmem>>, vector<1x256xf32>
    %87 = vector.broadcast %86 : vector<1x256xf32> to vector<256x256xf32>
    %88 = arith.addf %85, %87 : vector<256x256xf32>
    %cst_56 = arith.constant 0.000000e+00 : f32
    %89 = vector.broadcast %cst_56 : f32 to vector<256x256xf32>
    %90 = arith.maximumf %88, %89 : vector<256x256xf32>
    %c0_57 = arith.constant 0 : index
    %c0_58 = arith.constant 0 : index
    %91 = vector.load %arg10[%c0_57, %c0_58] : memref<1x256xf32, #tpu.memory_space<vmem>>, vector<1x256xf32>
    %92 = vector.broadcast %91 : vector<1x256xf32> to vector<256x256xf32>
    %93 = arith.mulf %90, %92 : vector<256x256xf32>
    %cst_59 = arith.constant dense<0.000000e+00> : vector<256xf32>
    %94 = vector.multi_reduction <add>, %93, %cst_59 [1] : vector<256x256xf32> to vector<256xf32>
    %95 = vector.shape_cast %94 : vector<256xf32> to vector<256x1xf32>
    %c0_60 = arith.constant 0 : index
    %c0_61 = arith.constant 0 : index
    %96 = vector.load %arg11[%c0_60, %c0_61] : memref<1x1xf32, #tpu.memory_space<vmem>>, vector<1x1xf32>
    %97 = vector.broadcast %96 : vector<1x1xf32> to vector<256x1xf32>
    %98 = arith.addf %95, %97 : vector<256x1xf32>
    %c256_62 = arith.constant 256 : index
    %c0_63 = arith.constant 0 : index
    %99 = vector.load %arg12[%c256_62, %c0_63] : memref<512x1xf32, #tpu.memory_space<vmem>>, vector<256x1xf32>
    tpu.vector_store %arg12[%c256_62, %c0_63], %98 {strides = array<i32>} : memref<512x1xf32, #tpu.memory_space<vmem>>, vector<256x1xf32>,
    return
  }
  func.func @transform_0(%arg0: i32) -> (i32, i32) {
    %c0_i32 = arith.constant 0 : i32
    %c0_i32_0 = arith.constant 0 : i32
    return %arg0, %c0_i32 : i32, i32
  }
  func.func @transform_1(%arg0: i32) -> (i32, i32) {
    %c0_i32 = arith.constant 0 : i32
    %c0_i32_0 = arith.constant 0 : i32
    %c0_i32_1 = arith.constant 0 : i32
    return %c0_i32, %c0_i32_0 : i32, i32
  }
  func.func @transform_2(%arg0: i32) -> (i32, i32) {
    %c0_i32 = arith.constant 0 : i32
    %c0_i32_0 = arith.constant 0 : i32
    %c0_i32_1 = arith.constant 0 : i32
    return %c0_i32, %c0_i32_0 : i32, i32
  }
  func.func @transform_3(%arg0: i32) -> (i32, i32) {
    %c0_i32 = arith.constant 0 : i32
    %c0_i32_0 = arith.constant 0 : i32
    %c0_i32_1 = arith.constant 0 : i32
    return %c0_i32, %c0_i32_0 : i32, i32
  }
  func.func @transform_4(%arg0: i32) -> (i32, i32) {
    %c0_i32 = arith.constant 0 : i32
    %c0_i32_0 = arith.constant 0 : i32
    %c0_i32_1 = arith.constant 0 : i32
    return %c0_i32, %c0_i32_0 : i32, i32
  }
  func.func @transform_5(%arg0: i32) -> (i32, i32) {
    %c0_i32 = arith.constant 0 : i32
    %c0_i32_0 = arith.constant 0 : i32
    %c0_i32_1 = arith.constant 0 : i32
    return %c0_i32, %c0_i32_0 : i32, i32
  }
  func.func @transform_6(%arg0: i32) -> (i32, i32) {
    %c0_i32 = arith.constant 0 : i32
    %c0_i32_0 = arith.constant 0 : i32
    %c0_i32_1 = arith.constant 0 : i32
    return %c0_i32, %c0_i32_0 : i32, i32
  }
  func.func @transform_7(%arg0: i32) -> (i32, i32) {
    %c0_i32 = arith.constant 0 : i32
    %c0_i32_0 = arith.constant 0 : i32
    %c0_i32_1 = arith.constant 0 : i32
    return %c0_i32, %c0_i32_0 : i32, i32
  }
  func.func @transform_8(%arg0: i32) -> (i32, i32) {
    %c0_i32 = arith.constant 0 : i32
    %c0_i32_0 = arith.constant 0 : i32
    %c0_i32_1 = arith.constant 0 : i32
    return %c0_i32, %c0_i32_0 : i32, i32
  }
  func.func @transform_9(%arg0: i32) -> (i32, i32) {
    %c0_i32 = arith.constant 0 : i32
    %c0_i32_0 = arith.constant 0 : i32
    %c0_i32_1 = arith.constant 0 : i32
    return %c0_i32, %c0_i32_0 : i32, i32
  }
  func.func @transform_10(%arg0: i32) -> (i32, i32) {
    %c0_i32 = arith.constant 0 : i32
    %c0_i32_0 = arith.constant 0 : i32
    %c0_i32_1 = arith.constant 0 : i32
    return %c0_i32, %c0_i32_0 : i32, i32
  }
  func.func @transform_11(%arg0: i32) -> (i32, i32) {
    %c0_i32 = arith.constant 0 : i32
    %c0_i32_0 = arith.constant 0 : i32
    return %arg0, %c0_i32 : i32, i32
  }
}

</mosaic_0001>

<llo_original>
// kernel: tpu_custom_call.1
$region0: #{tpu_custom_call.1}
  #allocation0 [shape = 'u32[]', space=smem, size = 0x4, offset = 0x4, fixed_abs, tag = 'smem constant byte address 0x4 - core index']
  #allocation1 [shape = 'u32[144,128]{1,0:T(1,128)}', space=vmem, size = 0x12000, scoped, tag = 'internal scratch']
  #allocation2 [shape = 'f32[1,1]{1,0:T(1,128)S(1)}', space=vmem, size = 0x200, scoped, tag = 'scoped memory for tpu_custom_call.1']
  %s0 = inlined_call_operand.vmem [shape: f32[512,2], index: 0, kind: input, shape index: {}]
  %s1 = inlined_call_operand.vmem [shape: f32[2,256], index: 1, kind: input, shape index: {}]
  %s2 = inlined_call_operand.vmem [shape: f32[1,256], index: 2, kind: input, shape index: {}]
  %s3 = inlined_call_operand.vmem [shape: bf16[256,256], index: 3, kind: input, shape index: {}]
  %s4 = inlined_call_operand.vmem [shape: f32[1,256], index: 4, kind: input, shape index: {}]
  %s5 = inlined_call_operand.vmem [shape: bf16[256,256], index: 5, kind: input, shape index: {}]
  %s6 = inlined_call_operand.vmem [shape: f32[1,256], index: 6, kind: input, shape index: {}]
  %s7 = inlined_call_operand.hbm [shape: bf16[256,256], index: 7, kind: input, shape index: {}]
  %s8 = inlined_call_operand.vmem [shape: f32[1,256], index: 8, kind: input, shape index: {}]
  %s9 = inlined_call_operand.vmem [shape: f32[1,256], index: 9, kind: input, shape index: {}]
  %s10 = inlined_call_operand.<no memory space> [shape: f32[1,1], index: 10, kind: input, shape index: {}]
  %s11 = inlined_call_operand.vmem [shape: f32[512,1], index: 11, kind: output, shape index: {}]
  %s12 = sld [smem:[#allocation0]]
  $region58: #{tpu_custom_call.1} parent=0
    _
  %s14 = ssub.s32 1, %s12
  %s15 = scalar_select 0, %s14, %s12
  %v16 = vstv %s10
  %17 = vst [vmem:[#allocation2] sm:$0x1] %v16
  $region1: #{tpu_custom_call.1} parent=0
    #allocation3 [shape = 'u8[131072]{0}', space=vmem, size = 0x20000, scoped, tag = 'input window, operand 7, single buffered']
    #allocation4 [shape = 's32[1]{0}', space=sflag, size = 0x4, scoped, tag = 'scoped memory for tpu_custom_call.1']
    %18 = vsyncpa [#allocation4], 0
    // Predicated region
    $region2: #{tpu_custom_call.1} parent=1 // pred_check
      _
    $region3: #{tpu_custom_call.1} parent=1 // pred_check_branch
      %20 = sbr.rel (0) target = $region5
    $region4: #{tpu_custom_call.1} parent=1 // pred_region
      _
    $region5: #{tpu_custom_call.1} parent=1 // pred_fallthru
      _
    // Predicated region
    $region6: #{tpu_custom_call.1} parent=1 // pred_check
      _
    $region7: #{tpu_custom_call.1} parent=1 // pred_check_branch
      %22 = sbr.rel (0) target = $region9
    $region8: #{tpu_custom_call.1} parent=1 // pred_region
      _
    $region9: #{tpu_custom_call.1} parent=1 // pred_fallthru
      _
    // Predicated region
    $region10: #{tpu_custom_call.1} parent=1 // pred_check
      _
    $region11: #{tpu_custom_call.1} parent=1 // pred_check_branch
      %24 = sbr.rel (0) target = $region13
    $region12: #{tpu_custom_call.1} parent=1 // pred_region
      _
    $region13: #{tpu_custom_call.1} parent=1 // pred_fallthru
      _
    // Predicated region
    $region14: #{tpu_custom_call.1} parent=1 // pred_check
      _
    $region15: #{tpu_custom_call.1} parent=1 // pred_check_branch
      %26 = sbr.rel (0) target = $region17
    $region16: #{tpu_custom_call.1} parent=1 // pred_region
      _
    $region17: #{tpu_custom_call.1} parent=1 // pred_fallthru
      _
    // Predicated region
    $region18: #{tpu_custom_call.1} parent=1 // pred_check
      _
    $region19: #{tpu_custom_call.1} parent=1 // pred_check_branch
      %28 = sbr.rel (0) target = $region21
    $region20: #{tpu_custom_call.1} parent=1 // pred_region
      _
    $region21: #{tpu_custom_call.1} parent=1 // pred_fallthru
      _
    // Predicated region
    $region22: #{tpu_custom_call.1} parent=1 // pred_check
      _
    $region23: #{tpu_custom_call.1} parent=1 // pred_check_branch
      %30 = sbr.rel (0) target = $region25
    $region24: #{tpu_custom_call.1} parent=1 // pred_region
      _
    $region25: #{tpu_custom_call.1} parent=1 // pred_fallthru
      _
    // Predicated region
    $region26: #{tpu_custom_call.1} parent=1 // pred_check
      _
    $region27: #{tpu_custom_call.1} parent=1 // pred_check_branch
      %32 = sbr.rel (0) target = $region29
    $region28: #{tpu_custom_call.1} parent=1 // pred_region
      _
    $region29: #{tpu_custom_call.1} parent=1 // pred_fallthru
      _
    // Predicated region
    $region30: #{tpu_custom_call.1} parent=1 // pred_check
      _
    $region31: #{tpu_custom_call.1} parent=1 // pred_check_branch
      %34 = sbr.rel (0) target = $region33
    $region32: #{tpu_custom_call.1} parent=1 // pred_region
      %s36 = ssub.s32 4096, 4096
      %37 = vsyncadd [#allocation4], %s36
      %s38 = sshll.u32 [#allocation3], 4
      %s39 = int_to_ptr.vmem [resolvable:$true] %s38
      %44 = dma.hbm_to_vmem [thread:$0]  %s7, 4096, %s39, [#allocation4], 128, 128, 8
    $region33: #{tpu_custom_call.1} parent=1 // pred_fallthru
      _
    // Predicated region
    $region34: #{tpu_custom_call.1} parent=1 // pred_check
      _
    $region35: #{tpu_custom_call.1} parent=1 // pred_check_branch
      %46 = sbr.rel (0) target = $region37
    $region36: #{tpu_custom_call.1} parent=1 // pred_region
      _
    $region37: #{tpu_custom_call.1} parent=1 // pred_fallthru
      _
    // Predicated region
    $region38: #{tpu_custom_call.1} parent=1 // pred_check
      _
    $region39: #{tpu_custom_call.1} parent=1 // pred_check_branch
      %48 = sbr.rel (0) target = $region41
    $region40: #{tpu_custom_call.1} parent=1 // pred_region
      _
    $region41: #{tpu_custom_call.1} parent=1 // pred_fallthru
      _
    // Predicated region
    $region42: #{tpu_custom_call.1} parent=1 // pred_check
      _
    $region43: #{tpu_custom_call.1} parent=1 // pred_check_branch
      %50 = sbr.rel (0) target = $region45
    $region44: #{tpu_custom_call.1} parent=1 // pred_region
      _
    $region45: #{tpu_custom_call.1} parent=1 // pred_fallthru
      _
    // Predicated region
    $region46: #{tpu_custom_call.1} parent=1 // pred_check
      _
    $region47: #{tpu_custom_call.1} parent=1 // pred_check_branch
      %52 = sbr.rel (0) target = $region49
    $region48: #{tpu_custom_call.1} parent=1 // pred_region
      %53 = dma.done [#allocation4], 4096
    $region49: #{tpu_custom_call.1} parent=1 // pred_fallthru
      _
    %v54 = vld [vmem:[%s0] sm:$0xff]
    %v55 = vld [vmem:[%s0 + $0x8] sm:$0xff]
    %v56 = vld [vmem:[%s0 + $0x10] sm:$0xff]
    %v57 = vld [vmem:[%s0 + $0x18] sm:$0xff]
    %v58 = vld [vmem:[%s0 + $0x20] sm:$0xff]
    %v59 = vld [vmem:[%s0 + $0x28] sm:$0xff]
    %v60 = vld [vmem:[%s0 + $0x30] sm:$0xff]
    %v61 = vld [vmem:[%s0 + $0x38] sm:$0xff]
    %v62 = vld [vmem:[%s0 + $0x40] sm:$0xff]
    %v63 = vld [vmem:[%s0 + $0x48] sm:$0xff]
    %v64 = vld [vmem:[%s0 + $0x50] sm:$0xff]
    %v65 = vld [vmem:[%s0 + $0x58] sm:$0xff]
    %v66 = vld [vmem:[%s0 + $0x60] sm:$0xff]
    %v67 = vld [vmem:[%s0 + $0x68] sm:$0xff]
    %v68 = vld [vmem:[%s0 + $0x70] sm:$0xff]
    %v69 = vld [vmem:[%s0 + $0x78] sm:$0xff]
    %v70 = vld [vmem:[%s0 + $0x80] sm:$0xff]
    %v71 = vld [vmem:[%s0 + $0x88] sm:$0xff]
    %v72 = vld [vmem:[%s0 + $0x90] sm:$0xff]
    %v73 = vld [vmem:[%s0 + $0x98] sm:$0xff]
    %v74 = vld [vmem:[%s0 + $0xa0] sm:$0xff]
    %v75 = vld [vmem:[%s0 + $0xa8] sm:$0xff]
    %v76 = vld [vmem:[%s0 + $0xb0] sm:$0xff]
    %v77 = vld [vmem:[%s0 + $0xb8] sm:$0xff]
    %v78 = vld [vmem:[%s0 + $0xc0] sm:$0xff]
    %v79 = vld [vmem:[%s0 + $0xc8] sm:$0xff]
    %v80 = vld [vmem:[%s0 + $0xd0] sm:$0xff]
    %v81 = vld [vmem:[%s0 + $0xd8] sm:$0xff]
    %v82 = vld [vmem:[%s0 + $0xe0] sm:$0xff]
    %v83 = vld [vmem:[%s0 + $0xe8] sm:$0xff]
    %v84 = vld [vmem:[%s0 + $0xf0] sm:$0xff]
    %v85 = vld [vmem:[%s0 + $0xf8] sm:$0xff]
    %v86 = vld [vmem:[%s1] ss:$2 sm:$0x3]
    %88 = vset.pattern.permute.xlu0 0
    %89 = vperm.xlu0 %88, %v54
    %v90 = vpop.permute.xlu0 %89
    %93 = vset.pattern.permute.xlu0 0
    %94 = vperm.xlu0 %93, %v55
    %v95 = vpop.permute.xlu0 %94
    %98 = vset.pattern.permute.xlu0 0
    %99 = vperm.xlu0 %98, %v56
    %v100 = vpop.permute.xlu0 %99
    %103 = vset.pattern.permute.xlu0 0
    %104 = vperm.xlu0 %103, %v57
    %v105 = vpop.permute.xlu0 %104
    %108 = vset.pattern.permute.xlu0 0
    %109 = vperm.xlu0 %108, %v58
    %v110 = vpop.permute.xlu0 %109
    %113 = vset.pattern.permute.xlu0 0
    %114 = vperm.xlu0 %113, %v59
    %v115 = vpop.permute.xlu0 %114
    %118 = vset.pattern.permute.xlu0 0
    %119 = vperm.xlu0 %118, %v60
    %v120 = vpop.permute.xlu0 %119
    %123 = vset.pattern.permute.xlu0 0
    %124 = vperm.xlu0 %123, %v61
    %v125 = vpop.permute.xlu0 %124
    %128 = vset.pattern.permute.xlu0 0
    %129 = vperm.xlu0 %128, %v62
    %v130 = vpop.permute.xlu0 %129
    %133 = vset.pattern.permute.xlu0 0
    %134 = vperm.xlu0 %133, %v63
    %v135 = vpop.permute.xlu0 %134
    %138 = vset.pattern.permute.xlu0 0
    %139 = vperm.xlu0 %138, %v64
    %v140 = vpop.permute.xlu0 %139
    %143 = vset.pattern.permute.xlu0 0
    %144 = vperm.xlu0 %143, %v65
    %v145 = vpop.permute.xlu0 %144
    %148 = vset.pattern.permute.xlu0 0
    %149 = vperm.xlu0 %148, %v66
    %v150 = vpop.permute.xlu0 %149
    %153 = vset.pattern.permute.xlu0 0
    %154 = vperm.xlu0 %153, %v67
    %v155 = vpop.permute.xlu0 %154
    %158 = vset.pattern.permute.xlu0 0
    %159 = vperm.xlu0 %158, %v68
    %v160 = vpop.permute.xlu0 %159
    %163 = vset.pattern.permute.xlu0 0
    %164 = vperm.xlu0 %163, %v69
    %v165 = vpop.permute.xlu0 %164
    %168 = vset.pattern.permute.xlu0 0
    %169 = vperm.xlu0 %168, %v70
    %v170 = vpop.permute.xlu0 %169
    %173 = vset.pattern.permute.xlu0 0
    %174 = vperm.xlu0 %173, %v71
    %v175 = vpop.permute.xlu0 %174
    %178 = vset.pattern.permute.xlu0 0
    %179 = vperm.xlu0 %178, %v72
    %v180 = vpop.permute.xlu0 %179
    %183 = vset.pattern.permute.xlu0 0
    %184 = vperm.xlu0 %183, %v73
    %v185 = vpop.permute.xlu0 %184
    %188 = vset.pattern.permute.xlu0 0
    %189 = vperm.xlu0 %188, %v74
    %v190 = vpop.permute.xlu0 %189
    %193 = vset.pattern.permute.xlu0 0
    %194 = vperm.xlu0 %193, %v75
    %v195 = vpop.permute.xlu0 %194
    %198 = vset.pattern.permute.xlu0 0
    %199 = vperm.xlu0 %198, %v76
    %v200 = vpop.permute.xlu0 %199
    %203 = vset.pattern.permute.xlu0 0
    %204 = vperm.xlu0 %203, %v77
    %v205 = vpop.permute.xlu0 %204
    %208 = vset.pattern.permute.xlu0 0
    %209 = vperm.xlu0 %208, %v78
    %v210 = vpop.permute.xlu0 %209
    %213 = vset.pattern.permute.xlu0 0
    %214 = vperm.xlu0 %213, %v79
    %v215 = vpop.permute.xlu0 %214
    %218 = vset.pattern.permute.xlu0 0
    %219 = vperm.xlu0 %218, %v80
    %v220 = vpop.permute.xlu0 %219
    %223 = vset.pattern.permute.xlu0 0
    %224 = vperm.xlu0 %223, %v81
    %v225 = vpop.permute.xlu0 %224
    %228 = vset.pattern.permute.xlu0 0
    %229 = vperm.xlu0 %228, %v82
    %v230 = vpop.permute.xlu0 %229
    %233 = vset.pattern.permute.xlu0 0
    %234 = vperm.xlu0 %233, %v83
    %v235 = vpop.permute.xlu0 %234
    %238 = vset.pattern.permute.xlu0 0
    %239 = vperm.xlu0 %238, %v84
    %v240 = vpop.permute.xlu0 %239
    %243 = vset.pattern.permute.xlu0 0
    %244 = vperm.xlu0 %243, %v85
    %v245 = vpop.permute.xlu0 %244
    %v248 = vlaneseq
    %v249 = vshrl.u32 %v248, 7
    %v250 = vsub.s32 0, %v249
    %v251 = vrot.slane %v86, %v250
    %v252 = vlaneseq
    %v253 = vshrl.u32 %v252, 7
    %v254 = vsub.s32 1, %v253
    %v255 = vrot.slane %v86, %v254
    %v258 = vmul.f32 %v90, %v251
    %v259 = vmul.f32 %v90, %v255
    %v260 = vmul.f32 %v95, %v251
    %v261 = vmul.f32 %v95, %v255
    %v262 = vmul.f32 %v100, %v251
    %v263 = vmul.f32 %v100, %v255
    %v264 = vmul.f32 %v105, %v251
    %v265 = vmul.f32 %v105, %v255
    %v266 = vmul.f32 %v110, %v251
    %v267 = vmul.f32 %v110, %v255
    %v268 = vmul.f32 %v115, %v251
    %v269 = vmul.f32 %v115, %v255
    %v270 = vmul.f32 %v120, %v251
    %v271 = vmul.f32 %v120, %v255
    %v272 = vmul.f32 %v125, %v251
    %v273 = vmul.f32 %v125, %v255
    %v274 = vmul.f32 %v130, %v251
    %v275 = vmul.f32 %v130, %v255
    %v276 = vmul.f32 %v135, %v251
    %v277 = vmul.f32 %v135, %v255
    %v278 = vmul.f32 %v140, %v251
    %v279 = vmul.f32 %v140, %v255
    %v280 = vmul.f32 %v145, %v251
    %v281 = vmul.f32 %v145, %v255
    %v282 = vmul.f32 %v150, %v251
    %v283 = vmul.f32 %v150, %v255
    %v284 = vmul.f32 %v155, %v251
    %v285 = vmul.f32 %v155, %v255
    %v286 = vmul.f32 %v160, %v251
    %v287 = vmul.f32 %v160, %v255
    %v288 = vmul.f32 %v165, %v251
    %v289 = vmul.f32 %v165, %v255
    %v290 = vmul.f32 %v170, %v251
    %v291 = vmul.f32 %v170, %v255
    %v292 = vmul.f32 %v175, %v251
    %v293 = vmul.f32 %v175, %v255
    %v294 = vmul.f32 %v180, %v251
    %v295 = vmul.f32 %v180, %v255
    %v296 = vmul.f32 %v185, %v251
    %v297 = vmul.f32 %v185, %v255
    %v298 = vmul.f32 %v190, %v251
    %v299 = vmul.f32 %v190, %v255
    %v300 = vmul.f32 %v195, %v251
    %v301 = vmul.f32 %v195, %v255
    %v302 = vmul.f32 %v200, %v251
    %v303 = vmul.f32 %v200, %v255
    %v304 = vmul.f32 %v205, %v251
    %v305 = vmul.f32 %v205, %v255
    %v306 = vmul.f32 %v210, %v251
    %v307 = vmul.f32 %v210, %v255
    %v308 = vmul.f32 %v215, %v251
    %v309 = vmul.f32 %v215, %v255
    %v310 = vmul.f32 %v220, %v251
    %v311 = vmul.f32 %v220, %v255
    %v312 = vmul.f32 %v225, %v251
    %v313 = vmul.f32 %v225, %v255
    %v314 = vmul.f32 %v230, %v251
    %v315 = vmul.f32 %v230, %v255
    %v316 = vmul.f32 %v235, %v251
    %v317 = vmul.f32 %v235, %v255
    %v318 = vmul.f32 %v240, %v251
    %v319 = vmul.f32 %v240, %v255
    %v320 = vmul.f32 %v245, %v251
    %v321 = vmul.f32 %v245, %v255
    %s322 = scalar_lea.vmem %s1, 1
    %v323 = vld [vmem:[%s322] ss:$2 sm:$0x3]
    %324 = vset.pattern.permute.xlu0 1
    %325 = vperm.xlu0 %324, %v54
    %v326 = vpop.permute.xlu0 %325
    %328 = vset.pattern.permute.xlu0 1
    %329 = vperm.xlu0 %328, %v55
    %v330 = vpop.permute.xlu0 %329
    %332 = vset.pattern.permute.xlu0 1
    %333 = vperm.xlu0 %332, %v56
    %v334 = vpop.permute.xlu0 %333
    %336 = vset.pattern.permute.xlu0 1
    %337 = vperm.xlu0 %336, %v57
    %v338 = vpop.permute.xlu0 %337
    %340 = vset.pattern.permute.xlu0 1
    %341 = vperm.xlu0 %340, %v58
    %v342 = vpop.permute.xlu0 %341
    %344 = vset.pattern.permute.xlu0 1
    %345 = vperm.xlu0 %344, %v59
    %v346 = vpop.permute.xlu0 %345
    %348 = vset.pattern.permute.xlu0 1
    %349 = vperm.xlu0 %348, %v60
    %v350 = vpop.permute.xlu0 %349
    %352 = vset.pattern.permute.xlu0 1
    %353 = vperm.xlu0 %352, %v61
    %v354 = vpop.permute.xlu0 %353
    %356 = vset.pattern.permute.xlu0 1
    %357 = vperm.xlu0 %356, %v62
    %v358 = vpop.permute.xlu0 %357
    %360 = vset.pattern.permute.xlu0 1
    %361 = vperm.xlu0 %360, %v63
    %v362 = vpop.permute.xlu0 %361
    %364 = vset.pattern.permute.xlu0 1
    %365 = vperm.xlu0 %364, %v64
    %v366 = vpop.permute.xlu0 %365
    %368 = vset.pattern.permute.xlu0 1
    %369 = vperm.xlu0 %368, %v65
    %v370 = vpop.permute.xlu0 %369
    %372 = vset.pattern.permute.xlu0 1
    %373 = vperm.xlu0 %372, %v66
    %v374 = vpop.permute.xlu0 %373
    %376 = vset.pattern.permute.xlu0 1
    %377 = vperm.xlu0 %376, %v67
    %v378 = vpop.permute.xlu0 %377
    %380 = vset.pattern.permute.xlu0 1
    %381 = vperm.xlu0 %380, %v68
    %v382 = vpop.permute.xlu0 %381
    %384 = vset.pattern.permute.xlu0 1
    %385 = vperm.xlu0 %384, %v69
    %v386 = vpop.permute.xlu0 %385
    %388 = vset.pattern.permute.xlu0 1
    %389 = vperm.xlu0 %388, %v70
    %v390 = vpop.permute.xlu0 %389
    %392 = vset.pattern.permute.xlu0 1
    %393 = vperm.xlu0 %392, %v71
    %v394 = vpop.permute.xlu0 %393
    %396 = vset.pattern.permute.xlu0 1
    %397 = vperm.xlu0 %396, %v72
    %v398 = vpop.permute.xlu0 %397
    %400 = vset.pattern.permute.xlu0 1
    %401 = vperm.xlu0 %400, %v73
    %v402 = vpop.permute.xlu0 %401
    %404 = vset.pattern.permute.xlu0 1
    %405 = vperm.xlu0 %404, %v74
    %v406 = vpop.permute.xlu0 %405
    %408 = vset.pattern.permute.xlu0 1
    %409 = vperm.xlu0 %408, %v75
    %v410 = vpop.permute.xlu0 %409
    %412 = vset.pattern.permute.xlu0 1
    %413 = vperm.xlu0 %412, %v76
    %v414 = vpop.permute.xlu0 %413
    %416 = vset.pattern.permute.xlu0 1
    %417 = vperm.xlu0 %416, %v77
    %v418 = vpop.permute.xlu0 %417
    %420 = vset.pattern.permute.xlu0 1
    %421 = vperm.xlu0 %420, %v78
    %v422 = vpop.permute.xlu0 %421
    %424 = vset.pattern.permute.xlu0 1
    %425 = vperm.xlu0 %424, %v79
    %v426 = vpop.permute.xlu0 %425
    %428 = vset.pattern.permute.xlu0 1
    %429 = vperm.xlu0 %428, %v80
    %v430 = vpop.permute.xlu0 %429
    %432 = vset.pattern.permute.xlu0 1
    %433 = vperm.xlu0 %432, %v81
    %v434 = vpop.permute.xlu0 %433
    %436 = vset.pattern.permute.xlu0 1
    %437 = vperm.xlu0 %436, %v82
    %v438 = vpop.permute.xlu0 %437
    %440 = vset.pattern.permute.xlu0 1
    %441 = vperm.xlu0 %440, %v83
    %v442 = vpop.permute.xlu0 %441
    %444 = vset.pattern.permute.xlu0 1
    %445 = vperm.xlu0 %444, %v84
    %v446 = vpop.permute.xlu0 %445
    %448 = vset.pattern.permute.xlu0 1
    %449 = vperm.xlu0 %448, %v85
    %v450 = vpop.permute.xlu0 %449
    %v453 = vlaneseq
    %v454 = vshrl.u32 %v453, 7
    %v455 = vsub.s32 0, %v454
    %v456 = vrot.slane %v323, %v455
    %v457 = vlaneseq
    %v458 = vshrl.u32 %v457, 7
    %v459 = vsub.s32 1, %v458
    %v460 = vrot.slane %v323, %v459
    %v463 = vmul.f32 %v326, %v456
    %v464 = vmul.f32 %v326, %v460
    %v465 = vmul.f32 %v330, %v456
    %v466 = vmul.f32 %v330, %v460
    %v467 = vmul.f32 %v334, %v456
    %v468 = vmul.f32 %v334, %v460
    %v469 = vmul.f32 %v338, %v456
    %v470 = vmul.f32 %v338, %v460
    %v471 = vmul.f32 %v342, %v456
    %v472 = vmul.f32 %v342, %v460
    %v473 = vmul.f32 %v346, %v456
    %v474 = vmul.f32 %v346, %v460
    %v475 = vmul.f32 %v350, %v456
    %v476 = vmul.f32 %v350, %v460
    %v477 = vmul.f32 %v354, %v456
    %v478 = vmul.f32 %v354, %v460
    %v479 = vmul.f32 %v358, %v456
    %v480 = vmul.f32 %v358, %v460
    %v481 = vmul.f32 %v362, %v456
    %v482 = vmul.f32 %v362, %v460
    %v483 = vmul.f32 %v366, %v456
    %v484 = vmul.f32 %v366, %v460
    %v485 = vmul.f32 %v370, %v456
    %v486 = vmul.f32 %v370, %v460
    %v487 = vmul.f32 %v374, %v456
    %v488 = vmul.f32 %v374, %v460
    %v489 = vmul.f32 %v378, %v456
    %v490 = vmul.f32 %v378, %v460
    %v491 = vmul.f32 %v382, %v456
    %v492 = vmul.f32 %v382, %v460
    %v493 = vmul.f32 %v386, %v456
    %v494 = vmul.f32 %v386, %v460
    %v495 = vmul.f32 %v390, %v456
    %v496 = vmul.f32 %v390, %v460
    %v497 = vmul.f32 %v394, %v456
    %v498 = vmul.f32 %v394, %v460
    %v499 = vmul.f32 %v398, %v456
    %v500 = vmul.f32 %v398, %v460
    %v501 = vmul.f32 %v402, %v456
    %v502 = vmul.f32 %v402, %v460
    %v503 = vmul.f32 %v406, %v456
    %v504 = vmul.f32 %v406, %v460
    %v505 = vmul.f32 %v410, %v456
    %v506 = vmul.f32 %v410, %v460
    %v507 = vmul.f32 %v414, %v456
    %v508 = vmul.f32 %v414, %v460
    %v509 = vmul.f32 %v418, %v456
    %v510 = vmul.f32 %v418, %v460
    %v511 = vmul.f32 %v422, %v456
    %v512 = vmul.f32 %v422, %v460
    %v513 = vmul.f32 %v426, %v456
    %v514 = vmul.f32 %v426, %v460
    %v515 = vmul.f32 %v430, %v456
    %v516 = vmul.f32 %v430, %v460
    %v517 = vmul.f32 %v434, %v456
    %v518 = vmul.f32 %v434, %v460
    %v519 = vmul.f32 %v438, %v456
    %v520 = vmul.f32 %v438, %v460
    %v521 = vmul.f32 %v442, %v456
    %v522 = vmul.f32 %v442, %v460
    %v523 = vmul.f32 %v446, %v456
    %v524 = vmul.f32 %v446, %v460
    %v525 = vmul.f32 %v450, %v456
    %v526 = vmul.f32 %v450, %v460
    %v527 = vadd.f32 %v258, %v463
    %v528 = vadd.f32 %v259, %v464
    %v529 = vadd.f32 %v260, %v465
    %v530 = vadd.f32 %v261, %v466
    %v531 = vadd.f32 %v262, %v467
    %v532 = vadd.f32 %v263, %v468
    %v533 = vadd.f32 %v264, %v469
    %v534 = vadd.f32 %v265, %v470
    %v535 = vadd.f32 %v266, %v471
    %v536 = vadd.f32 %v267, %v472
    %v537 = vadd.f32 %v268, %v473
    %v538 = vadd.f32 %v269, %v474
    %v539 = vadd.f32 %v270, %v475
    %v540 = vadd.f32 %v271, %v476
    %v541 = vadd.f32 %v272, %v477
    %v542 = vadd.f32 %v273, %v478
    %v543 = vadd.f32 %v274, %v479
    %v544 = vadd.f32 %v275, %v480
    %v545 = vadd.f32 %v276, %v481
    %v546 = vadd.f32 %v277, %v482
    %v547 = vadd.f32 %v278, %v483
    %v548 = vadd.f32 %v279, %v484
    %v549 = vadd.f32 %v280, %v485
    %v550 = vadd.f32 %v281, %v486
    %v551 = vadd.f32 %v282, %v487
    %v552 = vadd.f32 %v283, %v488
    %v553 = vadd.f32 %v284, %v489
    %v554 = vadd.f32 %v285, %v490
    %v555 = vadd.f32 %v286, %v491
    %v556 = vadd.f32 %v287, %v492
    %v557 = vadd.f32 %v288, %v493
    %v558 = vadd.f32 %v289, %v494
    %v559 = vadd.f32 %v290, %v495
    %v560 = vadd.f32 %v291, %v496
    %v561 = vadd.f32 %v292, %v497
    %v562 = vadd.f32 %v293, %v498
    %v563 = vadd.f32 %v294, %v499
    %v564 = vadd.f32 %v295, %v500
    %v565 = vadd.f32 %v296, %v501
    %v566 = vadd.f32 %v297, %v502
    %v567 = vadd.f32 %v298, %v503
    %v568 = vadd.f32 %v299, %v504
    %v569 = vadd.f32 %v300, %v505
    %v570 = vadd.f32 %v301, %v506
    %v571 = vadd.f32 %v302, %v507
    %v572 = vadd.f32 %v303, %v508
    %v573 = vadd.f32 %v304, %v509
    %v574 = vadd.f32 %v305, %v510
    %v575 = vadd.f32 %v306, %v511
    %v576 = vadd.f32 %v307, %v512
    %v577 = vadd.f32 %v308, %v513
    %v578 = vadd.f32 %v309, %v514
    %v579 = vadd.f32 %v310, %v515
    %v580 = vadd.f32 %v311, %v516
    %v581 = vadd.f32 %v312, %v517
    %v582 = vadd.f32 %v313, %v518
    %v583 = vadd.f32 %v314, %v519
    %v584 = vadd.f32 %v315, %v520
    %v585 = vadd.f32 %v316, %v521
    %v586 = vadd.f32 %v317, %v522
    %v587 = vadd.f32 %v318, %v523
    %v588 = vadd.f32 %v319, %v524
    %v589 = vadd.f32 %v320, %v525
    %v590 = vadd.f32 %v321, %v526
    %v591 = vld [vmem:[%s2] sm:$0x3]
    %v593 = vlaneseq
    %v594 = vshrl.u32 %v593, 7
    %v595 = vsub.s32 0, %v594
    %v596 = vrot.slane %v591, %v595
    %v597 = vlaneseq
    %v598 = vshrl.u32 %v597, 7
    %v599 = vsub.s32 1, %v598
    %v600 = vrot.slane %v591, %v599
    %v603 = vadd.f32 %v527, %v596
    %v604 = vadd.f32 %v528, %v600
    %v605 = vadd.f32 %v529, %v596
    %v606 = vadd.f32 %v530, %v600
    %v607 = vadd.f32 %v531, %v596
    %v608 = vadd.f32 %v532, %v600
    %v609 = vadd.f32 %v533, %v596
    %v610 = vadd.f32 %v534, %v600
    %v611 = vadd.f32 %v535, %v596
    %v612 = vadd.f32 %v536, %v600
    %v613 = vadd.f32 %v537, %v596
    %v614 = vadd.f32 %v538, %v600
    %v615 = vadd.f32 %v539, %v596
    %v616 = vadd.f32 %v540, %v600
    %v617 = vadd.f32 %v541, %v596
    %v618 = vadd.f32 %v542, %v600
    %v619 = vadd.f32 %v543, %v596
    %v620 = vadd.f32 %v544, %v600
    %v621 = vadd.f32 %v545, %v596
    %v622 = vadd.f32 %v546, %v600
    %v623 = vadd.f32 %v547, %v596
    %v624 = vadd.f32 %v548, %v600
    %v625 = vadd.f32 %v549, %v596
    %v626 = vadd.f32 %v550, %v600
    %v627 = vadd.f32 %v551, %v596
    %v628 = vadd.f32 %v552, %v600
    %v629 = vadd.f32 %v553, %v596
    %v630 = vadd.f32 %v554, %v600
    %v631 = vadd.f32 %v555, %v596
    %v632 = vadd.f32 %v556, %v600
    %v633 = vadd.f32 %v557, %v596
    %v634 = vadd.f32 %v558, %v600
    %v635 = vadd.f32 %v559, %v596
    %v636 = vadd.f32 %v560, %v600
    %v637 = vadd.f32 %v561, %v596
    %v638 = vadd.f32 %v562, %v600
    %v639 = vadd.f32 %v563, %v596
    %v640 = vadd.f32 %v564, %v600
    %v641 = vadd.f32 %v565, %v596
    %v642 = vadd.f32 %v566, %v600
    %v643 = vadd.f32 %v567, %v596
    %v644 = vadd.f32 %v568, %v600
    %v645 = vadd.f32 %v569, %v596
    %v646 = vadd.f32 %v570, %v600
    %v647 = vadd.f32 %v571, %v596
    %v648 = vadd.f32 %v572, %v600
    %v649 = vadd.f32 %v573, %v596
    %v650 = vadd.f32 %v574, %v600
    %v651 = vadd.f32 %v575, %v596
    %v652 = vadd.f32 %v576, %v600
    %v653 = vadd.f32 %v577, %v596
    %v654 = vadd.f32 %v578, %v600
    %v655 = vadd.f32 %v579, %v596
    %v656 = vadd.f32 %v580, %v600
    %v657 = vadd.f32 %v581, %v596
    %v658 = vadd.f32 %v582, %v600
    %v659 = vadd.f32 %v583, %v596
    %v660 = vadd.f32 %v584, %v600
    %v661 = vadd.f32 %v585, %v596
    %v662 = vadd.f32 %v586, %v600
    %v663 = vadd.f32 %v587, %v596
    %v664 = vadd.f32 %v588, %v600
    %v665 = vadd.f32 %v589, %v596
    %v666 = vadd.f32 %v590, %v600
    %v667 = vmax.f32 %v603, 0.0
    %v668 = vmax.f32 %v604, 0.0
    %v669 = vmax.f32 %v605, 0.0
    %v670 = vmax.f32 %v606, 0.0
    %v671 = vmax.f32 %v607, 0.0
    %v672 = vmax.f32 %v608, 0.0
    %v673 = vmax.f32 %v609, 0.0
    %v674 = vmax.f32 %v610, 0.0
    %v675 = vmax.f32 %v611, 0.0
    %v676 = vmax.f32 %v612, 0.0
    %v677 = vmax.f32 %v613, 0.0
    %v678 = vmax.f32 %v614, 0.0
    %v679 = vmax.f32 %v615, 0.0
    %v680 = vmax.f32 %v616, 0.0
    %v681 = vmax.f32 %v617, 0.0
    %v682 = vmax.f32 %v618, 0.0
    %v683 = vmax.f32 %v619, 0.0
    %v684 = vmax.f32 %v620, 0.0
    %v685 = vmax.f32 %v621, 0.0
    %v686 = vmax.f32 %v622, 0.0
    %v687 = vmax.f32 %v623, 0.0
    %v688 = vmax.f32 %v624, 0.0
    %v689 = vmax.f32 %v625, 0.0
    %v690 = vmax.f32 %v626, 0.0
    %v691 = vmax.f32 %v627, 0.0
    %v692 = vmax.f32 %v628, 0.0
    %v693 = vmax.f32 %v629, 0.0
    %v694 = vmax.f32 %v630, 0.0
    %v695 = vmax.f32 %v631, 0.0
    %v696 = vmax.f32 %v632, 0.0
    %v697 = vmax.f32 %v633, 0.0
    %v698 = vmax.f32 %v634, 0.0
    %v699 = vmax.f32 %v635, 0.0
    %v700 = vmax.f32 %v636, 0.0
    %v701 = vmax.f32 %v637, 0.0
    %v702 = vmax.f32 %v638, 0.0
    %v703 = vmax.f32 %v639, 0.0
    %v704 = vmax.f32 %v640, 0.0
    %v705 = vmax.f32 %v641, 0.0
    %v706 = vmax.f32 %v642, 0.0
    %v707 = vmax.f32 %v643, 0.0
    %v708 = vmax.f32 %v644, 0.0
    %v709 = vmax.f32 %v645, 0.0
    %v710 = vmax.f32 %v646, 0.0
    %v711 = vmax.f32 %v647, 0.0
    %v712 = vmax.f32 %v648, 0.0
    %v713 = vmax.f32 %v649, 0.0
    %v714 = vmax.f32 %v650, 0.0
    %v715 = vmax.f32 %v651, 0.0
    %v716 = vmax.f32 %v652, 0.0
    %v717 = vmax.f32 %v653, 0.0
    %v718 = vmax.f32 %v654, 0.0
    %v719 = vmax.f32 %v655, 0.0
    %v720 = vmax.f32 %v656, 0.0
    %v721 = vmax.f32 %v657, 0.0
    %v722 = vmax.f32 %v658, 0.0
    %v723 = vmax.f32 %v659, 0.0
    %v724 = vmax.f32 %v660, 0.0
    %v725 = vmax.f32 %v661, 0.0
    %v726 = vmax.f32 %v662, 0.0
    %v727 = vmax.f32 %v663, 0.0
    %v728 = vmax.f32 %v664, 0.0
    %v729 = vmax.f32 %v665, 0.0
    %v730 = vmax.f32 %v666, 0.0
    %v731 = vpack.c.bf16 %v669, %v667
    %v732 = vpack.c.bf16 %v670, %v668
    %v733 = vpack.c.bf16 %v673, %v671
    %v734 = vpack.c.bf16 %v674, %v672
    %v735 = vpack.c.bf16 %v677, %v675
    %v736 = vpack.c.bf16 %v678, %v676
    %v737 = vpack.c.bf16 %v681, %v679
    %v738 = vpack.c.bf16 %v682, %v680
    %v739 = vpack.c.bf16 %v685, %v683
    %v740 = vpack.c.bf16 %v686, %v684
    %v741 = vpack.c.bf16 %v689, %v687
    %v742 = vpack.c.bf16 %v690, %v688
    %v743 = vpack.c.bf16 %v693, %v691
    %v744 = vpack.c.bf16 %v694, %v692
    %v745 = vpack.c.bf16 %v697, %v695
    %v746 = vpack.c.bf16 %v698, %v696
    %v747 = vpack.c.bf16 %v701, %v699
    %v748 = vpack.c.bf16 %v702, %v700
    %v749 = vpack.c.bf16 %v705, %v703
    %v750 = vpack.c.bf16 %v706, %v704
    %v751 = vpack.c.bf16 %v709, %v707
    %v752 = vpack.c.bf16 %v710, %v708
    %v753 = vpack.c.bf16 %v713, %v711
    %v754 = vpack.c.bf16 %v714, %v712
    %v755 = vpack.c.bf16 %v717, %v715
    %v756 = vpack.c.bf16 %v718, %v716
    %v757 = vpack.c.bf16 %v721, %v719
    %v758 = vpack.c.bf16 %v722, %v720
    %v759 = vpack.c.bf16 %v725, %v723
    %v760 = vpack.c.bf16 %v726, %v724
    %v761 = vpack.c.bf16 %v729, %v727
    %v762 = vpack.c.bf16 %v730, %v728
    %v763 = vld [vmem:[%s3] sm:$0xff]
    %v764 = vld [vmem:[%s3 + $0x8] sm:$0xff]
    %v765 = vld [vmem:[%s3 + $0x10] sm:$0xff]
    %v766 = vld [vmem:[%s3 + $0x18] sm:$0xff]
    %v767 = vld [vmem:[%s3 + $0x20] sm:$0xff]
    %v768 = vld [vmem:[%s3 + $0x28] sm:$0xff]
    %v769 = vld [vmem:[%s3 + $0x30] sm:$0xff]
    %v770 = vld [vmem:[%s3 + $0x38] sm:$0xff]
    %v771 = vld [vmem:[%s3 + $0x40] sm:$0xff]
    %v772 = vld [vmem:[%s3 + $0x48] sm:$0xff]
    %v773 = vld [vmem:[%s3 + $0x50] sm:$0xff]
    %v774 = vld [vmem:[%s3 + $0x58] sm:$0xff]
    %v775 = vld [vmem:[%s3 + $0x60] sm:$0xff]
    %v776 = vld [vmem:[%s3 + $0x68] sm:$0xff]
    %v777 = vld [vmem:[%s3 + $0x70] sm:$0xff]
    %v778 = vld [vmem:[%s3 + $0x78] sm:$0xff]
    %v779 = vld [vmem:[%s3 + $0x80] sm:$0xff]
    %v780 = vld [vmem:[%s3 + $0x88] sm:$0xff]
    %v781 = vld [vmem:[%s3 + $0x90] sm:$0xff]
    %v782 = vld [vmem:[%s3 + $0x98] sm:$0xff]
    %v783 = vld [vmem:[%s3 + $0xa0] sm:$0xff]
    %v784 = vld [vmem:[%s3 + $0xa8] sm:$0xff]
    %v785 = vld [vmem:[%s3 + $0xb0] sm:$0xff]
    %v786 = vld [vmem:[%s3 + $0xb8] sm:$0xff]
    %v787 = vld [vmem:[%s3 + $0xc0] sm:$0xff]
    %v788 = vld [vmem:[%s3 + $0xc8] sm:$0xff]
    %v789 = vld [vmem:[%s3 + $0xd0] sm:$0xff]
    %v790 = vld [vmem:[%s3 + $0xd8] sm:$0xff]
    %v791 = vld [vmem:[%s3 + $0xe0] sm:$0xff]
    %v792 = vld [vmem:[%s3 + $0xe8] sm:$0xff]
    %v793 = vld [vmem:[%s3 + $0xf0] sm:$0xff]
    %v794 = vld [vmem:[%s3 + $0xf8] sm:$0xff]
    %v795 = vld [vmem:[%s4] sm:$0x3]
    %v797 = vlaneseq
    %v798 = vshrl.u32 %v797, 7
    %v799 = vsub.s32 0, %v798
    %v800 = vrot.slane %v795, %v799
    %v801 = vlaneseq
    %v802 = vshrl.u32 %v801, 7
    %v803 = vsub.s32 1, %v802
    %v804 = vrot.slane %v795, %v803
    %v839 = vunpack.c.l.b16 %v763
    %v840 = vunpack.c.h.b16 %v763
    %v841 = vunpack.c.l.b16 %v764
    %v842 = vunpack.c.h.b16 %v764
    %v843 = vunpack.c.l.b16 %v765
    %v844 = vunpack.c.h.b16 %v765
    %v845 = vunpack.c.l.b16 %v766
    %v846 = vunpack.c.h.b16 %v766
    %v847 = vunpack.c.l.b16 %v767
    %v848 = vunpack.c.h.b16 %v767
    %v849 = vunpack.c.l.b16 %v768
    %v850 = vunpack.c.h.b16 %v768
    %v851 = vunpack.c.l.b16 %v769
    %v852 = vunpack.c.h.b16 %v769
    %v853 = vunpack.c.l.b16 %v770
    %v854 = vunpack.c.h.b16 %v770
    %v855 = vunpack.c.l.b16 %v771
    %v856 = vunpack.c.h.b16 %v771
    %v857 = vunpack.c.l.b16 %v772
    %v858 = vunpack.c.h.b16 %v772
    %v859 = vunpack.c.l.b16 %v773
    %v860 = vunpack.c.h.b16 %v773
    %v861 = vunpack.c.l.b16 %v774
    %v862 = vunpack.c.h.b16 %v774
    %v863 = vunpack.c.l.b16 %v775
    %v864 = vunpack.c.h.b16 %v775
    %v865 = vunpack.c.l.b16 %v776
    %v866 = vunpack.c.h.b16 %v776
    %v867 = vunpack.c.l.b16 %v777
    %v868 = vunpack.c.h.b16 %v777
    %v869 = vunpack.c.l.b16 %v778
    %v870 = vunpack.c.h.b16 %v778
    %v871 = vunpack.c.l.b16 %v779
    %v872 = vunpack.c.h.b16 %v779
    %v873 = vunpack.c.l.b16 %v780
    %v874 = vunpack.c.h.b16 %v780
    %v875 = vunpack.c.l.b16 %v781
    %v876 = vunpack.c.h.b16 %v781
    %v877 = vunpack.c.l.b16 %v782
    %v878 = vunpack.c.h.b16 %v782
    %v879 = vunpack.c.l.b16 %v783
    %v880 = vunpack.c.h.b16 %v783
    %v881 = vunpack.c.l.b16 %v784
    %v882 = vunpack.c.h.b16 %v784
    %v883 = vunpack.c.l.b16 %v785
    %v884 = vunpack.c.h.b16 %v785
    %v885 = vunpack.c.l.b16 %v786
    %v886 = vunpack.c.h.b16 %v786
    %v887 = vunpack.c.l.b16 %v787
    %v888 = vunpack.c.h.b16 %v787
    %v889 = vunpack.c.l.b16 %v788
    %v890 = vunpack.c.h.b16 %v788
    %v891 = vunpack.c.l.b16 %v789
    %v892 = vunpack.c.h.b16 %v789
    %v893 = vunpack.c.l.b16 %v790
    %v894 = vunpack.c.h.b16 %v790
    %v895 = vunpack.c.l.b16 %v791
    %v896 = vunpack.c.h.b16 %v791
    %v897 = vunpack.c.l.b16 %v792
    %v898 = vunpack.c.h.b16 %v792
    %v899 = vunpack.c.l.b16 %v793
    %v900 = vunpack.c.h.b16 %v793
    %v901 = vunpack.c.l.b16 %v794
    %v902 = vunpack.c.h.b16 %v794
    %v903 = vpack.c.b16 %v841, %v839
    %v904 = vpack.c.b16 %v842, %v840
    %v905 = vpack.c.b16 %v845, %v843
    %v906 = vpack.c.b16 %v846, %v844
    %v907 = vpack.c.b16 %v849, %v847
    %v908 = vpack.c.b16 %v850, %v848
    %v909 = vpack.c.b16 %v853, %v851
    %v910 = vpack.c.b16 %v854, %v852
    %v911 = vpack.c.b16 %v857, %v855
    %v912 = vpack.c.b16 %v858, %v856
    %v913 = vpack.c.b16 %v861, %v859
    %v914 = vpack.c.b16 %v862, %v860
    %v915 = vpack.c.b16 %v865, %v863
    %v916 = vpack.c.b16 %v866, %v864
    %v917 = vpack.c.b16 %v869, %v867
    %v918 = vpack.c.b16 %v870, %v868
    %v919 = vpack.c.b16 %v873, %v871
    %v920 = vpack.c.b16 %v874, %v872
    %v921 = vpack.c.b16 %v877, %v875
    %v922 = vpack.c.b16 %v878, %v876
    %v923 = vpack.c.b16 %v881, %v879
    %v924 = vpack.c.b16 %v882, %v880
    %v925 = vpack.c.b16 %v885, %v883
    %v926 = vpack.c.b16 %v886, %v884
    %v927 = vpack.c.b16 %v889, %v887
    %v928 = vpack.c.b16 %v890, %v888
    %v929 = vpack.c.b16 %v893, %v891
    %v930 = vpack.c.b16 %v894, %v892
    %v931 = vpack.c.b16 %v897, %v895
    %v932 = vpack.c.b16 %v898, %v896
    %v933 = vpack.c.b16 %v901, %v899
    %v934 = vpack.c.b16 %v902, %v900
    %967 = vmatprep.subr.bf16.mxu0 %v904
    %968 = vmatpush1.bf16.msra.mxu0 %v903
    %969 = vmatprep.subr.bf16.mxu0 %v906
    %970 = vmatpush1.bf16.msra.mxu0 %v905
    %971 = vmatprep.subr.bf16.mxu0 %v908
    %972 = vmatpush1.bf16.msra.mxu0 %v907
    %973 = vmatprep.subr.bf16.mxu0 %v910
    %974 = vmatpush1.bf16.msra.mxu0 %v909
    %975 = vmatprep.subr.bf16.mxu0 %v912
    %976 = vmatpush1.bf16.msra.mxu0 %v911
    %977 = vmatprep.subr.bf16.mxu0 %v914
    %978 = vmatpush1.bf16.msra.mxu0 %v913
    %979 = vmatprep.subr.bf16.mxu0 %v916
    %980 = vmatpush1.bf16.msra.mxu0 %v915
    %981 = vmatprep.subr.bf16.mxu0 %v918
    %982 = vmatpush1.bf16.msra.mxu0 %v917
    %983 = vmatprep.subr.bf16.mxu0 %v920
    %984 = vmatpush1.bf16.msra.mxu0 %v919
    %985 = vmatprep.subr.bf16.mxu0 %v922
    %986 = vmatpush1.bf16.msra.mxu0 %v921
    %987 = vmatprep.subr.bf16.mxu0 %v924
    %988 = vmatpush1.bf16.msra.mxu0 %v923
    %989 = vmatprep.subr.bf16.mxu0 %v926
    %990 = vmatpush1.bf16.msra.mxu0 %v925
    %991 = vmatprep.subr.bf16.mxu0 %v928
    %992 = vmatpush1.bf16.msra.mxu0 %v927
    %993 = vmatprep.subr.bf16.mxu0 %v930
    %994 = vmatpush1.bf16.msra.mxu0 %v929
    %995 = vmatprep.subr.bf16.mxu0 %v932
    %996 = vmatpush1.bf16.msra.mxu0 %v931
    %997 = vmatprep.subr.bf16.mxu0 %v934
    %998 = vmatpush1.bf16.msra.mxu0 %v933
    %999 = vmatprep.mubr.bf16.mxu0 %v732
    %1000 = vmatmul.mubr.bf16.gmra.mrb[0].mxu0 %v731
    %v1001 = vpop.f32.mrb[0].mxu0
    %v1002 = vadd.f32 %v800, %v1001
    %v1003 = vpop.f32.mrb[0].mxu0
    %v1004 = vadd.f32 %v804, %v1003
    %v1005 = vpop.f32.mrb[0].mxu0
    %v1006 = vadd.f32 %v800, %v1005
    %v1007 = vpop.f32.mrb[0].mxu0
    %v1008 = vadd.f32 %v804, %v1007
    %1009 = vmatprep.mubr.bf16.mxu0 %v734
    %1010 = vmatmul.mubr.bf16.gmra.mrb[0].mxu0 %v733
    %v1011 = vpop.f32.mrb[0].mxu0
    %v1012 = vadd.f32 %v800, %v1011
    %v1013 = vpop.f32.mrb[0].mxu0
    %v1014 = vadd.f32 %v804, %v1013
    %v1015 = vpop.f32.mrb[0].mxu0
    %v1016 = vadd.f32 %v800, %v1015
    %v1017 = vpop.f32.mrb[0].mxu0
    %v1018 = vadd.f32 %v804, %v1017
    %1019 = vmatprep.mubr.bf16.mxu0 %v736
    %1020 = vmatmul.mubr.bf16.gmra.mrb[0].mxu0 %v735
    %v1021 = vpop.f32.mrb[0].mxu0
    %v1022 = vadd.f32 %v800, %v1021
    %v1023 = vpop.f32.mrb[0].mxu0
    %v1024 = vadd.f32 %v804, %v1023
    %v1025 = vpop.f32.mrb[0].mxu0
    %v1026 = vadd.f32 %v800, %v1025
    %v1027 = vpop.f32.mrb[0].mxu0
    %v1028 = vadd.f32 %v804, %v1027
    %1029 = vmatprep.mubr.bf16.mxu0 %v738
    %1030 = vmatmul.mubr.bf16.gmra.mrb[0].mxu0 %v737
    %v1031 = vpop.f32.mrb[0].mxu0
    %v1032 = vadd.f32 %v800, %v1031
    %v1033 = vpop.f32.mrb[0].mxu0
    %v1034 = vadd.f32 %v804, %v1033
    %v1035 = vpop.f32.mrb[0].mxu0
    %v1036 = vadd.f32 %v800, %v1035
    %v1037 = vpop.f32.mrb[0].mxu0
    %v1038 = vadd.f32 %v804, %v1037
    %1039 = vmatprep.mubr.bf16.mxu0 %v740
    %1040 = vmatmul.mubr.bf16.gmra.mrb[0].mxu0 %v739
    %v1041 = vpop.f32.mrb[0].mxu0
    %v1042 = vadd.f32 %v800, %v1041
    %v1043 = vpop.f32.mrb[0].mxu0
    %v1044 = vadd.f32 %v804, %v1043
    %v1045 = vpop.f32.mrb[0].mxu0
    %v1046 = vadd.f32 %v800, %v1045
    %v1047 = vpop.f32.mrb[0].mxu0
    %v1048 = vadd.f32 %v804, %v1047
    %1049 = vmatprep.mubr.bf16.mxu0 %v742
    %1050 = vmatmul.mubr.bf16.gmra.mrb[0].mxu0 %v741
    %v1051 = vpop.f32.mrb[0].mxu0
    %v1052 = vadd.f32 %v800, %v1051
    %v1053 = vpop.f32.mrb[0].mxu0
    %v1054 = vadd.f32 %v804, %v1053
    %v1055 = vpop.f32.mrb[0].mxu0
    %v1056 = vadd.f32 %v800, %v1055
    %v1057 = vpop.f32.mrb[0].mxu0
    %v1058 = vadd.f32 %v804, %v1057
    %1059 = vmatprep.mubr.bf16.mxu0 %v744
    %1060 = vmatmul.mubr.bf16.gmra.mrb[0].mxu0 %v743
    %v1061 = vpop.f32.mrb[0].mxu0
    %v1062 = vadd.f32 %v800, %v1061
    %v1063 = vpop.f32.mrb[0].mxu0
    %v1064 = vadd.f32 %v804, %v1063
    %v1065 = vpop.f32.mrb[0].mxu0
    %v1066 = vadd.f32 %v800, %v1065
    %v1067 = vpop.f32.mrb[0].mxu0
    %v1068 = vadd.f32 %v804, %v1067
    %1069 = vmatprep.mubr.bf16.mxu0 %v746
    %1070 = vmatmul.mubr.bf16.gmra.mrb[0].mxu0 %v745
    %v1071 = vpop.f32.mrb[0].mxu0
    %v1072 = vadd.f32 %v800, %v1071
    %v1073 = vpop.f32.mrb[0].mxu0
    %v1074 = vadd.f32 %v804, %v1073
    %v1075 = vpop.f32.mrb[0].mxu0
    %v1076 = vadd.f32 %v800, %v1075
    %v1077 = vpop.f32.mrb[0].mxu0
    %v1078 = vadd.f32 %v804, %v1077
    %1079 = vmatprep.mubr.bf16.mxu0 %v748
    %1080 = vmatmul.mubr.bf16.gmra.mrb[0].mxu0 %v747
    %v1081 = vpop.f32.mrb[0].mxu0
    %v1082 = vadd.f32 %v800, %v1081
    %v1083 = vpop.f32.mrb[0].mxu0
    %v1084 = vadd.f32 %v804, %v1083
    %v1085 = vpop.f32.mrb[0].mxu0
    %v1086 = vadd.f32 %v800, %v1085
    %v1087 = vpop.f32.mrb[0].mxu0
    %v1088 = vadd.f32 %v804, %v1087
    %1089 = vmatprep.mubr.bf16.mxu0 %v750
    %1090 = vmatmul.mubr.bf16.gmra.mrb[0].mxu0 %v749
    %v1091 = vpop.f32.mrb[0].mxu0
    %v1092 = vadd.f32 %v800, %v1091
    %v1093 = vpop.f32.mrb[0].mxu0
    %v1094 = vadd.f32 %v804, %v1093
    %v1095 = vpop.f32.mrb[0].mxu0
    %v1096 = vadd.f32 %v800, %v1095
    %v1097 = vpop.f32.mrb[0].mxu0
    %v1098 = vadd.f32 %v804, %v1097
    %1099 = vmatprep.mubr.bf16.mxu0 %v752
    %1100 = vmatmul.mubr.bf16.gmra.mrb[0].mxu0 %v751
    %v1101 = vpop.f32.mrb[0].mxu0
    %v1102 = vadd.f32 %v800, %v1101
    %v1103 = vpop.f32.mrb[0].mxu0
    %v1104 = vadd.f32 %v804, %v1103
    %v1105 = vpop.f32.mrb[0].mxu0
    %v1106 = vadd.f32 %v800, %v1105
    %v1107 = vpop.f32.mrb[0].mxu0
    %v1108 = vadd.f32 %v804, %v1107
    %1109 = vmatprep.mubr.bf16.mxu0 %v754
    %1110 = vmatmul.mubr.bf16.gmra.mrb[0].mxu0 %v753
    %v1111 = vpop.f32.mrb[0].mxu0
    %v1112 = vadd.f32 %v800, %v1111
    %v1113 = vpop.f32.mrb[0].mxu0
    %v1114 = vadd.f32 %v804, %v1113
    %v1115 = vpop.f32.mrb[0].mxu0
    %v1116 = vadd.f32 %v800, %v1115
    %v1117 = vpop.f32.mrb[0].mxu0
    %v1118 = vadd.f32 %v804, %v1117
    %1119 = vmatprep.mubr.bf16.mxu0 %v756
    %1120 = vmatmul.mubr.bf16.gmra.mrb[0].mxu0 %v755
    %v1121 = vpop.f32.mrb[0].mxu0
    %v1122 = vadd.f32 %v800, %v1121
    %v1123 = vpop.f32.mrb[0].mxu0
    %v1124 = vadd.f32 %v804, %v1123
    %v1125 = vpop.f32.mrb[0].mxu0
    %v1126 = vadd.f32 %v800, %v1125
    %v1127 = vpop.f32.mrb[0].mxu0
    %v1128 = vadd.f32 %v804, %v1127
    %1129 = vmatprep.mubr.bf16.mxu0 %v758
    %1130 = vmatmul.mubr.bf16.gmra.mrb[0].mxu0 %v757
    %v1131 = vpop.f32.mrb[0].mxu0
    %v1132 = vadd.f32 %v800, %v1131
    %v1133 = vpop.f32.mrb[0].mxu0
    %v1134 = vadd.f32 %v804, %v1133
    %v1135 = vpop.f32.mrb[0].mxu0
    %v1136 = vadd.f32 %v800, %v1135
    %v1137 = vpop.f32.mrb[0].mxu0
    %v1138 = vadd.f32 %v804, %v1137
    %1139 = vmatprep.mubr.bf16.mxu0 %v760
    %1140 = vmatmul.mubr.bf16.gmra.mrb[0].mxu0 %v759
    %v1141 = vpop.f32.mrb[0].mxu0
    %v1142 = vadd.f32 %v800, %v1141
    %v1143 = vpop.f32.mrb[0].mxu0
    %v1144 = vadd.f32 %v804, %v1143
    %v1145 = vpop.f32.mrb[0].mxu0
    %v1146 = vadd.f32 %v800, %v1145
    %v1147 = vpop.f32.mrb[0].mxu0
    %v1148 = vadd.f32 %v804, %v1147
    %1149 = vmatprep.mubr.bf16.mxu0 %v762
    %1150 = vmatmul.mubr.bf16.gmra.mrb[0].mxu0 %v761
    %v1151 = vpop.f32.mrb[0].mxu0
    %v1152 = vadd.f32 %v800, %v1151
    %v1153 = vpop.f32.mrb[0].mxu0
    %v1154 = vadd.f32 %v804, %v1153
    %v1155 = vpop.f32.mrb[0].mxu0
    %v1156 = vadd.f32 %v800, %v1155
    %v1157 = vpop.f32.mrb[0].mxu0
    %v1158 = vadd.f32 %v804, %v1157
    %1159 = vdwg.mxu0
    %v1160 = vmax.f32 %v1002, 0.0
    %v1161 = vmax.f32 %v1004, 0.0
    %v1162 = vmax.f32 %v1006, 0.0
    %v1163 = vmax.f32 %v1008, 0.0
    %v1164 = vmax.f32 %v1012, 0.0
    %v1165 = vmax.f32 %v1014, 0.0
    %v1166 = vmax.f32 %v1016, 0.0
    %v1167 = vmax.f32 %v1018, 0.0
    %v1168 = vmax.f32 %v1022, 0.0
    %v1169 = vmax.f32 %v1024, 0.0
    %v1170 = vmax.f32 %v1026, 0.0
    %v1171 = vmax.f32 %v1028, 0.0
    %v1172 = vmax.f32 %v1032, 0.0
    %v1173 = vmax.f32 %v1034, 0.0
    %v1174 = vmax.f32 %v1036, 0.0
    %v1175 = vmax.f32 %v1038, 0.0
    %v1176 = vmax.f32 %v1042, 0.0
    %v1177 = vmax.f32 %v1044, 0.0
    %v1178 = vmax.f32 %v1046, 0.0
    %v1179 = vmax.f32 %v1048, 0.0
    %v1180 = vmax.f32 %v1052, 0.0
    %v1181 = vmax.f32 %v1054, 0.0
    %v1182 = vmax.f32 %v1056, 0.0
    %v1183 = vmax.f32 %v1058, 0.0
    %v1184 = vmax.f32 %v1062, 0.0
    %v1185 = vmax.f32 %v1064, 0.0
    %v1186 = vmax.f32 %v1066, 0.0
    %v1187 = vmax.f32 %v1068, 0.0
    %v1188 = vmax.f32 %v1072, 0.0
    %v1189 = vmax.f32 %v1074, 0.0
    %v1190 = vmax.f32 %v1076, 0.0
    %v1191 = vmax.f32 %v1078, 0.0
    %v1192 = vmax.f32 %v1082, 0.0
    %v1193 = vmax.f32 %v1084, 0.0
    %v1194 = vmax.f32 %v1086, 0.0
    %v1195 = vmax.f32 %v1088, 0.0
    %v1196 = vmax.f32 %v1092, 0.0
    %v1197 = vmax.f32 %v1094, 0.0
    %v1198 = vmax.f32 %v1096, 0.0
    %v1199 = vmax.f32 %v1098, 0.0
    %v1200 = vmax.f32 %v1102, 0.0
    %v1201 = vmax.f32 %v1104, 0.0
    %v1202 = vmax.f32 %v1106, 0.0
    %v1203 = vmax.f32 %v1108, 0.0
    %v1204 = vmax.f32 %v1112, 0.0
    %v1205 = vmax.f32 %v1114, 0.0
    %v1206 = vmax.f32 %v1116, 0.0
    %v1207 = vmax.f32 %v1118, 0.0
    %v1208 = vmax.f32 %v1122, 0.0
    %v1209 = vmax.f32 %v1124, 0.0
    %v1210 = vmax.f32 %v1126, 0.0
    %v1211 = vmax.f32 %v1128, 0.0
    %v1212 = vmax.f32 %v1132, 0.0
    %v1213 = vmax.f32 %v1134, 0.0
    %v1214 = vmax.f32 %v1136, 0.0
    %v1215 = vmax.f32 %v1138, 0.0
    %v1216 = vmax.f32 %v1142, 0.0
    %v1217 = vmax.f32 %v1144, 0.0
    %v1218 = vmax.f32 %v1146, 0.0
    %v1219 = vmax.f32 %v1148, 0.0
    %v1220 = vmax.f32 %v1152, 0.0
    %v1221 = vmax.f32 %v1154, 0.0
    %v1222 = vmax.f32 %v1156, 0.0
    %v1223 = vmax.f32 %v1158, 0.0
    %v1224 = vpack.c.bf16 %v1162, %v1160
    %v1225 = vpack.c.bf16 %v1163, %v1161
    %v1226 = vpack.c.bf16 %v1166, %v1164
    %v1227 = vpack.c.bf16 %v1167, %v1165
    %v1228 = vpack.c.bf16 %v1170, %v1168
    %v1229 = vpack.c.bf16 %v1171, %v1169
    %v1230 = vpack.c.bf16 %v1174, %v1172
    %v1231 = vpack.c.bf16 %v1175, %v1173
    %v1232 = vpack.c.bf16 %v1178, %v1176
    %v1233 = vpack.c.bf16 %v1179, %v1177
    %v1234 = vpack.c.bf16 %v1182, %v1180
    %v1235 = vpack.c.bf16 %v1183, %v1181
    %v1236 = vpack.c.bf16 %v1186, %v1184
    %v1237 = vpack.c.bf16 %v1187, %v1185
    %v1238 = vpack.c.bf16 %v1190, %v1188
    %v1239 = vpack.c.bf16 %v1191, %v1189
    %v1240 = vpack.c.bf16 %v1194, %v1192
    %v1241 = vpack.c.bf16 %v1195, %v1193
    %v1242 = vpack.c.bf16 %v1198, %v1196
    %v1243 = vpack.c.bf16 %v1199, %v1197
    %v1244 = vpack.c.bf16 %v1202, %v1200
    %v1245 = vpack.c.bf16 %v1203, %v1201
    %v1246 = vpack.c.bf16 %v1206, %v1204
    %v1247 = vpack.c.bf16 %v1207, %v1205
    %v1248 = vpack.c.bf16 %v1210, %v1208
    %v1249 = vpack.c.bf16 %v1211, %v1209
    %v1250 = vpack.c.bf16 %v1214, %v1212
    %v1251 = vpack.c.bf16 %v1215, %v1213
    %v1252 = vpack.c.bf16 %v1218, %v1216
    %v1253 = vpack.c.bf16 %v1219, %v1217
    %v1254 = vpack.c.bf16 %v1222, %v1220
    %v1255 = vpack.c.bf16 %v1223, %v1221
    %v1256 = vld [vmem:[%s5] sm:$0xff]
    %v1257 = vld [vmem:[%s5 + $0x8] sm:$0xff]
    %v1258 = vld [vmem:[%s5 + $0x10] sm:$0xff]
    %v1259 = vld [vmem:[%s5 + $0x18] sm:$0xff]
    %v1260 = vld [vmem:[%s5 + $0x20] sm:$0xff]
    %v1261 = vld [vmem:[%s5 + $0x28] sm:$0xff]
    %v1262 = vld [vmem:[%s5 + $0x30] sm:$0xff]
    %v1263 = vld [vmem:[%s5 + $0x38] sm:$0xff]
    %v1264 = vld [vmem:[%s5 + $0x40] sm:$0xff]
    %v1265 = vld [vmem:[%s5 + $0x48] sm:$0xff]
    %v1266 = vld [vmem:[%s5 + $0x50] sm:$0xff]
    %v1267 = vld [vmem:[%s5 + $0x58] sm:$0xff]
    %v1268 = vld [vmem:[%s5 + $0x60] sm:$0xff]
    %v1269 = vld [vmem:[%s5 + $0x68] sm:$0xff]
    %v1270 = vld [vmem:[%s5 + $0x70] sm:$0xff]
    %v1271 = vld [vmem:[%s5 + $0x78] sm:$0xff]
    %v1272 = vld [vmem:[%s5 + $0x80] sm:$0xff]
    %v1273 = vld [vmem:[%s5 + $0x88] sm:$0xff]
    %v1274 = vld [vmem:[%s5 + $0x90] sm:$0xff]
    %v1275 = vld [vmem:[%s5 + $0x98] sm:$0xff]
    %v1276 = vld [vmem:[%s5 + $0xa0] sm:$0xff]
    %v1277 = vld [vmem:[%s5 + $0xa8] sm:$0xff]
    %v1278 = vld [vmem:[%s5 + $0xb0] sm:$0xff]
    %v1279 = vld [vmem:[%s5 + $0xb8] sm:$0xff]
    %v1280 = vld [vmem:[%s5 + $0xc0] sm:$0xff]
    %v1281 = vld [vmem:[%s5 + $0xc8] sm:$0xff]
    %v1282 = vld [vmem:[%s5 + $0xd0] sm:$0xff]
    %v1283 = vld [vmem:[%s5 + $0xd8] sm:$0xff]
    %v1284 = vld [vmem:[%s5 + $0xe0] sm:$0xff]
    %v1285 = vld [vmem:[%s5 + $0xe8] sm:$0xff]
    %v1286 = vld [vmem:[%s5 + $0xf0] sm:$0xff]
    %v1287 = vld [vmem:[%s5 + $0xf8] sm:$0xff]
    %v1288 = vld [vmem:[%s6] sm:$0x3]
    %v1290 = vlaneseq
    %v1291 = vshrl.u32 %v1290, 7
    %v1292 = vsub.s32 0, %v1291
    %v1293 = vrot.slane %v1288, %v1292
    %v1294 = vlaneseq
    %v1295 = vshrl.u32 %v1294, 7
    %v1296 = vsub.s32 1, %v1295
    %v1297 = vrot.slane %v1288, %v1296
    %v1332 = vunpack.c.l.b16 %v1256
    %v1333 = vunpack.c.h.b16 %v1256
    %v1334 = vunpack.c.l.b16 %v1257
    %v1335 = vunpack.c.h.b16 %v1257
    %v1336 = vunpack.c.l.b16 %v1258
    %v1337 = vunpack.c.h.b16 %v1258
    %v1338 = vunpack.c.l.b16 %v1259
    %v1339 = vunpack.c.h.b16 %v1259
    %v1340 = vunpack.c.l.b16 %v1260
    %v1341 = vunpack.c.h.b16 %v1260
    %v1342 = vunpack.c.l.b16 %v1261
    %v1343 = vunpack.c.h.b16 %v1261
    %v1344 = vunpack.c.l.b16 %v1262
    %v1345 = vunpack.c.h.b16 %v1262
    %v1346 = vunpack.c.l.b16 %v1263
    %v1347 = vunpack.c.h.b16 %v1263
    %v1348 = vunpack.c.l.b16 %v1264
    %v1349 = vunpack.c.h.b16 %v1264
    %v1350 = vunpack.c.l.b16 %v1265
    %v1351 = vunpack.c.h.b16 %v1265
    %v1352 = vunpack.c.l.b16 %v1266
    %v1353 = vunpack.c.h.b16 %v1266
    %v1354 = vunpack.c.l.b16 %v1267
    %v1355 = vunpack.c.h.b16 %v1267
    %v1356 = vunpack.c.l.b16 %v1268
    %v1357 = vunpack.c.h.b16 %v1268
    %v1358 = vunpack.c.l.b16 %v1269
    %v1359 = vunpack.c.h.b16 %v1269
    %v1360 = vunpack.c.l.b16 %v1270
    %v1361 = vunpack.c.h.b16 %v1270
    %v1362 = vunpack.c.l.b16 %v1271
    %v1363 = vunpack.c.h.b16 %v1271
    %v1364 = vunpack.c.l.b16 %v1272
    %v1365 = vunpack.c.h.b16 %v1272
    %v1366 = vunpack.c.l.b16 %v1273
    %v1367 = vunpack.c.h.b16 %v1273
    %v1368 = vunpack.c.l.b16 %v1274
    %v1369 = vunpack.c.h.b16 %v1274
    %v1370 = vunpack.c.l.b16 %v1275
    %v1371 = vunpack.c.h.b16 %v1275
    %v1372 = vunpack.c.l.b16 %v1276
    %v1373 = vunpack.c.h.b16 %v1276
    %v1374 = vunpack.c.l.b16 %v1277
    %v1375 = vunpack.c.h.b16 %v1277
    %v1376 = vunpack.c.l.b16 %v1278
    %v1377 = vunpack.c.h.b16 %v1278
    %v1378 = vunpack.c.l.b16 %v1279
    %v1379 = vunpack.c.h.b16 %v1279
    %v1380 = vunpack.c.l.b16 %v1280
    %v1381 = vunpack.c.h.b16 %v1280
    %v1382 = vunpack.c.l.b16 %v1281
    %v1383 = vunpack.c.h.b16 %v1281
    %v1384 = vunpack.c.l.b16 %v1282
    %v1385 = vunpack.c.h.b16 %v1282
    %v1386 = vunpack.c.l.b16 %v1283
    %v1387 = vunpack.c.h.b16 %v1283
    %v1388 = vunpack.c.l.b16 %v1284
    %v1389 = vunpack.c.h.b16 %v1284
    %v1390 = vunpack.c.l.b16 %v1285
    %v1391 = vunpack.c.h.b16 %v1285
    %v1392 = vunpack.c.l.b16 %v1286
    %v1393 = vunpack.c.h.b16 %v1286
    %v1394 = vunpack.c.l.b16 %v1287
    %v1395 = vunpack.c.h.b16 %v1287
    %v1396 = vpack.c.b16 %v1334, %v1332
    %v1397 = vpack.c.b16 %v1335, %v1333
    %v1398 = vpack.c.b16 %v1338, %v1336
    %v1399 = vpack.c.b16 %v1339, %v1337
    %v1400 = vpack.c.b16 %v1342, %v1340
    %v1401 = vpack.c.b16 %v1343, %v1341
    %v1402 = vpack.c.b16 %v1346, %v1344
    %v1403 = vpack.c.b16 %v1347, %v1345
    %v1404 = vpack.c.b16 %v1350, %v1348
    %v1405 = vpack.c.b16 %v1351, %v1349
    %v1406 = vpack.c.b16 %v1354, %v1352
    %v1407 = vpack.c.b16 %v1355, %v1353
    %v1408 = vpack.c.b16 %v1358, %v1356
    %v1409 = vpack.c.b16 %v1359, %v1357
    %v1410 = vpack.c.b16 %v1362, %v1360
    %v1411 = vpack.c.b16 %v1363, %v1361
    %v1412 = vpack.c.b16 %v1366, %v1364
    %v1413 = vpack.c.b16 %v1367, %v1365
    %v1414 = vpack.c.b16 %v1370, %v1368
    %v1415 = vpack.c.b16 %v1371, %v1369
    %v1416 = vpack.c.b16 %v1374, %v1372
    %v1417 = vpack.c.b16 %v1375, %v1373
    %v1418 = vpack.c.b16 %v1378, %v1376
    %v1419 = vpack.c.b16 %v1379, %v1377
    %v1420 = vpack.c.b16 %v1382, %v1380
    %v1421 = vpack.c.b16 %v1383, %v1381
    %v1422 = vpack.c.b16 %v1386, %v1384
    %v1423 = vpack.c.b16 %v1387, %v1385
    %v1424 = vpack.c.b16 %v1390, %v1388
    %v1425 = vpack.c.b16 %v1391, %v1389
    %v1426 = vpack.c.b16 %v1394, %v1392
    %v1427 = vpack.c.b16 %v1395, %v1393
    %1460 = vmatprep.subr.bf16.mxu0 %v1397
    %1461 = vmatpush1.bf16.msra.mxu0 %v1396
    %1462 = vmatprep.subr.bf16.mxu0 %v1399
    %1463 = vmatpush1.bf16.msra.mxu0 %v1398
    %1464 = vmatprep.subr.bf16.mxu0 %v1401
    %1465 = vmatpush1.bf16.msra.mxu0 %v1400
    %1466 = vmatprep.subr.bf16.mxu0 %v1403
    %1467 = vmatpush1.bf16.msra.mxu0 %v1402
    %1468 = vmatprep.subr.bf16.mxu0 %v1405
    %1469 = vmatpush1.bf16.msra.mxu0 %v1404
    %1470 = vmatprep.subr.bf16.mxu0 %v1407
    %1471 = vmatpush1.bf16.msra.mxu0 %v1406
    %1472 = vmatprep.subr.bf16.mxu0 %v1409
    %1473 = vmatpush1.bf16.msra.mxu0 %v1408
    %1474 = vmatprep.subr.bf16.mxu0 %v1411
    %1475 = vmatpush1.bf16.msra.mxu0 %v1410
    %1476 = vmatprep.subr.bf16.mxu0 %v1413
    %1477 = vmatpush1.bf16.msra.mxu0 %v1412
    %1478 = vmatprep.subr.bf16.mxu0 %v1415
    %1479 = vmatpush1.bf16.msra.mxu0 %v1414
    %1480 = vmatprep.subr.bf16.mxu0 %v1417
    %1481 = vmatpush1.bf16.msra.mxu0 %v1416
    %1482 = vmatprep.subr.bf16.mxu0 %v1419
    %1483 = vmatpush1.bf16.msra.mxu0 %v1418
    %1484 = vmatprep.subr.bf16.mxu0 %v1421
    %1485 = vmatpush1.bf16.msra.mxu0 %v1420
    %1486 = vmatprep.subr.bf16.mxu0 %v1423
    %1487 = vmatpush1.bf16.msra.mxu0 %v1422
    %1488 = vmatprep.subr.bf16.mxu0 %v1425
    %1489 = vmatpush1.bf16.msra.mxu0 %v1424
    %1490 = vmatprep.subr.bf16.mxu0 %v1427
    %1491 = vmatpush1.bf16.msra.mxu0 %v1426
    %1492 = vmatprep.mubr.bf16.mxu0 %v1225
    %1493 = vmatmul.mubr.bf16.gmra.mrb[0].mxu0 %v1224
    %v1494 = vpop.f32.mrb[0].mxu0
    %v1495 = vadd.f32 %v1293, %v1494
    %v1496 = vpop.f32.mrb[0].mxu0
    %v1497 = vadd.f32 %v1297, %v1496
    %v1498 = vpop.f32.mrb[0].mxu0
    %v1499 = vadd.f32 %v1293, %v1498
    %v1500 = vpop.f32.mrb[0].mxu0
    %v1501 = vadd.f32 %v1297, %v1500
    %1502 = vmatprep.mubr.bf16.mxu0 %v1227
    %1503 = vmatmul.mubr.bf16.gmra.mrb[0].mxu0 %v1226
    %v1504 = vpop.f32.mrb[0].mxu0
    %v1505 = vadd.f32 %v1293, %v1504
    %v1506 = vpop.f32.mrb[0].mxu0
    %v1507 = vadd.f32 %v1297, %v1506
    %v1508 = vpop.f32.mrb[0].mxu0
    %v1509 = vadd.f32 %v1293, %v1508
    %v1510 = vpop.f32.mrb[0].mxu0
    %v1511 = vadd.f32 %v1297, %v1510
    %1512 = vmatprep.mubr.bf16.mxu0 %v1229
    %1513 = vmatmul.mubr.bf16.gmra.mrb[0].mxu0 %v1228
    %v1514 = vpop.f32.mrb[0].mxu0
    %v1515 = vadd.f32 %v1293, %v1514
    %v1516 = vpop.f32.mrb[0].mxu0
    %v1517 = vadd.f32 %v1297, %v1516
    %v1518 = vpop.f32.mrb[0].mxu0
    %v1519 = vadd.f32 %v1293, %v1518
    %v1520 = vpop.f32.mrb[0].mxu0
    %v1521 = vadd.f32 %v1297, %v1520
    %1522 = vmatprep.mubr.bf16.mxu0 %v1231
    %1523 = vmatmul.mubr.bf16.gmra.mrb[0].mxu0 %v1230
    %v1524 = vpop.f32.mrb[0].mxu0
    %v1525 = vadd.f32 %v1293, %v1524
    %v1526 = vpop.f32.mrb[0].mxu0
    %v1527 = vadd.f32 %v1297, %v1526
    %v1528 = vpop.f32.mrb[0].mxu0
    %v1529 = vadd.f32 %v1293, %v1528
    %v1530 = vpop.f32.mrb[0].mxu0
    %v1531 = vadd.f32 %v1297, %v1530
    %1532 = vmatprep.mubr.bf16.mxu0 %v1233
    %1533 = vmatmul.mubr.bf16.gmra.mrb[0].mxu0 %v1232
    %v1534 = vpop.f32.mrb[0].mxu0
    %v1535 = vadd.f32 %v1293, %v1534
    %v1536 = vpop.f32.mrb[0].mxu0
    %v1537 = vadd.f32 %v1297, %v1536
    %v1538 = vpop.f32.mrb[0].mxu0
    %v1539 = vadd.f32 %v1293, %v1538
    %v1540 = vpop.f32.mrb[0].mxu0
    %v1541 = vadd.f32 %v1297, %v1540
    %1542 = vmatprep.mubr.bf16.mxu0 %v1235
    %1543 = vmatmul.mubr.bf16.gmra.mrb[0].mxu0 %v1234
    %v1544 = vpop.f32.mrb[0].mxu0
    %v1545 = vadd.f32 %v1293, %v1544
    %v1546 = vpop.f32.mrb[0].mxu0
    %v1547 = vadd.f32 %v1297, %v1546
    %v1548 = vpop.f32.mrb[0].mxu0
    %v1549 = vadd.f32 %v1293, %v1548
    %v1550 = vpop.f32.mrb[0].mxu0
    %v1551 = vadd.f32 %v1297, %v1550
    %1552 = vmatprep.mubr.bf16.mxu0 %v1237
    %1553 = vmatmul.mubr.bf16.gmra.mrb[0].mxu0 %v1236
    %v1554 = vpop.f32.mrb[0].mxu0
    %v1555 = vadd.f32 %v1293, %v1554
    %v1556 = vpop.f32.mrb[0].mxu0
    %v1557 = vadd.f32 %v1297, %v1556
    %v1558 = vpop.f32.mrb[0].mxu0
    %v1559 = vadd.f32 %v1293, %v1558
    %v1560 = vpop.f32.mrb[0].mxu0
    %v1561 = vadd.f32 %v1297, %v1560
    %1562 = vmatprep.mubr.bf16.mxu0 %v1239
    %1563 = vmatmul.mubr.bf16.gmra.mrb[0].mxu0 %v1238
    %v1564 = vpop.f32.mrb[0].mxu0
    %v1565 = vadd.f32 %v1293, %v1564
    %v1566 = vpop.f32.mrb[0].mxu0
    %v1567 = vadd.f32 %v1297, %v1566
    %v1568 = vpop.f32.mrb[0].mxu0
    %v1569 = vadd.f32 %v1293, %v1568
    %v1570 = vpop.f32.mrb[0].mxu0
    %v1571 = vadd.f32 %v1297, %v1570
    %1572 = vmatprep.mubr.bf16.mxu0 %v1241
    %1573 = vmatmul.mubr.bf16.gmra.mrb[0].mxu0 %v1240
    %v1574 = vpop.f32.mrb[0].mxu0
    %v1575 = vadd.f32 %v1293, %v1574
    %v1576 = vpop.f32.mrb[0].mxu0
    %v1577 = vadd.f32 %v1297, %v1576
    %v1578 = vpop.f32.mrb[0].mxu0
    %v1579 = vadd.f32 %v1293, %v1578
    %v1580 = vpop.f32.mrb[0].mxu0
    %v1581 = vadd.f32 %v1297, %v1580
    %1582 = vmatprep.mubr.bf16.mxu0 %v1243
    %1583 = vmatmul.mubr.bf16.gmra.mrb[0].mxu0 %v1242
    %v1584 = vpop.f32.mrb[0].mxu0
    %v1585 = vadd.f32 %v1293, %v1584
    %v1586 = vpop.f32.mrb[0].mxu0
    %v1587 = vadd.f32 %v1297, %v1586
    %v1588 = vpop.f32.mrb[0].mxu0
    %v1589 = vadd.f32 %v1293, %v1588
    %v1590 = vpop.f32.mrb[0].mxu0
    %v1591 = vadd.f32 %v1297, %v1590
    %1592 = vmatprep.mubr.bf16.mxu0 %v1245
    %1593 = vmatmul.mubr.bf16.gmra.mrb[0].mxu0 %v1244
    %v1594 = vpop.f32.mrb[0].mxu0
    %v1595 = vadd.f32 %v1293, %v1594
    %v1596 = vpop.f32.mrb[0].mxu0
    %v1597 = vadd.f32 %v1297, %v1596
    %v1598 = vpop.f32.mrb[0].mxu0
    %v1599 = vadd.f32 %v1293, %v1598
    %v1600 = vpop.f32.mrb[0].mxu0
    %v1601 = vadd.f32 %v1297, %v1600
    %1602 = vmatprep.mubr.bf16.mxu0 %v1247
    %1603 = vmatmul.mubr.bf16.gmra.mrb[0].mxu0 %v1246
    %v1604 = vpop.f32.mrb[0].mxu0
    %v1605 = vadd.f32 %v1293, %v1604
    %v1606 = vpop.f32.mrb[0].mxu0
    %v1607 = vadd.f32 %v1297, %v1606
    %v1608 = vpop.f32.mrb[0].mxu0
    %v1609 = vadd.f32 %v1293, %v1608
    %v1610 = vpop.f32.mrb[0].mxu0
    %v1611 = vadd.f32 %v1297, %v1610
    %1612 = vmatprep.mubr.bf16.mxu0 %v1249
    %1613 = vmatmul.mubr.bf16.gmra.mrb[0].mxu0 %v1248
    %v1614 = vpop.f32.mrb[0].mxu0
    %v1615 = vadd.f32 %v1293, %v1614
    %v1616 = vpop.f32.mrb[0].mxu0
    %v1617 = vadd.f32 %v1297, %v1616
    %v1618 = vpop.f32.mrb[0].mxu0
    %v1619 = vadd.f32 %v1293, %v1618
    %v1620 = vpop.f32.mrb[0].mxu0
    %v1621 = vadd.f32 %v1297, %v1620
    %1622 = vmatprep.mubr.bf16.mxu0 %v1251
    %1623 = vmatmul.mubr.bf16.gmra.mrb[0].mxu0 %v1250
    %v1624 = vpop.f32.mrb[0].mxu0
    %v1625 = vadd.f32 %v1293, %v1624
    %v1626 = vpop.f32.mrb[0].mxu0
    %v1627 = vadd.f32 %v1297, %v1626
    %v1628 = vpop.f32.mrb[0].mxu0
    %v1629 = vadd.f32 %v1293, %v1628
    %v1630 = vpop.f32.mrb[0].mxu0
    %v1631 = vadd.f32 %v1297, %v1630
    %1632 = vmatprep.mubr.bf16.mxu0 %v1253
    %1633 = vmatmul.mubr.bf16.gmra.mrb[0].mxu0 %v1252
    %v1634 = vpop.f32.mrb[0].mxu0
    %v1635 = vadd.f32 %v1293, %v1634
    %v1636 = vpop.f32.mrb[0].mxu0
    %v1637 = vadd.f32 %v1297, %v1636
    %v1638 = vpop.f32.mrb[0].mxu0
    %v1639 = vadd.f32 %v1293, %v1638
    %v1640 = vpop.f32.mrb[0].mxu0
    %v1641 = vadd.f32 %v1297, %v1640
    %1642 = vmatprep.mubr.bf16.mxu0 %v1255
    %1643 = vmatmul.mubr.bf16.gmra.mrb[0].mxu0 %v1254
    %v1644 = vpop.f32.mrb[0].mxu0
    %v1645 = vadd.f32 %v1293, %v1644
    %v1646 = vpop.f32.mrb[0].mxu0
    %v1647 = vadd.f32 %v1297, %v1646
    %v1648 = vpop.f32.mrb[0].mxu0
    %v1649 = vadd.f32 %v1293, %v1648
    %v1650 = vpop.f32.mrb[0].mxu0
    %v1651 = vadd.f32 %v1297, %v1650
    %1652 = vdwg.mxu0
    %v1653 = vmax.f32 %v1495, 0.0
    %v1654 = vmax.f32 %v1497, 0.0
    %v1655 = vmax.f32 %v1499, 0.0
    %v1656 = vmax.f32 %v1501, 0.0
    %v1657 = vmax.f32 %v1505, 0.0
    %v1658 = vmax.f32 %v1507, 0.0
    %v1659 = vmax.f32 %v1509, 0.0
    %v1660 = vmax.f32 %v1511, 0.0
    %v1661 = vmax.f32 %v1515, 0.0
    %v1662 = vmax.f32 %v1517, 0.0
    %v1663 = vmax.f32 %v1519, 0.0
    %v1664 = vmax.f32 %v1521, 0.0
    %v1665 = vmax.f32 %v1525, 0.0
    %v1666 = vmax.f32 %v1527, 0.0
    %v1667 = vmax.f32 %v1529, 0.0
    %v1668 = vmax.f32 %v1531, 0.0
    %v1669 = vmax.f32 %v1535, 0.0
    %v1670 = vmax.f32 %v1537, 0.0
    %v1671 = vmax.f32 %v1539, 0.0
    %v1672 = vmax.f32 %v1541, 0.0
    %v1673 = vmax.f32 %v1545, 0.0
    %v1674 = vmax.f32 %v1547, 0.0
    %v1675 = vmax.f32 %v1549, 0.0
    %v1676 = vmax.f32 %v1551, 0.0
    %v1677 = vmax.f32 %v1555, 0.0
    %v1678 = vmax.f32 %v1557, 0.0
    %v1679 = vmax.f32 %v1559, 0.0
    %v1680 = vmax.f32 %v1561, 0.0
    %v1681 = vmax.f32 %v1565, 0.0
    %v1682 = vmax.f32 %v1567, 0.0
    %v1683 = vmax.f32 %v1569, 0.0
    %v1684 = vmax.f32 %v1571, 0.0
    %v1685 = vmax.f32 %v1575, 0.0
    %v1686 = vmax.f32 %v1577, 0.0
    %v1687 = vmax.f32 %v1579, 0.0
    %v1688 = vmax.f32 %v1581, 0.0
    %v1689 = vmax.f32 %v1585, 0.0
    %v1690 = vmax.f32 %v1587, 0.0
    %v1691 = vmax.f32 %v1589, 0.0
    %v1692 = vmax.f32 %v1591, 0.0
    %v1693 = vmax.f32 %v1595, 0.0
    %v1694 = vmax.f32 %v1597, 0.0
    %v1695 = vmax.f32 %v1599, 0.0
    %v1696 = vmax.f32 %v1601, 0.0
    %v1697 = vmax.f32 %v1605, 0.0
    %v1698 = vmax.f32 %v1607, 0.0
    %v1699 = vmax.f32 %v1609, 0.0
    %v1700 = vmax.f32 %v1611, 0.0
    %v1701 = vmax.f32 %v1615, 0.0
    %v1702 = vmax.f32 %v1617, 0.0
    %v1703 = vmax.f32 %v1619, 0.0
    %v1704 = vmax.f32 %v1621, 0.0
    %v1705 = vmax.f32 %v1625, 0.0
    %v1706 = vmax.f32 %v1627, 0.0
    %v1707 = vmax.f32 %v1629, 0.0
    %v1708 = vmax.f32 %v1631, 0.0
    %v1709 = vmax.f32 %v1635, 0.0
    %v1710 = vmax.f32 %v1637, 0.0
    %v1711 = vmax.f32 %v1639, 0.0
    %v1712 = vmax.f32 %v1641, 0.0
    %v1713 = vmax.f32 %v1645, 0.0
    %v1714 = vmax.f32 %v1647, 0.0
    %v1715 = vmax.f32 %v1649, 0.0
    %v1716 = vmax.f32 %v1651, 0.0
    %v1717 = vpack.c.bf16 %v1655, %v1653
    %v1718 = vpack.c.bf16 %v1656, %v1654
    %v1719 = vpack.c.bf16 %v1659, %v1657
    %v1720 = vpack.c.bf16 %v1660, %v1658
    %v1721 = vpack.c.bf16 %v1663, %v1661
    %v1722 = vpack.c.bf16 %v1664, %v1662
    %v1723 = vpack.c.bf16 %v1667, %v1665
    %v1724 = vpack.c.bf16 %v1668, %v1666
    %v1725 = vpack.c.bf16 %v1671, %v1669
    %v1726 = vpack.c.bf16 %v1672, %v1670
    %v1727 = vpack.c.bf16 %v1675, %v1673
    %v1728 = vpack.c.bf16 %v1676, %v1674
    %v1729 = vpack.c.bf16 %v1679, %v1677
    %v1730 = vpack.c.bf16 %v1680, %v1678
    %v1731 = vpack.c.bf16 %v1683, %v1681
    %v1732 = vpack.c.bf16 %v1684, %v1682
    %v1733 = vpack.c.bf16 %v1687, %v1685
    %v1734 = vpack.c.bf16 %v1688, %v1686
    %v1735 = vpack.c.bf16 %v1691, %v1689
    %v1736 = vpack.c.bf16 %v1692, %v1690
    %v1737 = vpack.c.bf16 %v1695, %v1693
    %v1738 = vpack.c.bf16 %v1696, %v1694
    %v1739 = vpack.c.bf16 %v1699, %v1697
    %v1740 = vpack.c.bf16 %v1700, %v1698
    %v1741 = vpack.c.bf16 %v1703, %v1701
    %v1742 = vpack.c.bf16 %v1704, %v1702
    %v1743 = vpack.c.bf16 %v1707, %v1705
    %v1744 = vpack.c.bf16 %v1708, %v1706
    %v1745 = vpack.c.bf16 %v1711, %v1709
    %v1746 = vpack.c.bf16 %v1712, %v1710
    %v1747 = vpack.c.bf16 %v1715, %v1713
    %v1748 = vpack.c.bf16 %v1716, %v1714
    %v1749 = vld [vmem:[#allocation3] sm:$0xff]
    %v1750 = vld [vmem:[#allocation3 + $0x8] sm:$0xff]
    %v1751 = vld [vmem:[#allocation3 + $0x10] sm:$0xff]
    %v1752 = vld [vmem:[#allocation3 + $0x18] sm:$0xff]
    %v1753 = vld [vmem:[#allocation3 + $0x20] sm:$0xff]
    %v1754 = vld [vmem:[#allocation3 + $0x28] sm:$0xff]
    %v1755 = vld [vmem:[#allocation3 + $0x30] sm:$0xff]
    %v1756 = vld [vmem:[#allocation3 + $0x38] sm:$0xff]
    %v1757 = vld [vmem:[#allocation3 + $0x40] sm:$0xff]
    %v1758 = vld [vmem:[#allocation3 + $0x48] sm:$0xff]
    %v1759 = vld [vmem:[#allocation3 + $0x50] sm:$0xff]
    %v1760 = vld [vmem:[#allocation3 + $0x58] sm:$0xff]
    %v1761 = vld [vmem:[#allocation3 + $0x60] sm:$0xff]
    %v1762 = vld [vmem:[#allocation3 + $0x68] sm:$0xff]
    %v1763 = vld [vmem:[#allocation3 + $0x70] sm:$0xff]
    %v1764 = vld [vmem:[#allocation3 + $0x78] sm:$0xff]
    %v1765 = vld [vmem:[#allocation3 + $0x80] sm:$0xff]
    %v1766 = vld [vmem:[#allocation3 + $0x88] sm:$0xff]
    %v1767 = vld [vmem:[#allocation3 + $0x90] sm:$0xff]
    %v1768 = vld [vmem:[#allocation3 + $0x98] sm:$0xff]
    %v1769 = vld [vmem:[#allocation3 + $0xa0] sm:$0xff]
    %v1770 = vld [vmem:[#allocation3 + $0xa8] sm:$0xff]
    %v1771 = vld [vmem:[#allocation3 + $0xb0] sm:$0xff]
    %v1772 = vld [vmem:[#allocation3 + $0xb8] sm:$0xff]
    %v1773 = vld [vmem:[#allocation3 + $0xc0] sm:$0xff]
    %v1774 = vld [vmem:[#allocation3 + $0xc8] sm:$0xff]
    %v1775 = vld [vmem:[#allocation3 + $0xd0] sm:$0xff]
    %v1776 = vld [vmem:[#allocation3 + $0xd8] sm:$0xff]
    %v1777 = vld [vmem:[#allocation3 + $0xe0] sm:$0xff]
    %v1778 = vld [vmem:[#allocation3 + $0xe8] sm:$0xff]
    %v1779 = vld [vmem:[#allocation3 + $0xf0] sm:$0xff]
    %v1780 = vld [vmem:[#allocation3 + $0xf8] sm:$0xff]
    %v1781 = vld [vmem:[%s8] sm:$0x3]
    %v1783 = vlaneseq
    %v1784 = vshrl.u32 %v1783, 7
    %v1785 = vsub.s32 0, %v1784
    %v1786 = vrot.slane %v1781, %v1785
    %v1787 = vlaneseq
    %v1788 = vshrl.u32 %v1787, 7
    %v1789 = vsub.s32 1, %v1788
    %v1790 = vrot.slane %v1781, %v1789
    %v1825 = vunpack.c.l.b16 %v1749
    %v1826 = vunpack.c.h.b16 %v1749
    %v1827 = vunpack.c.l.b16 %v1750
    %v1828 = vunpack.c.h.b16 %v1750
    %v1829 = vunpack.c.l.b16 %v1751
    %v1830 = vunpack.c.h.b16 %v1751
    %v1831 = vunpack.c.l.b16 %v1752
    %v1832 = vunpack.c.h.b16 %v1752
    %v1833 = vunpack.c.l.b16 %v1753
    %v1834 = vunpack.c.h.b16 %v1753
    %v1835 = vunpack.c.l.b16 %v1754
    %v1836 = vunpack.c.h.b16 %v1754
    %v1837 = vunpack.c.l.b16 %v1755
    %v1838 = vunpack.c.h.b16 %v1755
    %v1839 = vunpack.c.l.b16 %v1756
    %v1840 = vunpack.c.h.b16 %v1756
    %v1841 = vunpack.c.l.b16 %v1757
    %v1842 = vunpack.c.h.b16 %v1757
    %v1843 = vunpack.c.l.b16 %v1758
    %v1844 = vunpack.c.h.b16 %v1758
    %v1845 = vunpack.c.l.b16 %v1759
    %v1846 = vunpack.c.h.b16 %v1759
    %v1847 = vunpack.c.l.b16 %v1760
    %v1848 = vunpack.c.h.b16 %v1760
    %v1849 = vunpack.c.l.b16 %v1761
    %v1850 = vunpack.c.h.b16 %v1761
    %v1851 = vunpack.c.l.b16 %v1762
    %v1852 = vunpack.c.h.b16 %v1762
    %v1853 = vunpack.c.l.b16 %v1763
    %v1854 = vunpack.c.h.b16 %v1763
    %v1855 = vunpack.c.l.b16 %v1764
    %v1856 = vunpack.c.h.b16 %v1764
    %v1857 = vunpack.c.l.b16 %v1765
    %v1858 = vunpack.c.h.b16 %v1765
    %v1859 = vunpack.c.l.b16 %v1766
    %v1860 = vunpack.c.h.b16 %v1766
    %v1861 = vunpack.c.l.b16 %v1767
    %v1862 = vunpack.c.h.b16 %v1767
    %v1863 = vunpack.c.l.b16 %v1768
    %v1864 = vunpack.c.h.b16 %v1768
    %v1865 = vunpack.c.l.b16 %v1769
    %v1866 = vunpack.c.h.b16 %v1769
    %v1867 = vunpack.c.l.b16 %v1770
    %v1868 = vunpack.c.h.b16 %v1770
    %v1869 = vunpack.c.l.b16 %v1771
    %v1870 = vunpack.c.h.b16 %v1771
    %v1871 = vunpack.c.l.b16 %v1772
    %v1872 = vunpack.c.h.b16 %v1772
    %v1873 = vunpack.c.l.b16 %v1773
    %v1874 = vunpack.c.h.b16 %v1773
    %v1875 = vunpack.c.l.b16 %v1774
    %v1876 = vunpack.c.h.b16 %v1774
    %v1877 = vunpack.c.l.b16 %v1775
    %v1878 = vunpack.c.h.b16 %v1775
    %v1879 = vunpack.c.l.b16 %v1776
    %v1880 = vunpack.c.h.b16 %v1776
    %v1881 = vunpack.c.l.b16 %v1777
    %v1882 = vunpack.c.h.b16 %v1777
    %v1883 = vunpack.c.l.b16 %v1778
    %v1884 = vunpack.c.h.b16 %v1778
    %v1885 = vunpack.c.l.b16 %v1779
    %v1886 = vunpack.c.h.b16 %v1779
    %v1887 = vunpack.c.l.b16 %v1780
    %v1888 = vunpack.c.h.b16 %v1780
    %v1889 = vpack.c.b16 %v1827, %v1825
    %v1890 = vpack.c.b16 %v1828, %v1826
    %v1891 = vpack.c.b16 %v1831, %v1829
    %v1892 = vpack.c.b16 %v1832, %v1830
    %v1893 = vpack.c.b16 %v1835, %v1833
    %v1894 = vpack.c.b16 %v1836, %v1834
    %v1895 = vpack.c.b16 %v1839, %v1837
    %v1896 = vpack.c.b16 %v1840, %v1838
    %v1897 = vpack.c.b16 %v1843, %v1841
    %v1898 = vpack.c.b16 %v1844, %v1842
    %v1899 = vpack.c.b16 %v1847, %v1845
    %v1900 = vpack.c.b16 %v1848, %v1846
    %v1901 = vpack.c.b16 %v1851, %v1849
    %v1902 = vpack.c.b16 %v1852, %v1850
    %v1903 = vpack.c.b16 %v1855, %v1853
    %v1904 = vpack.c.b16 %v1856, %v1854
    %v1905 = vpack.c.b16 %v1859, %v1857
    %v1906 = vpack.c.b16 %v1860, %v1858
    %v1907 = vpack.c.b16 %v1863, %v1861
    %v1908 = vpack.c.b16 %v1864, %v1862
    %v1909 = vpack.c.b16 %v1867, %v1865
    %v1910 = vpack.c.b16 %v1868, %v1866
    %v1911 = vpack.c.b16 %v1871, %v1869
    %v1912 = vpack.c.b16 %v1872, %v1870
    %v1913 = vpack.c.b16 %v1875, %v1873
    %v1914 = vpack.c.b16 %v1876, %v1874
    %v1915 = vpack.c.b16 %v1879, %v1877
    %v1916 = vpack.c.b16 %v1880, %v1878
    %v1917 = vpack.c.b16 %v1883, %v1881
    %v1918 = vpack.c.b16 %v1884, %v1882
    %v1919 = vpack.c.b16 %v1887, %v1885
    %v1920 = vpack.c.b16 %v1888, %v1886
    %1953 = vmatprep.subr.bf16.mxu0 %v1890
    %1954 = vmatpush1.bf16.msra.mxu0 %v1889
    %1955 = vmatprep.subr.bf16.mxu0 %v1892
    %1956 = vmatpush1.bf16.msra.mxu0 %v1891
    %1957 = vmatprep.subr.bf16.mxu0 %v1894
    %1958 = vmatpush1.bf16.msra.mxu0 %v1893
    %1959 = vmatprep.subr.bf16.mxu0 %v1896
    %1960 = vmatpush1.bf16.msra.mxu0 %v1895
    %1961 = vmatprep.subr.bf16.mxu0 %v1898
    %1962 = vmatpush1.bf16.msra.mxu0 %v1897
    %1963 = vmatprep.subr.bf16.mxu0 %v1900
    %1964 = vmatpush1.bf16.msra.mxu0 %v1899
    %1965 = vmatprep.subr.bf16.mxu0 %v1902
    %1966 = vmatpush1.bf16.msra.mxu0 %v1901
    %1967 = vmatprep.subr.bf16.mxu0 %v1904
    %1968 = vmatpush1.bf16.msra.mxu0 %v1903
    %1969 = vmatprep.subr.bf16.mxu0 %v1906
    %1970 = vmatpush1.bf16.msra.mxu0 %v1905
    %1971 = vmatprep.subr.bf16.mxu0 %v1908
    %1972 = vmatpush1.bf16.msra.mxu0 %v1907
    %1973 = vmatprep.subr.bf16.mxu0 %v1910
    %1974 = vmatpush1.bf16.msra.mxu0 %v1909
    %1975 = vmatprep.subr.bf16.mxu0 %v1912
    %1976 = vmatpush1.bf16.msra.mxu0 %v1911
    %1977 = vmatprep.subr.bf16.mxu0 %v1914
    %1978 = vmatpush1.bf16.msra.mxu0 %v1913
    %1979 = vmatprep.subr.bf16.mxu0 %v1916
    %1980 = vmatpush1.bf16.msra.mxu0 %v1915
    %1981 = vmatprep.subr.bf16.mxu0 %v1918
    %1982 = vmatpush1.bf16.msra.mxu0 %v1917
    %1983 = vmatprep.subr.bf16.mxu0 %v1920
    %1984 = vmatpush1.bf16.msra.mxu0 %v1919
    %1985 = vmatprep.mubr.bf16.mxu0 %v1718
    %1986 = vmatmul.mubr.bf16.gmra.mrb[0].mxu0 %v1717
    %v1987 = vpop.f32.mrb[0].mxu0
    %v1988 = vadd.f32 %v1786, %v1987
    %v1989 = vpop.f32.mrb[0].mxu0
    %v1990 = vadd.f32 %v1790, %v1989
    %v1991 = vpop.f32.mrb[0].mxu0
    %v1992 = vadd.f32 %v1786, %v1991
    %v1993 = vpop.f32.mrb[0].mxu0
    %v1994 = vadd.f32 %v1790, %v1993
    %1995 = vmatprep.mubr.bf16.mxu0 %v1720
    %1996 = vmatmul.mubr.bf16.gmra.mrb[0].mxu0 %v1719
    %v1997 = vpop.f32.mrb[0].mxu0
    %v1998 = vadd.f32 %v1786, %v1997
    %v1999 = vpop.f32.mrb[0].mxu0
    %v2000 = vadd.f32 %v1790, %v1999
    %v2001 = vpop.f32.mrb[0].mxu0
    %v2002 = vadd.f32 %v1786, %v2001
    %v2003 = vpop.f32.mrb[0].mxu0
    %v2004 = vadd.f32 %v1790, %v2003
    %2005 = vmatprep.mubr.bf16.mxu0 %v1722
    %2006 = vmatmul.mubr.bf16.gmra.mrb[0].mxu0 %v1721
    %v2007 = vpop.f32.mrb[0].mxu0
    %v2008 = vadd.f32 %v1786, %v2007
    %v2009 = vpop.f32.mrb[0].mxu0
    %v2010 = vadd.f32 %v1790, %v2009
    %v2011 = vpop.f32.mrb[0].mxu0
    %v2012 = vadd.f32 %v1786, %v2011
    %v2013 = vpop.f32.mrb[0].mxu0
    %v2014 = vadd.f32 %v1790, %v2013
    %2015 = vmatprep.mubr.bf16.mxu0 %v1724
    %2016 = vmatmul.mubr.bf16.gmra.mrb[0].mxu0 %v1723
    %v2017 = vpop.f32.mrb[0].mxu0
    %v2018 = vadd.f32 %v1786, %v2017
    %v2019 = vpop.f32.mrb[0].mxu0
    %v2020 = vadd.f32 %v1790, %v2019
    %v2021 = vpop.f32.mrb[0].mxu0
    %v2022 = vadd.f32 %v1786, %v2021
    %v2023 = vpop.f32.mrb[0].mxu0
    %v2024 = vadd.f32 %v1790, %v2023
    %2025 = vmatprep.mubr.bf16.mxu0 %v1726
    %2026 = vmatmul.mubr.bf16.gmra.mrb[0].mxu0 %v1725
    %v2027 = vpop.f32.mrb[0].mxu0
    %v2028 = vadd.f32 %v1786, %v2027
    %v2029 = vpop.f32.mrb[0].mxu0
    %v2030 = vadd.f32 %v1790, %v2029
    %v2031 = vpop.f32.mrb[0].mxu0
    %v2032 = vadd.f32 %v1786, %v2031
    %v2033 = vpop.f32.mrb[0].mxu0
    %v2034 = vadd.f32 %v1790, %v2033
    %2035 = vmatprep.mubr.bf16.mxu0 %v1728
    %2036 = vmatmul.mubr.bf16.gmra.mrb[0].mxu0 %v1727
    %v2037 = vpop.f32.mrb[0].mxu0
    %v2038 = vadd.f32 %v1786, %v2037
    %v2039 = vpop.f32.mrb[0].mxu0
    %v2040 = vadd.f32 %v1790, %v2039
    %v2041 = vpop.f32.mrb[0].mxu0
    %v2042 = vadd.f32 %v1786, %v2041
    %v2043 = vpop.f32.mrb[0].mxu0
    %v2044 = vadd.f32 %v1790, %v2043
    %2045 = vmatprep.mubr.bf16.mxu0 %v1730
    %2046 = vmatmul.mubr.bf16.gmra.mrb[0].mxu0 %v1729
    %v2047 = vpop.f32.mrb[0].mxu0
    %v2048 = vadd.f32 %v1786, %v2047
    %v2049 = vpop.f32.mrb[0].mxu0
    %v2050 = vadd.f32 %v1790, %v2049
    %v2051 = vpop.f32.mrb[0].mxu0
    %v2052 = vadd.f32 %v1786, %v2051
    %v2053 = vpop.f32.mrb[0].mxu0
    %v2054 = vadd.f32 %v1790, %v2053
    %2055 = vmatprep.mubr.bf16.mxu0 %v1732
    %2056 = vmatmul.mubr.bf16.gmra.mrb[0].mxu0 %v1731
    %v2057 = vpop.f32.mrb[0].mxu0
    %v2058 = vadd.f32 %v1786, %v2057
    %v2059 = vpop.f32.mrb[0].mxu0
    %v2060 = vadd.f32 %v1790, %v2059
    %v2061 = vpop.f32.mrb[0].mxu0
    %v2062 = vadd.f32 %v1786, %v2061
    %v2063 = vpop.f32.mrb[0].mxu0
    %v2064 = vadd.f32 %v1790, %v2063
    %2065 = vmatprep.mubr.bf16.mxu0 %v1734
    %2066 = vmatmul.mubr.bf16.gmra.mrb[0].mxu0 %v1733
    %v2067 = vpop.f32.mrb[0].mxu0
    %v2068 = vadd.f32 %v1786, %v2067
    %v2069 = vpop.f32.mrb[0].mxu0
    %v2070 = vadd.f32 %v1790, %v2069
    %v2071 = vpop.f32.mrb[0].mxu0
    %v2072 = vadd.f32 %v1786, %v2071
    %v2073 = vpop.f32.mrb[0].mxu0
    %v2074 = vadd.f32 %v1790, %v2073
    %2075 = vmatprep.mubr.bf16.mxu0 %v1736
    %2076 = vmatmul.mubr.bf16.gmra.mrb[0].mxu0 %v1735
    %v2077 = vpop.f32.mrb[0].mxu0
    %v2078 = vadd.f32 %v1786, %v2077
    %v2079 = vpop.f32.mrb[0].mxu0
    %v2080 = vadd.f32 %v1790, %v2079
    %v2081 = vpop.f32.mrb[0].mxu0
    %v2082 = vadd.f32 %v1786, %v2081
    %v2083 = vpop.f32.mrb[0].mxu0
    %v2084 = vadd.f32 %v1790, %v2083
    %2085 = vmatprep.mubr.bf16.mxu0 %v1738
    %2086 = vmatmul.mubr.bf16.gmra.mrb[0].mxu0 %v1737
    %v2087 = vpop.f32.mrb[0].mxu0
    %v2088 = vadd.f32 %v1786, %v2087
    %v2089 = vpop.f32.mrb[0].mxu0
    %v2090 = vadd.f32 %v1790, %v2089
    %v2091 = vpop.f32.mrb[0].mxu0
    %v2092 = vadd.f32 %v1786, %v2091
    %v2093 = vpop.f32.mrb[0].mxu0
    %v2094 = vadd.f32 %v1790, %v2093
    %2095 = vmatprep.mubr.bf16.mxu0 %v1740
    %2096 = vmatmul.mubr.bf16.gmra.mrb[0].mxu0 %v1739
    %v2097 = vpop.f32.mrb[0].mxu0
    %v2098 = vadd.f32 %v1786, %v2097
    %v2099 = vpop.f32.mrb[0].mxu0
    %v2100 = vadd.f32 %v1790, %v2099
    %v2101 = vpop.f32.mrb[0].mxu0
    %v2102 = vadd.f32 %v1786, %v2101
    %v2103 = vpop.f32.mrb[0].mxu0
    %v2104 = vadd.f32 %v1790, %v2103
    %2105 = vmatprep.mubr.bf16.mxu0 %v1742
    %2106 = vmatmul.mubr.bf16.gmra.mrb[0].mxu0 %v1741
    %v2107 = vpop.f32.mrb[0].mxu0
    %v2108 = vadd.f32 %v1786, %v2107
    %v2109 = vpop.f32.mrb[0].mxu0
    %v2110 = vadd.f32 %v1790, %v2109
    %v2111 = vpop.f32.mrb[0].mxu0
    %v2112 = vadd.f32 %v1786, %v2111
    %v2113 = vpop.f32.mrb[0].mxu0
    %v2114 = vadd.f32 %v1790, %v2113
    %2115 = vmatprep.mubr.bf16.mxu0 %v1744
    %2116 = vmatmul.mubr.bf16.gmra.mrb[0].mxu0 %v1743
    %v2117 = vpop.f32.mrb[0].mxu0
    %v2118 = vadd.f32 %v1786, %v2117
    %v2119 = vpop.f32.mrb[0].mxu0
    %v2120 = vadd.f32 %v1790, %v2119
    %v2121 = vpop.f32.mrb[0].mxu0
    %v2122 = vadd.f32 %v1786, %v2121
    %v2123 = vpop.f32.mrb[0].mxu0
    %v2124 = vadd.f32 %v1790, %v2123
    %2125 = vmatprep.mubr.bf16.mxu0 %v1746
    %2126 = vmatmul.mubr.bf16.gmra.mrb[0].mxu0 %v1745
    %v2127 = vpop.f32.mrb[0].mxu0
    %v2128 = vadd.f32 %v1786, %v2127
    %v2129 = vpop.f32.mrb[0].mxu0
    %v2130 = vadd.f32 %v1790, %v2129
    %v2131 = vpop.f32.mrb[0].mxu0
    %v2132 = vadd.f32 %v1786, %v2131
    %v2133 = vpop.f32.mrb[0].mxu0
    %v2134 = vadd.f32 %v1790, %v2133
    %2135 = vmatprep.mubr.bf16.mxu0 %v1748
    %2136 = vmatmul.mubr.bf16.gmra.mrb[0].mxu0 %v1747
    %v2137 = vpop.f32.mrb[0].mxu0
    %v2138 = vadd.f32 %v1786, %v2137
    %v2139 = vpop.f32.mrb[0].mxu0
    %v2140 = vadd.f32 %v1790, %v2139
    %v2141 = vpop.f32.mrb[0].mxu0
    %v2142 = vadd.f32 %v1786, %v2141
    %v2143 = vpop.f32.mrb[0].mxu0
    %v2144 = vadd.f32 %v1790, %v2143
    %2145 = vdwg.mxu0
    %v2146 = vmax.f32 %v1988, 0.0
    %v2147 = vmax.f32 %v1990, 0.0
    %v2148 = vmax.f32 %v1992, 0.0
    %v2149 = vmax.f32 %v1994, 0.0
    %v2150 = vmax.f32 %v1998, 0.0
    %v2151 = vmax.f32 %v2000, 0.0
    %v2152 = vmax.f32 %v2002, 0.0
    %v2153 = vmax.f32 %v2004, 0.0
    %v2154 = vmax.f32 %v2008, 0.0
    %v2155 = vmax.f32 %v2010, 0.0
    %v2156 = vmax.f32 %v2012, 0.0
    %v2157 = vmax.f32 %v2014, 0.0
    %v2158 = vmax.f32 %v2018, 0.0
    %v2159 = vmax.f32 %v2020, 0.0
    %v2160 = vmax.f32 %v2022, 0.0
    %v2161 = vmax.f32 %v2024, 0.0
    %v2162 = vmax.f32 %v2028, 0.0
    %v2163 = vmax.f32 %v2030, 0.0
    %v2164 = vmax.f32 %v2032, 0.0
    %v2165 = vmax.f32 %v2034, 0.0
    %v2166 = vmax.f32 %v2038, 0.0
    %v2167 = vmax.f32 %v2040, 0.0
    %v2168 = vmax.f32 %v2042, 0.0
    %v2169 = vmax.f32 %v2044, 0.0
    %v2170 = vmax.f32 %v2048, 0.0
    %v2171 = vmax.f32 %v2050, 0.0
    %v2172 = vmax.f32 %v2052, 0.0
    %v2173 = vmax.f32 %v2054, 0.0
    %v2174 = vmax.f32 %v2058, 0.0
    %v2175 = vmax.f32 %v2060, 0.0
    %v2176 = vmax.f32 %v2062, 0.0
    %v2177 = vmax.f32 %v2064, 0.0
    %v2178 = vmax.f32 %v2068, 0.0
    %v2179 = vmax.f32 %v2070, 0.0
    %v2180 = vmax.f32 %v2072, 0.0
    %v2181 = vmax.f32 %v2074, 0.0
    %v2182 = vmax.f32 %v2078, 0.0
    %v2183 = vmax.f32 %v2080, 0.0
    %v2184 = vmax.f32 %v2082, 0.0
    %v2185 = vmax.f32 %v2084, 0.0
    %v2186 = vmax.f32 %v2088, 0.0
    %v2187 = vmax.f32 %v2090, 0.0
    %v2188 = vmax.f32 %v2092, 0.0
    %v2189 = vmax.f32 %v2094, 0.0
    %v2190 = vmax.f32 %v2098, 0.0
    %v2191 = vmax.f32 %v2100, 0.0
    %v2192 = vmax.f32 %v2102, 0.0
    %v2193 = vmax.f32 %v2104, 0.0
    %v2194 = vmax.f32 %v2108, 0.0
    %v2195 = vmax.f32 %v2110, 0.0
    %v2196 = vmax.f32 %v2112, 0.0
    %v2197 = vmax.f32 %v2114, 0.0
    %v2198 = vmax.f32 %v2118, 0.0
    %v2199 = vmax.f32 %v2120, 0.0
    %v2200 = vmax.f32 %v2122, 0.0
    %v2201 = vmax.f32 %v2124, 0.0
    %v2202 = vmax.f32 %v2128, 0.0
    %v2203 = vmax.f32 %v2130, 0.0
    %v2204 = vmax.f32 %v2132, 0.0
    %v2205 = vmax.f32 %v2134, 0.0
    %v2206 = vmax.f32 %v2138, 0.0
    %v2207 = vmax.f32 %v2140, 0.0
    %v2208 = vmax.f32 %v2142, 0.0
    %v2209 = vmax.f32 %v2144, 0.0
    %v2210 = vld [vmem:[%s9] sm:$0x3]
    %v2212 = vlaneseq
    %v2213 = vshrl.u32 %v2212, 7
    %v2214 = vsub.s32 0, %v2213
    %v2215 = vrot.slane %v2210, %v2214
    %v2216 = vlaneseq
    %v2217 = vshrl.u32 %v2216, 7
    %v2218 = vsub.s32 1, %v2217
    %v2219 = vrot.slane %v2210, %v2218
    %v2222 = vmul.f32 %v2146, %v2215
    %v2223 = vmul.f32 %v2147, %v2219
    %v2224 = vmul.f32 %v2148, %v2215
    %v2225 = vmul.f32 %v2149, %v2219
    %v2226 = vmul.f32 %v2150, %v2215
    %v2227 = vmul.f32 %v2151, %v2219
    %v2228 = vmul.f32 %v2152, %v2215
    %v2229 = vmul.f32 %v2153, %v2219
    %v2230 = vmul.f32 %v2154, %v2215
    %v2231 = vmul.f32 %v2155, %v2219
    %v2232 = vmul.f32 %v2156, %v2215
    %v2233 = vmul.f32 %v2157, %v2219
    %v2234 = vmul.f32 %v2158, %v2215
    %v2235 = vmul.f32 %v2159, %v2219
    %v2236 = vmul.f32 %v2160, %v2215
    %v2237 = vmul.f32 %v2161, %v2219
    %v2238 = vmul.f32 %v2162, %v2215
    %v2239 = vmul.f32 %v2163, %v2219
    %v2240 = vmul.f32 %v2164, %v2215
    %v2241 = vmul.f32 %v2165, %v2219
    %v2242 = vmul.f32 %v2166, %v2215
    %v2243 = vmul.f32 %v2167, %v2219
    %v2244 = vmul.f32 %v2168, %v2215
    %v2245 = vmul.f32 %v2169, %v2219
    %v2246 = vmul.f32 %v2170, %v2215
    %v2247 = vmul.f32 %v2171, %v2219
    %v2248 = vmul.f32 %v2172, %v2215
    %v2249 = vmul.f32 %v2173, %v2219
    %v2250 = vmul.f32 %v2174, %v2215
    %v2251 = vmul.f32 %v2175, %v2219
    %v2252 = vmul.f32 %v2176, %v2215
    %v2253 = vmul.f32 %v2177, %v2219
    %v2254 = vmul.f32 %v2178, %v2215
    %v2255 = vmul.f32 %v2179, %v2219
    %v2256 = vmul.f32 %v2180, %v2215
    %v2257 = vmul.f32 %v2181, %v2219
    %v2258 = vmul.f32 %v2182, %v2215
    %v2259 = vmul.f32 %v2183, %v2219
    %v2260 = vmul.f32 %v2184, %v2215
    %v2261 = vmul.f32 %v2185, %v2219
    %v2262 = vmul.f32 %v2186, %v2215
    %v2263 = vmul.f32 %v2187, %v2219
    %v2264 = vmul.f32 %v2188, %v2215
    %v2265 = vmul.f32 %v2189, %v2219
    %v2266 = vmul.f32 %v2190, %v2215
    %v2267 = vmul.f32 %v2191, %v2219
    %v2268 = vmul.f32 %v2192, %v2215
    %v2269 = vmul.f32 %v2193, %v2219
    %v2270 = vmul.f32 %v2194, %v2215
    %v2271 = vmul.f32 %v2195, %v2219
    %v2272 = vmul.f32 %v2196, %v2215
    %v2273 = vmul.f32 %v2197, %v2219
    %v2274 = vmul.f32 %v2198, %v2215
    %v2275 = vmul.f32 %v2199, %v2219
    %v2276 = vmul.f32 %v2200, %v2215
    %v2277 = vmul.f32 %v2201, %v2219
    %v2278 = vmul.f32 %v2202, %v2215
    %v2279 = vmul.f32 %v2203, %v2219
    %v2280 = vmul.f32 %v2204, %v2215
    %v2281 = vmul.f32 %v2205, %v2219
    %v2282 = vmul.f32 %v2206, %v2215
    %v2283 = vmul.f32 %v2207, %v2219
    %v2284 = vmul.f32 %v2208, %v2215
    %v2285 = vmul.f32 %v2209, %v2219
    %v2286 = vadd.f32 %v2222, %v2223
    %2287 = vadd.xlane.f32.xlu0 %v2286
    %v2288 = vpop.xlane.xlu0 %2287
    %v2289 = vadd.f32 %v2224, %v2225
    %2290 = vadd.xlane.f32.xlu0 %v2289
    %v2291 = vpop.xlane.xlu0 %2290
    %v2292 = vadd.f32 %v2226, %v2227
    %2293 = vadd.xlane.f32.xlu0 %v2292
    %v2294 = vpop.xlane.xlu0 %2293
    %v2295 = vadd.f32 %v2228, %v2229
    %2296 = vadd.xlane.f32.xlu0 %v2295
    %v2297 = vpop.xlane.xlu0 %2296
    %v2298 = vadd.f32 %v2230, %v2231
    %2299 = vadd.xlane.f32.xlu0 %v2298
    %v2300 = vpop.xlane.xlu0 %2299
    %v2301 = vadd.f32 %v2232, %v2233
    %2302 = vadd.xlane.f32.xlu0 %v2301
    %v2303 = vpop.xlane.xlu0 %2302
    %v2304 = vadd.f32 %v2234, %v2235
    %2305 = vadd.xlane.f32.xlu0 %v2304
    %v2306 = vpop.xlane.xlu0 %2305
    %v2307 = vadd.f32 %v2236, %v2237
    %2308 = vadd.xlane.f32.xlu0 %v2307
    %v2309 = vpop.xlane.xlu0 %2308
    %v2310 = vadd.f32 %v2238, %v2239
    %2311 = vadd.xlane.f32.xlu0 %v2310
    %v2312 = vpop.xlane.xlu0 %2311
    %v2313 = vadd.f32 %v2240, %v2241
    %2314 = vadd.xlane.f32.xlu0 %v2313
    %v2315 = vpop.xlane.xlu0 %2314
    %v2316 = vadd.f32 %v2242, %v2243
    %2317 = vadd.xlane.f32.xlu0 %v2316
    %v2318 = vpop.xlane.xlu0 %2317
    %v2319 = vadd.f32 %v2244, %v2245
    %2320 = vadd.xlane.f32.xlu0 %v2319
    %v2321 = vpop.xlane.xlu0 %2320
    %v2322 = vadd.f32 %v2246, %v2247
    %2323 = vadd.xlane.f32.xlu0 %v2322
    %v2324 = vpop.xlane.xlu0 %2323
    %v2325 = vadd.f32 %v2248, %v2249
    %2326 = vadd.xlane.f32.xlu0 %v2325
    %v2327 = vpop.xlane.xlu0 %2326
    %v2328 = vadd.f32 %v2250, %v2251
    %2329 = vadd.xlane.f32.xlu0 %v2328
    %v2330 = vpop.xlane.xlu0 %2329
    %v2331 = vadd.f32 %v2252, %v2253
    %2332 = vadd.xlane.f32.xlu0 %v2331
    %v2333 = vpop.xlane.xlu0 %2332
    %v2334 = vadd.f32 %v2254, %v2255
    %2335 = vadd.xlane.f32.xlu0 %v2334
    %v2336 = vpop.xlane.xlu0 %2335
    %v2337 = vadd.f32 %v2256, %v2257
    %2338 = vadd.xlane.f32.xlu0 %v2337
    %v2339 = vpop.xlane.xlu0 %2338
    %v2340 = vadd.f32 %v2258, %v2259
    %2341 = vadd.xlane.f32.xlu0 %v2340
    %v2342 = vpop.xlane.xlu0 %2341
    %v2343 = vadd.f32 %v2260, %v2261
    %2344 = vadd.xlane.f32.xlu0 %v2343
    %v2345 = vpop.xlane.xlu0 %2344
    %v2346 = vadd.f32 %v2262, %v2263
    %2347 = vadd.xlane.f32.xlu0 %v2346
    %v2348 = vpop.xlane.xlu0 %2347
    %v2349 = vadd.f32 %v2264, %v2265
    %2350 = vadd.xlane.f32.xlu0 %v2349
    %v2351 = vpop.xlane.xlu0 %2350
    %v2352 = vadd.f32 %v2266, %v2267
    %2353 = vadd.xlane.f32.xlu0 %v2352
    %v2354 = vpop.xlane.xlu0 %2353
    %v2355 = vadd.f32 %v2268, %v2269
    %2356 = vadd.xlane.f32.xlu0 %v2355
    %v2357 = vpop.xlane.xlu0 %2356
    %v2358 = vadd.f32 %v2270, %v2271
    %2359 = vadd.xlane.f32.xlu0 %v2358
    %v2360 = vpop.xlane.xlu0 %2359
    %v2361 = vadd.f32 %v2272, %v2273
    %2362 = vadd.xlane.f32.xlu0 %v2361
    %v2363 = vpop.xlane.xlu0 %2362
    %v2364 = vadd.f32 %v2274, %v2275
    %2365 = vadd.xlane.f32.xlu0 %v2364
    %v2366 = vpop.xlane.xlu0 %2365
    %v2367 = vadd.f32 %v2276, %v2277
    %2368 = vadd.xlane.f32.xlu0 %v2367
    %v2369 = vpop.xlane.xlu0 %2368
    %v2370 = vadd.f32 %v2278, %v2279
    %2371 = vadd.xlane.f32.xlu0 %v2370
    %v2372 = vpop.xlane.xlu0 %2371
    %v2373 = vadd.f32 %v2280, %v2281
    %2374 = vadd.xlane.f32.xlu0 %v2373
    %v2375 = vpop.xlane.xlu0 %2374
    %v2376 = vadd.f32 %v2282, %v2283
    %2377 = vadd.xlane.f32.xlu0 %v2376
    %v2378 = vpop.xlane.xlu0 %2377
    %v2379 = vadd.f32 %v2284, %v2285
    %2380 = vadd.xlane.f32.xlu0 %v2379
    %v2381 = vpop.xlane.xlu0 %2380
    %v2382 = vld [vmem:[#allocation2] sm:$0x1]
    %v2384 = vlaneseq
    %v2385 = vshrl.u32 %v2384, 7
    %v2386 = vsub.s32 0, %v2385
    %v2387 = vrot.slane %v2382, %v2386
    %v2389 = vadd.f32 %v2288, %v2387
    %v2390 = vadd.f32 %v2291, %v2387
    %v2391 = vadd.f32 %v2294, %v2387
    %v2392 = vadd.f32 %v2297, %v2387
    %v2393 = vadd.f32 %v2300, %v2387
    %v2394 = vadd.f32 %v2303, %v2387
    %v2395 = vadd.f32 %v2306, %v2387
    %v2396 = vadd.f32 %v2309, %v2387
    %v2397 = vadd.f32 %v2312, %v2387
    %v2398 = vadd.f32 %v2315, %v2387
    %v2399 = vadd.f32 %v2318, %v2387
    %v2400 = vadd.f32 %v2321, %v2387
    %v2401 = vadd.f32 %v2324, %v2387
    %v2402 = vadd.f32 %v2327, %v2387
    %v2403 = vadd.f32 %v2330, %v2387
    %v2404 = vadd.f32 %v2333, %v2387
    %v2405 = vadd.f32 %v2336, %v2387
    %v2406 = vadd.f32 %v2339, %v2387
    %v2407 = vadd.f32 %v2342, %v2387
    %v2408 = vadd.f32 %v2345, %v2387
    %v2409 = vadd.f32 %v2348, %v2387
    %v2410 = vadd.f32 %v2351, %v2387
    %v2411 = vadd.f32 %v2354, %v2387
    %v2412 = vadd.f32 %v2357, %v2387
    %v2413 = vadd.f32 %v2360, %v2387
    %v2414 = vadd.f32 %v2363, %v2387
    %v2415 = vadd.f32 %v2366, %v2387
    %v2416 = vadd.f32 %v2369, %v2387
    %v2417 = vadd.f32 %v2372, %v2387
    %v2418 = vadd.f32 %v2375, %v2387
    %v2419 = vadd.f32 %v2378, %v2387
    %v2420 = vadd.f32 %v2381, %v2387
    %vm2421 = vcmask 7168
    %2422 = vst.msk [vmem:[%s11] sm:$0xff] %vm2421, %v2389
    %2423 = vst.msk [vmem:[%s11 + $0x8] sm:$0xff] %vm2421, %v2390
    %2424 = vst.msk [vmem:[%s11 + $0x10] sm:$0xff] %vm2421, %v2391
    %2425 = vst.msk [vmem:[%s11 + $0x18] sm:$0xff] %vm2421, %v2392
    %2426 = vst.msk [vmem:[%s11 + $0x20] sm:$0xff] %vm2421, %v2393
    %2427 = vst.msk [vmem:[%s11 + $0x28] sm:$0xff] %vm2421, %v2394
    %2428 = vst.msk [vmem:[%s11 + $0x30] sm:$0xff] %vm2421, %v2395
    %2429 = vst.msk [vmem:[%s11 + $0x38] sm:$0xff] %vm2421, %v2396
    %2430 = vst.msk [vmem:[%s11 + $0x40] sm:$0xff] %vm2421, %v2397
    %2431 = vst.msk [vmem:[%s11 + $0x48] sm:$0xff] %vm2421, %v2398
    %2432 = vst.msk [vmem:[%s11 + $0x50] sm:$0xff] %vm2421, %v2399
    %2433 = vst.msk [vmem:[%s11 + $0x58] sm:$0xff] %vm2421, %v2400
    %2434 = vst.msk [vmem:[%s11 + $0x60] sm:$0xff] %vm2421, %v2401
    %2435 = vst.msk [vmem:[%s11 + $0x68] sm:$0xff] %vm2421, %v2402
    %2436 = vst.msk [vmem:[%s11 + $0x70] sm:$0xff] %vm2421, %v2403
    %2437 = vst.msk [vmem:[%s11 + $0x78] sm:$0xff] %vm2421, %v2404
    %2438 = vst.msk [vmem:[%s11 + $0x80] sm:$0xff] %vm2421, %v2405
    %2439 = vst.msk [vmem:[%s11 + $0x88] sm:$0xff] %vm2421, %v2406
    %2440 = vst.msk [vmem:[%s11 + $0x90] sm:$0xff] %vm2421, %v2407
    %2441 = vst.msk [vmem:[%s11 + $0x98] sm:$0xff] %vm2421, %v2408
    %2442 = vst.msk [vmem:[%s11 + $0xa0] sm:$0xff] %vm2421, %v2409
    %2443 = vst.msk [vmem:[%s11 + $0xa8] sm:$0xff] %vm2421, %v2410
    %2444 = vst.msk [vmem:[%s11 + $0xb0] sm:$0xff] %vm2421, %v2411
    %2445 = vst.msk [vmem:[%s11 + $0xb8] sm:$0xff] %vm2421, %v2412
    %2446 = vst.msk [vmem:[%s11 + $0xc0] sm:$0xff] %vm2421, %v2413
    %2447 = vst.msk [vmem:[%s11 + $0xc8] sm:$0xff] %vm2421, %v2414
    %2448 = vst.msk [vmem:[%s11 + $0xd0] sm:$0xff] %vm2421, %v2415
    %2449 = vst.msk [vmem:[%s11 + $0xd8] sm:$0xff] %vm2421, %v2416
    %2450 = vst.msk [vmem:[%s11 + $0xe0] sm:$0xff] %vm2421, %v2417
    %2451 = vst.msk [vmem:[%s11 + $0xe8] sm:$0xff] %vm2421, %v2418
    %2452 = vst.msk [vmem:[%s11 + $0xf0] sm:$0xff] %vm2421, %v2419
    %2453 = vst.msk [vmem:[%s11 + $0xf8] sm:$0xff] %vm2421, %v2420
    %v2454 = vld [vmem:[%s0 + $0x100] sm:$0xff]
    %v2455 = vld [vmem:[%s0 + $0x108] sm:$0xff]
    %v2456 = vld [vmem:[%s0 + $0x110] sm:$0xff]
    %v2457 = vld [vmem:[%s0 + $0x118] sm:$0xff]
    %v2458 = vld [vmem:[%s0 + $0x120] sm:$0xff]
    %v2459 = vld [vmem:[%s0 + $0x128] sm:$0xff]
    %v2460 = vld [vmem:[%s0 + $0x130] sm:$0xff]
    %v2461 = vld [vmem:[%s0 + $0x138] sm:$0xff]
    %v2462 = vld [vmem:[%s0 + $0x140] sm:$0xff]
    %v2463 = vld [vmem:[%s0 + $0x148] sm:$0xff]
    %v2464 = vld [vmem:[%s0 + $0x150] sm:$0xff]
    %v2465 = vld [vmem:[%s0 + $0x158] sm:$0xff]
    %v2466 = vld [vmem:[%s0 + $0x160] sm:$0xff]
    %v2467 = vld [vmem:[%s0 + $0x168] sm:$0xff]
    %v2468 = vld [vmem:[%s0 + $0x170] sm:$0xff]
    %v2469 = vld [vmem:[%s0 + $0x178] sm:$0xff]
    %v2470 = vld [vmem:[%s0 + $0x180] sm:$0xff]
    %v2471 = vld [vmem:[%s0 + $0x188] sm:$0xff]
    %v2472 = vld [vmem:[%s0 + $0x190] sm:$0xff]
    %v2473 = vld [vmem:[%s0 + $0x198] sm:$0xff]
    %v2474 = vld [vmem:[%s0 + $0x1a0] sm:$0xff]
    %v2475 = vld [vmem:[%s0 + $0x1a8] sm:$0xff]
    %v2476 = vld [vmem:[%s0 + $0x1b0] sm:$0xff]
    %v2477 = vld [vmem:[%s0 + $0x1b8] sm:$0xff]
    %v2478 = vld [vmem:[%s0 + $0x1c0] sm:$0xff]
    %v2479 = vld [vmem:[%s0 + $0x1c8] sm:$0xff]
    %v2480 = vld [vmem:[%s0 + $0x1d0] sm:$0xff]
    %v2481 = vld [vmem:[%s0 + $0x1d8] sm:$0xff]
    %v2482 = vld [vmem:[%s0 + $0x1e0] sm:$0xff]
    %v2483 = vld [vmem:[%s0 + $0x1e8] sm:$0xff]
    %v2484 = vld [vmem:[%s0 + $0x1f0] sm:$0xff]
    %v2485 = vld [vmem:[%s0 + $0x1f8] sm:$0xff]
    %v2486 = vld [vmem:[%s1] ss:$2 sm:$0x3]
    %2488 = vset.pattern.permute.xlu0 0
    %2489 = vperm.xlu0 %2488, %v2454
    %v2490 = vpop.permute.xlu0 %2489
    %2493 = vset.pattern.permute.xlu0 0
    %2494 = vperm.xlu0 %2493, %v2455
    %v2495 = vpop.permute.xlu0 %2494
    %2498 = vset.pattern.permute.xlu0 0
    %2499 = vperm.xlu0 %2498, %v2456
    %v2500 = vpop.permute.xlu0 %2499
    %2503 = vset.pattern.permute.xlu0 0
    %2504 = vperm.xlu0 %2503, %v2457
    %v2505 = vpop.permute.xlu0 %2504
    %2508 = vset.pattern.permute.xlu0 0
    %2509 = vperm.xlu0 %2508, %v2458
    %v2510 = vpop.permute.xlu0 %2509
    %2513 = vset.pattern.permute.xlu0 0
    %2514 = vperm.xlu0 %2513, %v2459
    %v2515 = vpop.permute.xlu0 %2514
    %2518 = vset.pattern.permute.xlu0 0
    %2519 = vperm.xlu0 %2518, %v2460
    %v2520 = vpop.permute.xlu0 %2519
    %2523 = vset.pattern.permute.xlu0 0
    %2524 = vperm.xlu0 %2523, %v2461
    %v2525 = vpop.permute.xlu0 %2524
    %2528 = vset.pattern.permute.xlu0 0
    %2529 = vperm.xlu0 %2528, %v2462
    %v2530 = vpop.permute.xlu0 %2529
    %2533 = vset.pattern.permute.xlu0 0
    %2534 = vperm.xlu0 %2533, %v2463
    %v2535 = vpop.permute.xlu0 %2534
    %2538 = vset.pattern.permute.xlu0 0
    %2539 = vperm.xlu0 %2538, %v2464
    %v2540 = vpop.permute.xlu0 %2539
    %2543 = vset.pattern.permute.xlu0 0
    %2544 = vperm.xlu0 %2543, %v2465
    %v2545 = vpop.permute.xlu0 %2544
    %2548 = vset.pattern.permute.xlu0 0
    %2549 = vperm.xlu0 %2548, %v2466
    %v2550 = vpop.permute.xlu0 %2549
    %2553 = vset.pattern.permute.xlu0 0
    %2554 = vperm.xlu0 %2553, %v2467
    %v2555 = vpop.permute.xlu0 %2554
    %2558 = vset.pattern.permute.xlu0 0
    %2559 = vperm.xlu0 %2558, %v2468
    %v2560 = vpop.permute.xlu0 %2559
    %2563 = vset.pattern.permute.xlu0 0
    %2564 = vperm.xlu0 %2563, %v2469
    %v2565 = vpop.permute.xlu0 %2564
    %2568 = vset.pattern.permute.xlu0 0
    %2569 = vperm.xlu0 %2568, %v2470
    %v2570 = vpop.permute.xlu0 %2569
    %2573 = vset.pattern.permute.xlu0 0
    %2574 = vperm.xlu0 %2573, %v2471
    %v2575 = vpop.permute.xlu0 %2574
    %2578 = vset.pattern.permute.xlu0 0
    %2579 = vperm.xlu0 %2578, %v2472
    %v2580 = vpop.permute.xlu0 %2579
    %2583 = vset.pattern.permute.xlu0 0
    %2584 = vperm.xlu0 %2583, %v2473
    %v2585 = vpop.permute.xlu0 %2584
    %2588 = vset.pattern.permute.xlu0 0
    %2589 = vperm.xlu0 %2588, %v2474
    %v2590 = vpop.permute.xlu0 %2589
    %2593 = vset.pattern.permute.xlu0 0
    %2594 = vperm.xlu0 %2593, %v2475
    %v2595 = vpop.permute.xlu0 %2594
    %2598 = vset.pattern.permute.xlu0 0
    %2599 = vperm.xlu0 %2598, %v2476
    %v2600 = vpop.permute.xlu0 %2599
    %2603 = vset.pattern.permute.xlu0 0
    %2604 = vperm.xlu0 %2603, %v2477
    %v2605 = vpop.permute.xlu0 %2604
    %2608 = vset.pattern.permute.xlu0 0
    %2609 = vperm.xlu0 %2608, %v2478
    %v2610 = vpop.permute.xlu0 %2609
    %2613 = vset.pattern.permute.xlu0 0
    %2614 = vperm.xlu0 %2613, %v2479
    %v2615 = vpop.permute.xlu0 %2614
    %2618 = vset.pattern.permute.xlu0 0
    %2619 = vperm.xlu0 %2618, %v2480
    %v2620 = vpop.permute.xlu0 %2619
    %2623 = vset.pattern.permute.xlu0 0
    %2624 = vperm.xlu0 %2623, %v2481
    %v2625 = vpop.permute.xlu0 %2624
    %2628 = vset.pattern.permute.xlu0 0
    %2629 = vperm.xlu0 %2628, %v2482
    %v2630 = vpop.permute.xlu0 %2629
    %2633 = vset.pattern.permute.xlu0 0
    %2634 = vperm.xlu0 %2633, %v2483
    %v2635 = vpop.permute.xlu0 %2634
    %2638 = vset.pattern.permute.xlu0 0
    %2639 = vperm.xlu0 %2638, %v2484
    %v2640 = vpop.permute.xlu0 %2639
    %2643 = vset.pattern.permute.xlu0 0
    %2644 = vperm.xlu0 %2643, %v2485
    %v2645 = vpop.permute.xlu0 %2644
    %v2648 = vlaneseq
    %v2649 = vshrl.u32 %v2648, 7
    %v2650 = vsub.s32 0, %v2649
    %v2651 = vrot.slane %v2486, %v2650
    %v2652 = vlaneseq
    %v2653 = vshrl.u32 %v2652, 7
    %v2654 = vsub.s32 1, %v2653
    %v2655 = vrot.slane %v2486, %v2654
    %v2658 = vmul.f32 %v2490, %v2651
    %v2659 = vmul.f32 %v2490, %v2655
    %v2660 = vmul.f32 %v2495, %v2651
    %v2661 = vmul.f32 %v2495, %v2655
    %v2662 = vmul.f32 %v2500, %v2651
    %v2663 = vmul.f32 %v2500, %v2655
    %v2664 = vmul.f32 %v2505, %v2651
    %v2665 = vmul.f32 %v2505, %v2655
    %v2666 = vmul.f32 %v2510, %v2651
    %v2667 = vmul.f32 %v2510, %v2655
    %v2668 = vmul.f32 %v2515, %v2651
    %v2669 = vmul.f32 %v2515, %v2655
    %v2670 = vmul.f32 %v2520, %v2651
    %v2671 = vmul.f32 %v2520, %v2655
    %v2672 = vmul.f32 %v2525, %v2651
    %v2673 = vmul.f32 %v2525, %v2655
    %v2674 = vmul.f32 %v2530, %v2651
    %v2675 = vmul.f32 %v2530, %v2655
    %v2676 = vmul.f32 %v2535, %v2651
    %v2677 = vmul.f32 %v2535, %v2655
    %v2678 = vmul.f32 %v2540, %v2651
    %v2679 = vmul.f32 %v2540, %v2655
    %v2680 = vmul.f32 %v2545, %v2651
    %v2681 = vmul.f32 %v2545, %v2655
    %v2682 = vmul.f32 %v2550, %v2651
    %v2683 = vmul.f32 %v2550, %v2655
    %v2684 = vmul.f32 %v2555, %v2651
    %v2685 = vmul.f32 %v2555, %v2655
    %v2686 = vmul.f32 %v2560, %v2651
    %v2687 = vmul.f32 %v2560, %v2655
    %v2688 = vmul.f32 %v2565, %v2651
    %v2689 = vmul.f32 %v2565, %v2655
    %v2690 = vmul.f32 %v2570, %v2651
    %v2691 = vmul.f32 %v2570, %v2655
    %v2692 = vmul.f32 %v2575, %v2651
    %v2693 = vmul.f32 %v2575, %v2655
    %v2694 = vmul.f32 %v2580, %v2651
    %v2695 = vmul.f32 %v2580, %v2655
    %v2696 = vmul.f32 %v2585, %v2651
    %v2697 = vmul.f32 %v2585, %v2655
    %v2698 = vmul.f32 %v2590, %v2651
    %v2699 = vmul.f32 %v2590, %v2655
    %v2700 = vmul.f32 %v2595, %v2651
    %v2701 = vmul.f32 %v2595, %v2655
    %v2702 = vmul.f32 %v2600, %v2651
    %v2703 = vmul.f32 %v2600, %v2655
    %v2704 = vmul.f32 %v2605, %v2651
    %v2705 = vmul.f32 %v2605, %v2655
    %v2706 = vmul.f32 %v2610, %v2651
    %v2707 = vmul.f32 %v2610, %v2655
    %v2708 = vmul.f32 %v2615, %v2651
    %v2709 = vmul.f32 %v2615, %v2655
    %v2710 = vmul.f32 %v2620, %v2651
    %v2711 = vmul.f32 %v2620, %v2655
    %v2712 = vmul.f32 %v2625, %v2651
    %v2713 = vmul.f32 %v2625, %v2655
    %v2714 = vmul.f32 %v2630, %v2651
    %v2715 = vmul.f32 %v2630, %v2655
    %v2716 = vmul.f32 %v2635, %v2651
    %v2717 = vmul.f32 %v2635, %v2655
    %v2718 = vmul.f32 %v2640, %v2651
    %v2719 = vmul.f32 %v2640, %v2655
    %v2720 = vmul.f32 %v2645, %v2651
    %v2721 = vmul.f32 %v2645, %v2655
    %v2722 = vld [vmem:[%s322] ss:$2 sm:$0x3]
    %2723 = vset.pattern.permute.xlu0 1
    %2724 = vperm.xlu0 %2723, %v2454
    %v2725 = vpop.permute.xlu0 %2724
    %2727 = vset.pattern.permute.xlu0 1
    %2728 = vperm.xlu0 %2727, %v2455
    %v2729 = vpop.permute.xlu0 %2728
    %2731 = vset.pattern.permute.xlu0 1
    %2732 = vperm.xlu0 %2731, %v2456
    %v2733 = vpop.permute.xlu0 %2732
    %2735 = vset.pattern.permute.xlu0 1
    %2736 = vperm.xlu0 %2735, %v2457
    %v2737 = vpop.permute.xlu0 %2736
    %2739 = vset.pattern.permute.xlu0 1
    %2740 = vperm.xlu0 %2739, %v2458
    %v2741 = vpop.permute.xlu0 %2740
    %2743 = vset.pattern.permute.xlu0 1
    %2744 = vperm.xlu0 %2743, %v2459
    %v2745 = vpop.permute.xlu0 %2744
    %2747 = vset.pattern.permute.xlu0 1
    %2748 = vperm.xlu0 %2747, %v2460
    %v2749 = vpop.permute.xlu0 %2748
    %2751 = vset.pattern.permute.xlu0 1
    %2752 = vperm.xlu0 %2751, %v2461
    %v2753 = vpop.permute.xlu0 %2752
    %2755 = vset.pattern.permute.xlu0 1
    %2756 = vperm.xlu0 %2755, %v2462
    %v2757 = vpop.permute.xlu0 %2756
    %2759 = vset.pattern.permute.xlu0 1
    %2760 = vperm.xlu0 %2759, %v2463
    %v2761 = vpop.permute.xlu0 %2760
    %2763 = vset.pattern.permute.xlu0 1
    %2764 = vperm.xlu0 %2763, %v2464
    %v2765 = vpop.permute.xlu0 %2764
    %2767 = vset.pattern.permute.xlu0 1
    %2768 = vperm.xlu0 %2767, %v2465
    %v2769 = vpop.permute.xlu0 %2768
    %2771 = vset.pattern.permute.xlu0 1
    %2772 = vperm.xlu0 %2771, %v2466
    %v2773 = vpop.permute.xlu0 %2772
    %2775 = vset.pattern.permute.xlu0 1
    %2776 = vperm.xlu0 %2775, %v2467
    %v2777 = vpop.permute.xlu0 %2776
    %2779 = vset.pattern.permute.xlu0 1
    %2780 = vperm.xlu0 %2779, %v2468
    %v2781 = vpop.permute.xlu0 %2780
    %2783 = vset.pattern.permute.xlu0 1
    %2784 = vperm.xlu0 %2783, %v2469
    %v2785 = vpop.permute.xlu0 %2784
    %2787 = vset.pattern.permute.xlu0 1
    %2788 = vperm.xlu0 %2787, %v2470
    %v2789 = vpop.permute.xlu0 %2788
    %2791 = vset.pattern.permute.xlu0 1
    %2792 = vperm.xlu0 %2791, %v2471
    %v2793 = vpop.permute.xlu0 %2792
    %2795 = vset.pattern.permute.xlu0 1
    %2796 = vperm.xlu0 %2795, %v2472
    %v2797 = vpop.permute.xlu0 %2796
    %2799 = vset.pattern.permute.xlu0 1
    %2800 = vperm.xlu0 %2799, %v2473
    %v2801 = vpop.permute.xlu0 %2800
    %2803 = vset.pattern.permute.xlu0 1
    %2804 = vperm.xlu0 %2803, %v2474
    %v2805 = vpop.permute.xlu0 %2804
    %2807 = vset.pattern.permute.xlu0 1
    %2808 = vperm.xlu0 %2807, %v2475
    %v2809 = vpop.permute.xlu0 %2808
    %2811 = vset.pattern.permute.xlu0 1
    %2812 = vperm.xlu0 %2811, %v2476
    %v2813 = vpop.permute.xlu0 %2812
    %2815 = vset.pattern.permute.xlu0 1
    %2816 = vperm.xlu0 %2815, %v2477
    %v2817 = vpop.permute.xlu0 %2816
    %2819 = vset.pattern.permute.xlu0 1
    %2820 = vperm.xlu0 %2819, %v2478
    %v2821 = vpop.permute.xlu0 %2820
    %2823 = vset.pattern.permute.xlu0 1
    %2824 = vperm.xlu0 %2823, %v2479
    %v2825 = vpop.permute.xlu0 %2824
    %2827 = vset.pattern.permute.xlu0 1
    %2828 = vperm.xlu0 %2827, %v2480
    %v2829 = vpop.permute.xlu0 %2828
    %2831 = vset.pattern.permute.xlu0 1
    %2832 = vperm.xlu0 %2831, %v2481
    %v2833 = vpop.permute.xlu0 %2832
    %2835 = vset.pattern.permute.xlu0 1
    %2836 = vperm.xlu0 %2835, %v2482
    %v2837 = vpop.permute.xlu0 %2836
    %2839 = vset.pattern.permute.xlu0 1
    %2840 = vperm.xlu0 %2839, %v2483
    %v2841 = vpop.permute.xlu0 %2840
    %2843 = vset.pattern.permute.xlu0 1
    %2844 = vperm.xlu0 %2843, %v2484
    %v2845 = vpop.permute.xlu0 %2844
    %2847 = vset.pattern.permute.xlu0 1
    %2848 = vperm.xlu0 %2847, %v2485
    %v2849 = vpop.permute.xlu0 %2848
    %v2852 = vlaneseq
    %v2853 = vshrl.u32 %v2852, 7
    %v2854 = vsub.s32 0, %v2853
    %v2855 = vrot.slane %v2722, %v2854
    %v2856 = vlaneseq
    %v2857 = vshrl.u32 %v2856, 7
    %v2858 = vsub.s32 1, %v2857
    %v2859 = vrot.slane %v2722, %v2858
    %v2862 = vmul.f32 %v2725, %v2855
    %v2863 = vmul.f32 %v2725, %v2859
    %v2864 = vmul.f32 %v2729, %v2855
    %v2865 = vmul.f32 %v2729, %v2859
    %v2866 = vmul.f32 %v2733, %v2855
    %v2867 = vmul.f32 %v2733, %v2859
    %v2868 = vmul.f32 %v2737, %v2855
    %v2869 = vmul.f32 %v2737, %v2859
    %v2870 = vmul.f32 %v2741, %v2855
    %v2871 = vmul.f32 %v2741, %v2859
    %v2872 = vmul.f32 %v2745, %v2855
    %v2873 = vmul.f32 %v2745, %v2859
    %v2874 = vmul.f32 %v2749, %v2855
    %v2875 = vmul.f32 %v2749, %v2859
    %v2876 = vmul.f32 %v2753, %v2855
    %v2877 = vmul.f32 %v2753, %v2859
    %v2878 = vmul.f32 %v2757, %v2855
    %v2879 = vmul.f32 %v2757, %v2859
    %v2880 = vmul.f32 %v2761, %v2855
    %v2881 = vmul.f32 %v2761, %v2859
    %v2882 = vmul.f32 %v2765, %v2855
    %v2883 = vmul.f32 %v2765, %v2859
    %v2884 = vmul.f32 %v2769, %v2855
    %v2885 = vmul.f32 %v2769, %v2859
    %v2886 = vmul.f32 %v2773, %v2855
    %v2887 = vmul.f32 %v2773, %v2859
    %v2888 = vmul.f32 %v2777, %v2855
    %v2889 = vmul.f32 %v2777, %v2859
    %v2890 = vmul.f32 %v2781, %v2855
    %v2891 = vmul.f32 %v2781, %v2859
    %v2892 = vmul.f32 %v2785, %v2855
    %v2893 = vmul.f32 %v2785, %v2859
    %v2894 = vmul.f32 %v2789, %v2855
    %v2895 = vmul.f32 %v2789, %v2859
    %v2896 = vmul.f32 %v2793, %v2855
    %v2897 = vmul.f32 %v2793, %v2859
    %v2898 = vmul.f32 %v2797, %v2855
    %v2899 = vmul.f32 %v2797, %v2859
    %v2900 = vmul.f32 %v2801, %v2855
    %v2901 = vmul.f32 %v2801, %v2859
    %v2902 = vmul.f32 %v2805, %v2855
    %v2903 = vmul.f32 %v2805, %v2859
    %v2904 = vmul.f32 %v2809, %v2855
    %v2905 = vmul.f32 %v2809, %v2859
    %v2906 = vmul.f32 %v2813, %v2855
    %v2907 = vmul.f32 %v2813, %v2859
    %v2908 = vmul.f32 %v2817, %v2855
    %v2909 = vmul.f32 %v2817, %v2859
    %v2910 = vmul.f32 %v2821, %v2855
    %v2911 = vmul.f32 %v2821, %v2859
    %v2912 = vmul.f32 %v2825, %v2855
    %v2913 = vmul.f32 %v2825, %v2859
    %v2914 = vmul.f32 %v2829, %v2855
    %v2915 = vmul.f32 %v2829, %v2859
    %v2916 = vmul.f32 %v2833, %v2855
    %v2917 = vmul.f32 %v2833, %v2859
    %v2918 = vmul.f32 %v2837, %v2855
    %v2919 = vmul.f32 %v2837, %v2859
    %v2920 = vmul.f32 %v2841, %v2855
    %v2921 = vmul.f32 %v2841, %v2859
    %v2922 = vmul.f32 %v2845, %v2855
    %v2923 = vmul.f32 %v2845, %v2859
    %v2924 = vmul.f32 %v2849, %v2855
    %v2925 = vmul.f32 %v2849, %v2859
    %v2926 = vadd.f32 %v2658, %v2862
    %v2927 = vadd.f32 %v2659, %v2863
    %v2928 = vadd.f32 %v2660, %v2864
    %v2929 = vadd.f32 %v2661, %v2865
    %v2930 = vadd.f32 %v2662, %v2866
    %v2931 = vadd.f32 %v2663, %v2867
    %v2932 = vadd.f32 %v2664, %v2868
    %v2933 = vadd.f32 %v2665, %v2869
    %v2934 = vadd.f32 %v2666, %v2870
    %v2935 = vadd.f32 %v2667, %v2871
    %v2936 = vadd.f32 %v2668, %v2872
    %v2937 = vadd.f32 %v2669, %v2873
    %v2938 = vadd.f32 %v2670, %v2874
    %v2939 = vadd.f32 %v2671, %v2875
    %v2940 = vadd.f32 %v2672, %v2876
    %v2941 = vadd.f32 %v2673, %v2877
    %v2942 = vadd.f32 %v2674, %v2878
    %v2943 = vadd.f32 %v2675, %v2879
    %v2944 = vadd.f32 %v2676, %v2880
    %v2945 = vadd.f32 %v2677, %v2881
    %v2946 = vadd.f32 %v2678, %v2882
    %v2947 = vadd.f32 %v2679, %v2883
    %v2948 = vadd.f32 %v2680, %v2884
    %v2949 = vadd.f32 %v2681, %v2885
    %v2950 = vadd.f32 %v2682, %v2886
    %v2951 = vadd.f32 %v2683, %v2887
    %v2952 = vadd.f32 %v2684, %v2888
    %v2953 = vadd.f32 %v2685, %v2889
    %v2954 = vadd.f32 %v2686, %v2890
    %v2955 = vadd.f32 %v2687, %v2891
    %v2956 = vadd.f32 %v2688, %v2892
    %v2957 = vadd.f32 %v2689, %v2893
    %v2958 = vadd.f32 %v2690, %v2894
    %v2959 = vadd.f32 %v2691, %v2895
    %v2960 = vadd.f32 %v2692, %v2896
    %v2961 = vadd.f32 %v2693, %v2897
    %v2962 = vadd.f32 %v2694, %v2898
    %v2963 = vadd.f32 %v2695, %v2899
    %v2964 = vadd.f32 %v2696, %v2900
    %v2965 = vadd.f32 %v2697, %v2901
    %v2966 = vadd.f32 %v2698, %v2902
    %v2967 = vadd.f32 %v2699, %v2903
    %v2968 = vadd.f32 %v2700, %v2904
    %v2969 = vadd.f32 %v2701, %v2905
    %v2970 = vadd.f32 %v2702, %v2906
    %v2971 = vadd.f32 %v2703, %v2907
    %v2972 = vadd.f32 %v2704, %v2908
    %v2973 = vadd.f32 %v2705, %v2909
    %v2974 = vadd.f32 %v2706, %v2910
    %v2975 = vadd.f32 %v2707, %v2911
    %v2976 = vadd.f32 %v2708, %v2912
    %v2977 = vadd.f32 %v2709, %v2913
    %v2978 = vadd.f32 %v2710, %v2914
    %v2979 = vadd.f32 %v2711, %v2915
    %v2980 = vadd.f32 %v2712, %v2916
    %v2981 = vadd.f32 %v2713, %v2917
    %v2982 = vadd.f32 %v2714, %v2918
    %v2983 = vadd.f32 %v2715, %v2919
    %v2984 = vadd.f32 %v2716, %v2920
    %v2985 = vadd.f32 %v2717, %v2921
    %v2986 = vadd.f32 %v2718, %v2922
    %v2987 = vadd.f32 %v2719, %v2923
    %v2988 = vadd.f32 %v2720, %v2924
    %v2989 = vadd.f32 %v2721, %v2925
    %v2990 = vld [vmem:[%s2] sm:$0x3]
    %v2992 = vlaneseq
    %v2993 = vshrl.u32 %v2992, 7
    %v2994 = vsub.s32 0, %v2993
    %v2995 = vrot.slane %v2990, %v2994
    %v2996 = vlaneseq
    %v2997 = vshrl.u32 %v2996, 7
    %v2998 = vsub.s32 1, %v2997
    %v2999 = vrot.slane %v2990, %v2998
    %v3002 = vadd.f32 %v2926, %v2995
    %v3003 = vadd.f32 %v2927, %v2999
    %v3004 = vadd.f32 %v2928, %v2995
    %v3005 = vadd.f32 %v2929, %v2999
    %v3006 = vadd.f32 %v2930, %v2995
    %v3007 = vadd.f32 %v2931, %v2999
    %v3008 = vadd.f32 %v2932, %v2995
    %v3009 = vadd.f32 %v2933, %v2999
    %v3010 = vadd.f32 %v2934, %v2995
    %v3011 = vadd.f32 %v2935, %v2999
    %v3012 = vadd.f32 %v2936, %v2995
    %v3013 = vadd.f32 %v2937, %v2999
    %v3014 = vadd.f32 %v2938, %v2995
    %v3015 = vadd.f32 %v2939, %v2999
    %v3016 = vadd.f32 %v2940, %v2995
    %v3017 = vadd.f32 %v2941, %v2999
    %v3018 = vadd.f32 %v2942, %v2995
    %v3019 = vadd.f32 %v2943, %v2999
    %v3020 = vadd.f32 %v2944, %v2995
    %v3021 = vadd.f32 %v2945, %v2999
    %v3022 = vadd.f32 %v2946, %v2995
    %v3023 = vadd.f32 %v2947, %v2999
    %v3024 = vadd.f32 %v2948, %v2995
    %v3025 = vadd.f32 %v2949, %v2999
    %v3026 = vadd.f32 %v2950, %v2995
    %v3027 = vadd.f32 %v2951, %v2999
    %v3028 = vadd.f32 %v2952, %v2995
    %v3029 = vadd.f32 %v2953, %v2999
    %v3030 = vadd.f32 %v2954, %v2995
    %v3031 = vadd.f32 %v2955, %v2999
    %v3032 = vadd.f32 %v2956, %v2995
    %v3033 = vadd.f32 %v2957, %v2999
    %v3034 = vadd.f32 %v2958, %v2995
    %v3035 = vadd.f32 %v2959, %v2999
    %v3036 = vadd.f32 %v2960, %v2995
    %v3037 = vadd.f32 %v2961, %v2999
    %v3038 = vadd.f32 %v2962, %v2995
    %v3039 = vadd.f32 %v2963, %v2999
    %v3040 = vadd.f32 %v2964, %v2995
    %v3041 = vadd.f32 %v2965, %v2999
    %v3042 = vadd.f32 %v2966, %v2995
    %v3043 = vadd.f32 %v2967, %v2999
    %v3044 = vadd.f32 %v2968, %v2995
    %v3045 = vadd.f32 %v2969, %v2999
    %v3046 = vadd.f32 %v2970, %v2995
    %v3047 = vadd.f32 %v2971, %v2999
    %v3048 = vadd.f32 %v2972, %v2995
    %v3049 = vadd.f32 %v2973, %v2999
    %v3050 = vadd.f32 %v2974, %v2995
    %v3051 = vadd.f32 %v2975, %v2999
    %v3052 = vadd.f32 %v2976, %v2995
    %v3053 = vadd.f32 %v2977, %v2999
    %v3054 = vadd.f32 %v2978, %v2995
    %v3055 = vadd.f32 %v2979, %v2999
    %v3056 = vadd.f32 %v2980, %v2995
    %v3057 = vadd.f32 %v2981, %v2999
    %v3058 = vadd.f32 %v2982, %v2995
    %v3059 = vadd.f32 %v2983, %v2999
    %v3060 = vadd.f32 %v2984, %v2995
    %v3061 = vadd.f32 %v2985, %v2999
    %v3062 = vadd.f32 %v2986, %v2995
    %v3063 = vadd.f32 %v2987, %v2999
    %v3064 = vadd.f32 %v2988, %v2995
    %v3065 = vadd.f32 %v2989, %v2999
    %v3066 = vmax.f32 %v3002, 0.0
    %v3067 = vmax.f32 %v3003, 0.0
    %v3068 = vmax.f32 %v3004, 0.0
    %v3069 = vmax.f32 %v3005, 0.0
    %v3070 = vmax.f32 %v3006, 0.0
    %v3071 = vmax.f32 %v3007, 0.0
    %v3072 = vmax.f32 %v3008, 0.0
    %v3073 = vmax.f32 %v3009, 0.0
    %v3074 = vmax.f32 %v3010, 0.0
    %v3075 = vmax.f32 %v3011, 0.0
    %v3076 = vmax.f32 %v3012, 0.0
    %v3077 = vmax.f32 %v3013, 0.0
    %v3078 = vmax.f32 %v3014, 0.0
    %v3079 = vmax.f32 %v3015, 0.0
    %v3080 = vmax.f32 %v3016, 0.0
    %v3081 = vmax.f32 %v3017, 0.0
    %v3082 = vmax.f32 %v3018, 0.0
    %v3083 = vmax.f32 %v3019, 0.0
    %v3084 = vmax.f32 %v3020, 0.0
    %v3085 = vmax.f32 %v3021, 0.0
    %v3086 = vmax.f32 %v3022, 0.0
    %v3087 = vmax.f32 %v3023, 0.0
    %v3088 = vmax.f32 %v3024, 0.0
    %v3089 = vmax.f32 %v3025, 0.0
    %v3090 = vmax.f32 %v3026, 0.0
    %v3091 = vmax.f32 %v3027, 0.0
    %v3092 = vmax.f32 %v3028, 0.0
    %v3093 = vmax.f32 %v3029, 0.0
    %v3094 = vmax.f32 %v3030, 0.0
    %v3095 = vmax.f32 %v3031, 0.0
    %v3096 = vmax.f32 %v3032, 0.0
    %v3097 = vmax.f32 %v3033, 0.0
    %v3098 = vmax.f32 %v3034, 0.0
    %v3099 = vmax.f32 %v3035, 0.0
    %v3100 = vmax.f32 %v3036, 0.0
    %v3101 = vmax.f32 %v3037, 0.0
    %v3102 = vmax.f32 %v3038, 0.0
    %v3103 = vmax.f32 %v3039, 0.0
    %v3104 = vmax.f32 %v3040, 0.0
    %v3105 = vmax.f32 %v3041, 0.0
    %v3106 = vmax.f32 %v3042, 0.0
    %v3107 = vmax.f32 %v3043, 0.0
    %v3108 = vmax.f32 %v3044, 0.0
    %v3109 = vmax.f32 %v3045, 0.0
    %v3110 = vmax.f32 %v3046, 0.0
    %v3111 = vmax.f32 %v3047, 0.0
    %v3112 = vmax.f32 %v3048, 0.0
    %v3113 = vmax.f32 %v3049, 0.0
    %v3114 = vmax.f32 %v3050, 0.0
    %v3115 = vmax.f32 %v3051, 0.0
    %v3116 = vmax.f32 %v3052, 0.0
    %v3117 = vmax.f32 %v3053, 0.0
    %v3118 = vmax.f32 %v3054, 0.0
    %v3119 = vmax.f32 %v3055, 0.0
    %v3120 = vmax.f32 %v3056, 0.0
    %v3121 = vmax.f32 %v3057, 0.0
    %v3122 = vmax.f32 %v3058, 0.0
    %v3123 = vmax.f32 %v3059, 0.0
    %v3124 = vmax.f32 %v3060, 0.0
    %v3125 = vmax.f32 %v3061, 0.0
    %v3126 = vmax.f32 %v3062, 0.0
    %v3127 = vmax.f32 %v3063, 0.0
    %v3128 = vmax.f32 %v3064, 0.0
    %v3129 = vmax.f32 %v3065, 0.0
    %v3130 = vpack.c.bf16 %v3068, %v3066
    %v3131 = vpack.c.bf16 %v3069, %v3067
    %v3132 = vpack.c.bf16 %v3072, %v3070
    %v3133 = vpack.c.bf16 %v3073, %v3071
    %v3134 = vpack.c.bf16 %v3076, %v3074
    %v3135 = vpack.c.bf16 %v3077, %v3075
    %v3136 = vpack.c.bf16 %v3080, %v3078
    %v3137 = vpack.c.bf16 %v3081, %v3079
    %v3138 = vpack.c.bf16 %v3084, %v3082
    %v3139 = vpack.c.bf16 %v3085, %v3083
    %v3140 = vpack.c.bf16 %v3088, %v3086
    %v3141 = vpack.c.bf16 %v3089, %v3087
    %v3142 = vpack.c.bf16 %v3092, %v3090
    %v3143 = vpack.c.bf16 %v3093, %v3091
    %v3144 = vpack.c.bf16 %v3096, %v3094
    %v3145 = vpack.c.bf16 %v3097, %v3095
    %v3146 = vpack.c.bf16 %v3100, %v3098
    %v3147 = vpack.c.bf16 %v3101, %v3099
    %v3148 = vpack.c.bf16 %v3104, %v3102
    %v3149 = vpack.c.bf16 %v3105, %v3103
    %v3150 = vpack.c.bf16 %v3108, %v3106
    %v3151 = vpack.c.bf16 %v3109, %v3107
    %v3152 = vpack.c.bf16 %v3112, %v3110
    %v3153 = vpack.c.bf16 %v3113, %v3111
    %v3154 = vpack.c.bf16 %v3116, %v3114
    %v3155 = vpack.c.bf16 %v3117, %v3115
    %v3156 = vpack.c.bf16 %v3120, %v3118
    %v3157 = vpack.c.bf16 %v3121, %v3119
    %v3158 = vpack.c.bf16 %v3124, %v3122
    %v3159 = vpack.c.bf16 %v3125, %v3123
    %v3160 = vpack.c.bf16 %v3128, %v3126
    %v3161 = vpack.c.bf16 %v3129, %v3127
    %v3162 = vld [vmem:[%s3] sm:$0xff]
    %v3163 = vld [vmem:[%s3 + $0x8] sm:$0xff]
    %v3164 = vld [vmem:[%s3 + $0x10] sm:$0xff]
    %v3165 = vld [vmem:[%s3 + $0x18] sm:$0xff]
    %v3166 = vld [vmem:[%s3 + $0x20] sm:$0xff]
    %v3167 = vld [vmem:[%s3 + $0x28] sm:$0xff]
    %v3168 = vld [vmem:[%s3 + $0x30] sm:$0xff]
    %v3169 = vld [vmem:[%s3 + $0x38] sm:$0xff]
    %v3170 = vld [vmem:[%s3 + $0x40] sm:$0xff]
    %v3171 = vld [vmem:[%s3 + $0x48] sm:$0xff]
    %v3172 = vld [vmem:[%s3 + $0x50] sm:$0xff]
    %v3173 = vld [vmem:[%s3 + $0x58] sm:$0xff]
    %v3174 = vld [vmem:[%s3 + $0x60] sm:$0xff]
    %v3175 = vld [vmem:[%s3 + $0x68] sm:$0xff]
    %v3176 = vld [vmem:[%s3 + $0x70] sm:$0xff]
    %v3177 = vld [vmem:[%s3 + $0x78] sm:$0xff]
    %v3178 = vld [vmem:[%s3 + $0x80] sm:$0xff]
    %v3179 = vld [vmem:[%s3 + $0x88] sm:$0xff]
    %v3180 = vld [vmem:[%s3 + $0x90] sm:$0xff]
    %v3181 = vld [vmem:[%s3 + $0x98] sm:$0xff]
    %v3182 = vld [vmem:[%s3 + $0xa0] sm:$0xff]
    %v3183 = vld [vmem:[%s3 + $0xa8] sm:$0xff]
    %v3184 = vld [vmem:[%s3 + $0xb0] sm:$0xff]
    %v3185 = vld [vmem:[%s3 + $0xb8] sm:$0xff]
    %v3186 = vld [vmem:[%s3 + $0xc0] sm:$0xff]
    %v3187 = vld [vmem:[%s3 + $0xc8] sm:$0xff]
    %v3188 = vld [vmem:[%s3 + $0xd0] sm:$0xff]
    %v3189 = vld [vmem:[%s3 + $0xd8] sm:$0xff]
    %v3190 = vld [vmem:[%s3 + $0xe0] sm:$0xff]
    %v3191 = vld [vmem:[%s3 + $0xe8] sm:$0xff]
    %v3192 = vld [vmem:[%s3 + $0xf0] sm:$0xff]
    %v3193 = vld [vmem:[%s3 + $0xf8] sm:$0xff]
    %v3194 = vld [vmem:[%s4] sm:$0x3]
    %v3196 = vlaneseq
    %v3197 = vshrl.u32 %v3196, 7
    %v3198 = vsub.s32 0, %v3197
    %v3199 = vrot.slane %v3194, %v3198
    %v3200 = vlaneseq
    %v3201 = vshrl.u32 %v3200, 7
    %v3202 = vsub.s32 1, %v3201
    %v3203 = vrot.slane %v3194, %v3202
    %v3238 = vunpack.c.l.b16 %v3162
    %v3239 = vunpack.c.h.b16 %v3162
    %v3240 = vunpack.c.l.b16 %v3163
    %v3241 = vunpack.c.h.b16 %v3163
    %v3242 = vunpack.c.l.b16 %v3164
    %v3243 = vunpack.c.h.b16 %v3164
    %v3244 = vunpack.c.l.b16 %v3165
    %v3245 = vunpack.c.h.b16 %v3165
    %v3246 = vunpack.c.l.b16 %v3166
    %v3247 = vunpack.c.h.b16 %v3166
    %v3248 = vunpack.c.l.b16 %v3167
    %v3249 = vunpack.c.h.b16 %v3167
    %v3250 = vunpack.c.l.b16 %v3168
    %v3251 = vunpack.c.h.b16 %v3168
    %v3252 = vunpack.c.l.b16 %v3169
    %v3253 = vunpack.c.h.b16 %v3169
    %v3254 = vunpack.c.l.b16 %v3170
    %v3255 = vunpack.c.h.b16 %v3170
    %v3256 = vunpack.c.l.b16 %v3171
    %v3257 = vunpack.c.h.b16 %v3171
    %v3258 = vunpack.c.l.b16 %v3172
    %v3259 = vunpack.c.h.b16 %v3172
    %v3260 = vunpack.c.l.b16 %v3173
    %v3261 = vunpack.c.h.b16 %v3173
    %v3262 = vunpack.c.l.b16 %v3174
    %v3263 = vunpack.c.h.b16 %v3174
    %v3264 = vunpack.c.l.b16 %v3175
    %v3265 = vunpack.c.h.b16 %v3175
    %v3266 = vunpack.c.l.b16 %v3176
    %v3267 = vunpack.c.h.b16 %v3176
    %v3268 = vunpack.c.l.b16 %v3177
    %v3269 = vunpack.c.h.b16 %v3177
    %v3270 = vunpack.c.l.b16 %v3178
    %v3271 = vunpack.c.h.b16 %v3178
    %v3272 = vunpack.c.l.b16 %v3179
    %v3273 = vunpack.c.h.b16 %v3179
    %v3274 = vunpack.c.l.b16 %v3180
    %v3275 = vunpack.c.h.b16 %v3180
    %v3276 = vunpack.c.l.b16 %v3181
    %v3277 = vunpack.c.h.b16 %v3181
    %v3278 = vunpack.c.l.b16 %v3182
    %v3279 = vunpack.c.h.b16 %v3182
    %v3280 = vunpack.c.l.b16 %v3183
    %v3281 = vunpack.c.h.b16 %v3183
    %v3282 = vunpack.c.l.b16 %v3184
    %v3283 = vunpack.c.h.b16 %v3184
    %v3284 = vunpack.c.l.b16 %v3185
    %v3285 = vunpack.c.h.b16 %v3185
    %v3286 = vunpack.c.l.b16 %v3186
    %v3287 = vunpack.c.h.b16 %v3186
    %v3288 = vunpack.c.l.b16 %v3187
    %v3289 = vunpack.c.h.b16 %v3187
    %v3290 = vunpack.c.l.b16 %v3188
    %v3291 = vunpack.c.h.b16 %v3188
    %v3292 = vunpack.c.l.b16 %v3189
    %v3293 = vunpack.c.h.b16 %v3189
    %v3294 = vunpack.c.l.b16 %v3190
    %v3295 = vunpack.c.h.b16 %v3190
    %v3296 = vunpack.c.l.b16 %v3191
    %v3297 = vunpack.c.h.b16 %v3191
    %v3298 = vunpack.c.l.b16 %v3192
    %v3299 = vunpack.c.h.b16 %v3192
    %v3300 = vunpack.c.l.b16 %v3193
    %v3301 = vunpack.c.h.b16 %v3193
    %v3302 = vpack.c.b16 %v3240, %v3238
    %v3303 = vpack.c.b16 %v3241, %v3239
    %v3304 = vpack.c.b16 %v3244, %v3242
    %v3305 = vpack.c.b16 %v3245, %v3243
    %v3306 = vpack.c.b16 %v3248, %v3246
    %v3307 = vpack.c.b16 %v3249, %v3247
    %v3308 = vpack.c.b16 %v3252, %v3250
    %v3309 = vpack.c.b16 %v3253, %v3251
    %v3310 = vpack.c.b16 %v3256, %v3254
    %v3311 = vpack.c.b16 %v3257, %v3255
    %v3312 = vpack.c.b16 %v3260, %v3258
    %v3313 = vpack.c.b16 %v3261, %v3259
    %v3314 = vpack.c.b16 %v3264, %v3262
    %v3315 = vpack.c.b16 %v3265, %v3263
    %v3316 = vpack.c.b16 %v3268, %v3266
    %v3317 = vpack.c.b16 %v3269, %v3267
    %v3318 = vpack.c.b16 %v3272, %v3270
    %v3319 = vpack.c.b16 %v3273, %v3271
    %v3320 = vpack.c.b16 %v3276, %v3274
    %v3321 = vpack.c.b16 %v3277, %v3275
    %v3322 = vpack.c.b16 %v3280, %v3278
    %v3323 = vpack.c.b16 %v3281, %v3279
    %v3324 = vpack.c.b16 %v3284, %v3282
    %v3325 = vpack.c.b16 %v3285, %v3283
    %v3326 = vpack.c.b16 %v3288, %v3286
    %v3327 = vpack.c.b16 %v3289, %v3287
    %v3328 = vpack.c.b16 %v3292, %v3290
    %v3329 = vpack.c.b16 %v3293, %v3291
    %v3330 = vpack.c.b16 %v3296, %v3294
    %v3331 = vpack.c.b16 %v3297, %v3295
    %v3332 = vpack.c.b16 %v3300, %v3298
    %v3333 = vpack.c.b16 %v3301, %v3299
    %3366 = vmatprep.subr.bf16.mxu0 %v3303
    %3367 = vmatpush1.bf16.msra.mxu0 %v3302
    %3368 = vmatprep.subr.bf16.mxu0 %v3305
    %3369 = vmatpush1.bf16.msra.mxu0 %v3304
    %3370 = vmatprep.subr.bf16.mxu0 %v3307
    %3371 = vmatpush1.bf16.msra.mxu0 %v3306
    %3372 = vmatprep.subr.bf16.mxu0 %v3309
    %3373 = vmatpush1.bf16.msra.mxu0 %v3308
    %3374 = vmatprep.subr.bf16.mxu0 %v3311
    %3375 = vmatpush1.bf16.msra.mxu0 %v3310
    %3376 = vmatprep.subr.bf16.mxu0 %v3313
    %3377 = vmatpush1.bf16.msra.mxu0 %v3312
    %3378 = vmatprep.subr.bf16.mxu0 %v3315
    %3379 = vmatpush1.bf16.msra.mxu0 %v3314
    %3380 = vmatprep.subr.bf16.mxu0 %v3317
    %3381 = vmatpush1.bf16.msra.mxu0 %v3316
    %3382 = vmatprep.subr.bf16.mxu0 %v3319
    %3383 = vmatpush1.bf16.msra.mxu0 %v3318
    %3384 = vmatprep.subr.bf16.mxu0 %v3321
    %3385 = vmatpush1.bf16.msra.mxu0 %v3320
    %3386 = vmatprep.subr.bf16.mxu0 %v3323
    %3387 = vmatpush1.bf16.msra.mxu0 %v3322
    %3388 = vmatprep.subr.bf16.mxu0 %v3325
    %3389 = vmatpush1.bf16.msra.mxu0 %v3324
    %3390 = vmatprep.subr.bf16.mxu0 %v3327
    %3391 = vmatpush1.bf16.msra.mxu0 %v3326
    %3392 = vmatprep.subr.bf16.mxu0 %v3329
    %3393 = vmatpush1.bf16.msra.mxu0 %v3328
    %3394 = vmatprep.subr.bf16.mxu0 %v3331
    %3395 = vmatpush1.bf16.msra.mxu0 %v3330
    %3396 = vmatprep.subr.bf16.mxu0 %v3333
    %3397 = vmatpush1.bf16.msra.mxu0 %v3332
    %3398 = vmatprep.mubr.bf16.mxu0 %v3131
    %3399 = vmatmul.mubr.bf16.gmra.mrb[0].mxu0 %v3130
    %v3400 = vpop.f32.mrb[0].mxu0
    %v3401 = vadd.f32 %v3199, %v3400
    %v3402 = vpop.f32.mrb[0].mxu0
    %v3403 = vadd.f32 %v3203, %v3402
    %v3404 = vpop.f32.mrb[0].mxu0
    %v3405 = vadd.f32 %v3199, %v3404
    %v3406 = vpop.f32.mrb[0].mxu0
    %v3407 = vadd.f32 %v3203, %v3406
    %3408 = vmatprep.mubr.bf16.mxu0 %v3133
    %3409 = vmatmul.mubr.bf16.gmra.mrb[0].mxu0 %v3132
    %v3410 = vpop.f32.mrb[0].mxu0
    %v3411 = vadd.f32 %v3199, %v3410
    %v3412 = vpop.f32.mrb[0].mxu0
    %v3413 = vadd.f32 %v3203, %v3412
    %v3414 = vpop.f32.mrb[0].mxu0
    %v3415 = vadd.f32 %v3199, %v3414
    %v3416 = vpop.f32.mrb[0].mxu0
    %v3417 = vadd.f32 %v3203, %v3416
    %3418 = vmatprep.mubr.bf16.mxu0 %v3135
    %3419 = vmatmul.mubr.bf16.gmra.mrb[0].mxu0 %v3134
    %v3420 = vpop.f32.mrb[0].mxu0
    %v3421 = vadd.f32 %v3199, %v3420
    %v3422 = vpop.f32.mrb[0].mxu0
    %v3423 = vadd.f32 %v3203, %v3422
    %v3424 = vpop.f32.mrb[0].mxu0
    %v3425 = vadd.f32 %v3199, %v3424
    %v3426 = vpop.f32.mrb[0].mxu0
    %v3427 = vadd.f32 %v3203, %v3426
    %3428 = vmatprep.mubr.bf16.mxu0 %v3137
    %3429 = vmatmul.mubr.bf16.gmra.mrb[0].mxu0 %v3136
    %v3430 = vpop.f32.mrb[0].mxu0
    %v3431 = vadd.f32 %v3199, %v3430
    %v3432 = vpop.f32.mrb[0].mxu0
    %v3433 = vadd.f32 %v3203, %v3432
    %v3434 = vpop.f32.mrb[0].mxu0
    %v3435 = vadd.f32 %v3199, %v3434
    %v3436 = vpop.f32.mrb[0].mxu0
    %v3437 = vadd.f32 %v3203, %v3436
    %3438 = vmatprep.mubr.bf16.mxu0 %v3139
    %3439 = vmatmul.mubr.bf16.gmra.mrb[0].mxu0 %v3138
    %v3440 = vpop.f32.mrb[0].mxu0
    %v3441 = vadd.f32 %v3199, %v3440
    %v3442 = vpop.f32.mrb[0].mxu0
    %v3443 = vadd.f32 %v3203, %v3442
    %v3444 = vpop.f32.mrb[0].mxu0
    %v3445 = vadd.f32 %v3199, %v3444
    %v3446 = vpop.f32.mrb[0].mxu0
    %v3447 = vadd.f32 %v3203, %v3446
    %3448 = vmatprep.mubr.bf16.mxu0 %v3141
    %3449 = vmatmul.mubr.bf16.gmra.mrb[0].mxu0 %v3140
    %v3450 = vpop.f32.mrb[0].mxu0
    %v3451 = vadd.f32 %v3199, %v3450
    %v3452 = vpop.f32.mrb[0].mxu0
    %v3453 = vadd.f32 %v3203, %v3452
    %v3454 = vpop.f32.mrb[0].mxu0
    %v3455 = vadd.f32 %v3199, %v3454
    %v3456 = vpop.f32.mrb[0].mxu0
    %v3457 = vadd.f32 %v3203, %v3456
    %3458 = vmatprep.mubr.bf16.mxu0 %v3143
    %3459 = vmatmul.mubr.bf16.gmra.mrb[0].mxu0 %v3142
    %v3460 = vpop.f32.mrb[0].mxu0
    %v3461 = vadd.f32 %v3199, %v3460
    %v3462 = vpop.f32.mrb[0].mxu0
    %v3463 = vadd.f32 %v3203, %v3462
    %v3464 = vpop.f32.mrb[0].mxu0
    %v3465 = vadd.f32 %v3199, %v3464
    %v3466 = vpop.f32.mrb[0].mxu0
    %v3467 = vadd.f32 %v3203, %v3466
    %3468 = vmatprep.mubr.bf16.mxu0 %v3145
    %3469 = vmatmul.mubr.bf16.gmra.mrb[0].mxu0 %v3144
    %v3470 = vpop.f32.mrb[0].mxu0
    %v3471 = vadd.f32 %v3199, %v3470
    %v3472 = vpop.f32.mrb[0].mxu0
    %v3473 = vadd.f32 %v3203, %v3472
    %v3474 = vpop.f32.mrb[0].mxu0
    %v3475 = vadd.f32 %v3199, %v3474
    %v3476 = vpop.f32.mrb[0].mxu0
    %v3477 = vadd.f32 %v3203, %v3476
    %3478 = vmatprep.mubr.bf16.mxu0 %v3147
    %3479 = vmatmul.mubr.bf16.gmra.mrb[0].mxu0 %v3146
    %v3480 = vpop.f32.mrb[0].mxu0
    %v3481 = vadd.f32 %v3199, %v3480
    %v3482 = vpop.f32.mrb[0].mxu0
    %v3483 = vadd.f32 %v3203, %v3482
    %v3484 = vpop.f32.mrb[0].mxu0
    %v3485 = vadd.f32 %v3199, %v3484
    %v3486 = vpop.f32.mrb[0].mxu0
    %v3487 = vadd.f32 %v3203, %v3486
    %3488 = vmatprep.mubr.bf16.mxu0 %v3149
    %3489 = vmatmul.mubr.bf16.gmra.mrb[0].mxu0 %v3148
    %v3490 = vpop.f32.mrb[0].mxu0
    %v3491 = vadd.f32 %v3199, %v3490
    %v3492 = vpop.f32.mrb[0].mxu0
    %v3493 = vadd.f32 %v3203, %v3492
    %v3494 = vpop.f32.mrb[0].mxu0
    %v3495 = vadd.f32 %v3199, %v3494
    %v3496 = vpop.f32.mrb[0].mxu0
    %v3497 = vadd.f32 %v3203, %v3496
    %3498 = vmatprep.mubr.bf16.mxu0 %v3151
    %3499 = vmatmul.mubr.bf16.gmra.mrb[0].mxu0 %v3150
    %v3500 = vpop.f32.mrb[0].mxu0
    %v3501 = vadd.f32 %v3199, %v3500
    %v3502 = vpop.f32.mrb[0].mxu0
    %v3503 = vadd.f32 %v3203, %v3502
    %v3504 = vpop.f32.mrb[0].mxu0
    %v3505 = vadd.f32 %v3199, %v3504
    %v3506 = vpop.f32.mrb[0].mxu0
    %v3507 = vadd.f32 %v3203, %v3506
    %3508 = vmatprep.mubr.bf16.mxu0 %v3153
    %3509 = vmatmul.mubr.bf16.gmra.mrb[0].mxu0 %v3152
    %v3510 = vpop.f32.mrb[0].mxu0
    %v3511 = vadd.f32 %v3199, %v3510
    %v3512 = vpop.f32.mrb[0].mxu0
    %v3513 = vadd.f32 %v3203, %v3512
    %v3514 = vpop.f32.mrb[0].mxu0
    %v3515 = vadd.f32 %v3199, %v3514
    %v3516 = vpop.f32.mrb[0].mxu0
    %v3517 = vadd.f32 %v3203, %v3516
    %3518 = vmatprep.mubr.bf16.mxu0 %v3155
    %3519 = vmatmul.mubr.bf16.gmra.mrb[0].mxu0 %v3154
    %v3520 = vpop.f32.mrb[0].mxu0
    %v3521 = vadd.f32 %v3199, %v3520
    %v3522 = vpop.f32.mrb[0].mxu0
    %v3523 = vadd.f32 %v3203, %v3522
    %v3524 = vpop.f32.mrb[0].mxu0
    %v3525 = vadd.f32 %v3199, %v3524
    %v3526 = vpop.f32.mrb[0].mxu0
    %v3527 = vadd.f32 %v3203, %v3526
    %3528 = vmatprep.mubr.bf16.mxu0 %v3157
    %3529 = vmatmul.mubr.bf16.gmra.mrb[0].mxu0 %v3156
    %v3530 = vpop.f32.mrb[0].mxu0
    %v3531 = vadd.f32 %v3199, %v3530
    %v3532 = vpop.f32.mrb[0].mxu0
    %v3533 = vadd.f32 %v3203, %v3532
    %v3534 = vpop.f32.mrb[0].mxu0
    %v3535 = vadd.f32 %v3199, %v3534
    %v3536 = vpop.f32.mrb[0].mxu0
    %v3537 = vadd.f32 %v3203, %v3536
    %3538 = vmatprep.mubr.bf16.mxu0 %v3159
    %3539 = vmatmul.mubr.bf16.gmra.mrb[0].mxu0 %v3158
    %v3540 = vpop.f32.mrb[0].mxu0
    %v3541 = vadd.f32 %v3199, %v3540
    %v3542 = vpop.f32.mrb[0].mxu0
    %v3543 = vadd.f32 %v3203, %v3542
    %v3544 = vpop.f32.mrb[0].mxu0
    %v3545 = vadd.f32 %v3199, %v3544
    %v3546 = vpop.f32.mrb[0].mxu0
    %v3547 = vadd.f32 %v3203, %v3546
    %3548 = vmatprep.mubr.bf16.mxu0 %v3161
    %3549 = vmatmul.mubr.bf16.gmra.mrb[0].mxu0 %v3160
    %v3550 = vpop.f32.mrb[0].mxu0
    %v3551 = vadd.f32 %v3199, %v3550
    %v3552 = vpop.f32.mrb[0].mxu0
    %v3553 = vadd.f32 %v3203, %v3552
    %v3554 = vpop.f32.mrb[0].mxu0
    %v3555 = vadd.f32 %v3199, %v3554
    %v3556 = vpop.f32.mrb[0].mxu0
    %v3557 = vadd.f32 %v3203, %v3556
    %3558 = vdwg.mxu0
    %v3559 = vmax.f32 %v3401, 0.0
    %v3560 = vmax.f32 %v3403, 0.0
    %v3561 = vmax.f32 %v3405, 0.0
    %v3562 = vmax.f32 %v3407, 0.0
    %v3563 = vmax.f32 %v3411, 0.0
    %v3564 = vmax.f32 %v3413, 0.0
    %v3565 = vmax.f32 %v3415, 0.0
    %v3566 = vmax.f32 %v3417, 0.0
    %v3567 = vmax.f32 %v3421, 0.0
    %v3568 = vmax.f32 %v3423, 0.0
    %v3569 = vmax.f32 %v3425, 0.0
    %v3570 = vmax.f32 %v3427, 0.0
    %v3571 = vmax.f32 %v3431, 0.0
    %v3572 = vmax.f32 %v3433, 0.0
    %v3573 = vmax.f32 %v3435, 0.0
    %v3574 = vmax.f32 %v3437, 0.0
    %v3575 = vmax.f32 %v3441, 0.0
    %v3576 = vmax.f32 %v3443, 0.0
    %v3577 = vmax.f32 %v3445, 0.0
    %v3578 = vmax.f32 %v3447, 0.0
    %v3579 = vmax.f32 %v3451, 0.0
    %v3580 = vmax.f32 %v3453, 0.0
    %v3581 = vmax.f32 %v3455, 0.0
    %v3582 = vmax.f32 %v3457, 0.0
    %v3583 = vmax.f32 %v3461, 0.0
    %v3584 = vmax.f32 %v3463, 0.0
    %v3585 = vmax.f32 %v3465, 0.0
    %v3586 = vmax.f32 %v3467, 0.0
    %v3587 = vmax.f32 %v3471, 0.0
    %v3588 = vmax.f32 %v3473, 0.0
    %v3589 = vmax.f32 %v3475, 0.0
    %v3590 = vmax.f32 %v3477, 0.0
    %v3591 = vmax.f32 %v3481, 0.0
    %v3592 = vmax.f32 %v3483, 0.0
    %v3593 = vmax.f32 %v3485, 0.0
    %v3594 = vmax.f32 %v3487, 0.0
    %v3595 = vmax.f32 %v3491, 0.0
    %v3596 = vmax.f32 %v3493, 0.0
    %v3597 = vmax.f32 %v3495, 0.0
    %v3598 = vmax.f32 %v3497, 0.0
    %v3599 = vmax.f32 %v3501, 0.0
    %v3600 = vmax.f32 %v3503, 0.0
    %v3601 = vmax.f32 %v3505, 0.0
    %v3602 = vmax.f32 %v3507, 0.0
    %v3603 = vmax.f32 %v3511, 0.0
    %v3604 = vmax.f32 %v3513, 0.0
    %v3605 = vmax.f32 %v3515, 0.0
    %v3606 = vmax.f32 %v3517, 0.0
    %v3607 = vmax.f32 %v3521, 0.0
    %v3608 = vmax.f32 %v3523, 0.0
    %v3609 = vmax.f32 %v3525, 0.0
    %v3610 = vmax.f32 %v3527, 0.0
    %v3611 = vmax.f32 %v3531, 0.0
    %v3612 = vmax.f32 %v3533, 0.0
    %v3613 = vmax.f32 %v3535, 0.0
    %v3614 = vmax.f32 %v3537, 0.0
    %v3615 = vmax.f32 %v3541, 0.0
    %v3616 = vmax.f32 %v3543, 0.0
    %v3617 = vmax.f32 %v3545, 0.0
    %v3618 = vmax.f32 %v3547, 0.0
    %v3619 = vmax.f32 %v3551, 0.0
    %v3620 = vmax.f32 %v3553, 0.0
    %v3621 = vmax.f32 %v3555, 0.0
    %v3622 = vmax.f32 %v3557, 0.0
    %v3623 = vpack.c.bf16 %v3561, %v3559
    %v3624 = vpack.c.bf16 %v3562, %v3560
    %v3625 = vpack.c.bf16 %v3565, %v3563
    %v3626 = vpack.c.bf16 %v3566, %v3564
    %v3627 = vpack.c.bf16 %v3569, %v3567
    %v3628 = vpack.c.bf16 %v3570, %v3568
    %v3629 = vpack.c.bf16 %v3573, %v3571
    %v3630 = vpack.c.bf16 %v3574, %v3572
    %v3631 = vpack.c.bf16 %v3577, %v3575
    %v3632 = vpack.c.bf16 %v3578, %v3576
    %v3633 = vpack.c.bf16 %v3581, %v3579
    %v3634 = vpack.c.bf16 %v3582, %v3580
    %v3635 = vpack.c.bf16 %v3585, %v3583
    %v3636 = vpack.c.bf16 %v3586, %v3584
    %v3637 = vpack.c.bf16 %v3589, %v3587
    %v3638 = vpack.c.bf16 %v3590, %v3588
    %v3639 = vpack.c.bf16 %v3593, %v3591
    %v3640 = vpack.c.bf16 %v3594, %v3592
    %v3641 = vpack.c.bf16 %v3597, %v3595
    %v3642 = vpack.c.bf16 %v3598, %v3596
    %v3643 = vpack.c.bf16 %v3601, %v3599
    %v3644 = vpack.c.bf16 %v3602, %v3600
    %v3645 = vpack.c.bf16 %v3605, %v3603
    %v3646 = vpack.c.bf16 %v3606, %v3604
    %v3647 = vpack.c.bf16 %v3609, %v3607
    %v3648 = vpack.c.bf16 %v3610, %v3608
    %v3649 = vpack.c.bf16 %v3613, %v3611
    %v3650 = vpack.c.bf16 %v3614, %v3612
    %v3651 = vpack.c.bf16 %v3617, %v3615
    %v3652 = vpack.c.bf16 %v3618, %v3616
    %v3653 = vpack.c.bf16 %v3621, %v3619
    %v3654 = vpack.c.bf16 %v3622, %v3620
    %v3655 = vld [vmem:[%s5] sm:$0xff]
    %v3656 = vld [vmem:[%s5 + $0x8] sm:$0xff]
    %v3657 = vld [vmem:[%s5 + $0x10] sm:$0xff]
    %v3658 = vld [vmem:[%s5 + $0x18] sm:$0xff]
    %v3659 = vld [vmem:[%s5 + $0x20] sm:$0xff]
    %v3660 = vld [vmem:[%s5 + $0x28] sm:$0xff]
    %v3661 = vld [vmem:[%s5 + $0x30] sm:$0xff]
    %v3662 = vld [vmem:[%s5 + $0x38] sm:$0xff]
    %v3663 = vld [vmem:[%s5 + $0x40] sm:$0xff]
    %v3664 = vld [vmem:[%s5 + $0x48] sm:$0xff]
    %v3665 = vld [vmem:[%s5 + $0x50] sm:$0xff]
    %v3666 = vld [vmem:[%s5 + $0x58] sm:$0xff]
    %v3667 = vld [vmem:[%s5 + $0x60] sm:$0xff]
    %v3668 = vld [vmem:[%s5 + $0x68] sm:$0xff]
    %v3669 = vld [vmem:[%s5 + $0x70] sm:$0xff]
    %v3670 = vld [vmem:[%s5 + $0x78] sm:$0xff]
    %v3671 = vld [vmem:[%s5 + $0x80] sm:$0xff]
    %v3672 = vld [vmem:[%s5 + $0x88] sm:$0xff]
    %v3673 = vld [vmem:[%s5 + $0x90] sm:$0xff]
    %v3674 = vld [vmem:[%s5 + $0x98] sm:$0xff]
    %v3675 = vld [vmem:[%s5 + $0xa0] sm:$0xff]
    %v3676 = vld [vmem:[%s5 + $0xa8] sm:$0xff]
    %v3677 = vld [vmem:[%s5 + $0xb0] sm:$0xff]
    %v3678 = vld [vmem:[%s5 + $0xb8] sm:$0xff]
    %v3679 = vld [vmem:[%s5 + $0xc0] sm:$0xff]
    %v3680 = vld [vmem:[%s5 + $0xc8] sm:$0xff]
    %v3681 = vld [vmem:[%s5 + $0xd0] sm:$0xff]
    %v3682 = vld [vmem:[%s5 + $0xd8] sm:$0xff]
    %v3683 = vld [vmem:[%s5 + $0xe0] sm:$0xff]
    %v3684 = vld [vmem:[%s5 + $0xe8] sm:$0xff]
    %v3685 = vld [vmem:[%s5 + $0xf0] sm:$0xff]
    %v3686 = vld [vmem:[%s5 + $0xf8] sm:$0xff]
    %v3687 = vld [vmem:[%s6] sm:$0x3]
    %v3689 = vlaneseq
    %v3690 = vshrl.u32 %v3689, 7
    %v3691 = vsub.s32 0, %v3690
    %v3692 = vrot.slane %v3687, %v3691
    %v3693 = vlaneseq
    %v3694 = vshrl.u32 %v3693, 7
    %v3695 = vsub.s32 1, %v3694
    %v3696 = vrot.slane %v3687, %v3695
    %v3731 = vunpack.c.l.b16 %v3655
    %v3732 = vunpack.c.h.b16 %v3655
    %v3733 = vunpack.c.l.b16 %v3656
    %v3734 = vunpack.c.h.b16 %v3656
    %v3735 = vunpack.c.l.b16 %v3657
    %v3736 = vunpack.c.h.b16 %v3657
    %v3737 = vunpack.c.l.b16 %v3658
    %v3738 = vunpack.c.h.b16 %v3658
    %v3739 = vunpack.c.l.b16 %v3659
    %v3740 = vunpack.c.h.b16 %v3659
    %v3741 = vunpack.c.l.b16 %v3660
    %v3742 = vunpack.c.h.b16 %v3660
    %v3743 = vunpack.c.l.b16 %v3661
    %v3744 = vunpack.c.h.b16 %v3661
    %v3745 = vunpack.c.l.b16 %v3662
    %v3746 = vunpack.c.h.b16 %v3662
    %v3747 = vunpack.c.l.b16 %v3663
    %v3748 = vunpack.c.h.b16 %v3663
    %v3749 = vunpack.c.l.b16 %v3664
    %v3750 = vunpack.c.h.b16 %v3664
    %v3751 = vunpack.c.l.b16 %v3665
    %v3752 = vunpack.c.h.b16 %v3665
    %v3753 = vunpack.c.l.b16 %v3666
    %v3754 = vunpack.c.h.b16 %v3666
    %v3755 = vunpack.c.l.b16 %v3667
    %v3756 = vunpack.c.h.b16 %v3667
    %v3757 = vunpack.c.l.b16 %v3668
    %v3758 = vunpack.c.h.b16 %v3668
    %v3759 = vunpack.c.l.b16 %v3669
    %v3760 = vunpack.c.h.b16 %v3669
    %v3761 = vunpack.c.l.b16 %v3670
    %v3762 = vunpack.c.h.b16 %v3670
    %v3763 = vunpack.c.l.b16 %v3671
    %v3764 = vunpack.c.h.b16 %v3671
    %v3765 = vunpack.c.l.b16 %v3672
    %v3766 = vunpack.c.h.b16 %v3672
    %v3767 = vunpack.c.l.b16 %v3673
    %v3768 = vunpack.c.h.b16 %v3673
    %v3769 = vunpack.c.l.b16 %v3674
    %v3770 = vunpack.c.h.b16 %v3674
    %v3771 = vunpack.c.l.b16 %v3675
    %v3772 = vunpack.c.h.b16 %v3675
    %v3773 = vunpack.c.l.b16 %v3676
    %v3774 = vunpack.c.h.b16 %v3676
    %v3775 = vunpack.c.l.b16 %v3677
    %v3776 = vunpack.c.h.b16 %v3677
    %v3777 = vunpack.c.l.b16 %v3678
    %v3778 = vunpack.c.h.b16 %v3678
    %v3779 = vunpack.c.l.b16 %v3679
    %v3780 = vunpack.c.h.b16 %v3679
    %v3781 = vunpack.c.l.b16 %v3680
    %v3782 = vunpack.c.h.b16 %v3680
    %v3783 = vunpack.c.l.b16 %v3681
    %v3784 = vunpack.c.h.b16 %v3681
    %v3785 = vunpack.c.l.b16 %v3682
    %v3786 = vunpack.c.h.b16 %v3682
    %v3787 = vunpack.c.l.b16 %v3683
    %v3788 = vunpack.c.h.b16 %v3683
    %v3789 = vunpack.c.l.b16 %v3684
    %v3790 = vunpack.c.h.b16 %v3684
    %v3791 = vunpack.c.l.b16 %v3685
    %v3792 = vunpack.c.h.b16 %v3685
    %v3793 = vunpack.c.l.b16 %v3686
    %v3794 = vunpack.c.h.b16 %v3686
    %v3795 = vpack.c.b16 %v3733, %v3731
    %v3796 = vpack.c.b16 %v3734, %v3732
    %v3797 = vpack.c.b16 %v3737, %v3735
    %v3798 = vpack.c.b16 %v3738, %v3736
    %v3799 = vpack.c.b16 %v3741, %v3739
    %v3800 = vpack.c.b16 %v3742, %v3740
    %v3801 = vpack.c.b16 %v3745, %v3743
    %v3802 = vpack.c.b16 %v3746, %v3744
    %v3803 = vpack.c.b16 %v3749, %v3747
    %v3804 = vpack.c.b16 %v3750, %v3748
    %v3805 = vpack.c.b16 %v3753, %v3751
    %v3806 = vpack.c.b16 %v3754, %v3752
    %v3807 = vpack.c.b16 %v3757, %v3755
    %v3808 = vpack.c.b16 %v3758, %v3756
    %v3809 = vpack.c.b16 %v3761, %v3759
    %v3810 = vpack.c.b16 %v3762, %v3760
    %v3811 = vpack.c.b16 %v3765, %v3763
    %v3812 = vpack.c.b16 %v3766, %v3764
    %v3813 = vpack.c.b16 %v3769, %v3767
    %v3814 = vpack.c.b16 %v3770, %v3768
    %v3815 = vpack.c.b16 %v3773, %v3771
    %v3816 = vpack.c.b16 %v3774, %v3772
    %v3817 = vpack.c.b16 %v3777, %v3775
    %v3818 = vpack.c.b16 %v3778, %v3776
    %v3819 = vpack.c.b16 %v3781, %v3779
    %v3820 = vpack.c.b16 %v3782, %v3780
    %v3821 = vpack.c.b16 %v3785, %v3783
    %v3822 = vpack.c.b16 %v3786, %v3784
    %v3823 = vpack.c.b16 %v3789, %v3787
    %v3824 = vpack.c.b16 %v3790, %v3788
    %v3825 = vpack.c.b16 %v3793, %v3791
    %v3826 = vpack.c.b16 %v3794, %v3792
    %3859 = vmatprep.subr.bf16.mxu0 %v3796
    %3860 = vmatpush1.bf16.msra.mxu0 %v3795
    %3861 = vmatprep.subr.bf16.mxu0 %v3798
    %3862 = vmatpush1.bf16.msra.mxu0 %v3797
    %3863 = vmatprep.subr.bf16.mxu0 %v3800
    %3864 = vmatpush1.bf16.msra.mxu0 %v3799
    %3865 = vmatprep.subr.bf16.mxu0 %v3802
    %3866 = vmatpush1.bf16.msra.mxu0 %v3801
    %3867 = vmatprep.subr.bf16.mxu0 %v3804
    %3868 = vmatpush1.bf16.msra.mxu0 %v3803
    %3869 = vmatprep.subr.bf16.mxu0 %v3806
    %3870 = vmatpush1.bf16.msra.mxu0 %v3805
    %3871 = vmatprep.subr.bf16.mxu0 %v3808
    %3872 = vmatpush1.bf16.msra.mxu0 %v3807
    %3873 = vmatprep.subr.bf16.mxu0 %v3810
    %3874 = vmatpush1.bf16.msra.mxu0 %v3809
    %3875 = vmatprep.subr.bf16.mxu0 %v3812
    %3876 = vmatpush1.bf16.msra.mxu0 %v3811
    %3877 = vmatprep.subr.bf16.mxu0 %v3814
    %3878 = vmatpush1.bf16.msra.mxu0 %v3813
    %3879 = vmatprep.subr.bf16.mxu0 %v3816
    %3880 = vmatpush1.bf16.msra.mxu0 %v3815
    %3881 = vmatprep.subr.bf16.mxu0 %v3818
    %3882 = vmatpush1.bf16.msra.mxu0 %v3817
    %3883 = vmatprep.subr.bf16.mxu0 %v3820
    %3884 = vmatpush1.bf16.msra.mxu0 %v3819
    %3885 = vmatprep.subr.bf16.mxu0 %v3822
    %3886 = vmatpush1.bf16.msra.mxu0 %v3821
    %3887 = vmatprep.subr.bf16.mxu0 %v3824
    %3888 = vmatpush1.bf16.msra.mxu0 %v3823
    %3889 = vmatprep.subr.bf16.mxu0 %v3826
    %3890 = vmatpush1.bf16.msra.mxu0 %v3825
    %3891 = vmatprep.mubr.bf16.mxu0 %v3624
    %3892 = vmatmul.mubr.bf16.gmra.mrb[0].mxu0 %v3623
    %v3893 = vpop.f32.mrb[0].mxu0
    %v3894 = vadd.f32 %v3692, %v3893
    %v3895 = vpop.f32.mrb[0].mxu0
    %v3896 = vadd.f32 %v3696, %v3895
    %v3897 = vpop.f32.mrb[0].mxu0
    %v3898 = vadd.f32 %v3692, %v3897
    %v3899 = vpop.f32.mrb[0].mxu0
    %v3900 = vadd.f32 %v3696, %v3899
    %3901 = vmatprep.mubr.bf16.mxu0 %v3626
    %3902 = vmatmul.mubr.bf16.gmra.mrb[0].mxu0 %v3625
    %v3903 = vpop.f32.mrb[0].mxu0
    %v3904 = vadd.f32 %v3692, %v3903
    %v3905 = vpop.f32.mrb[0].mxu0
    %v3906 = vadd.f32 %v3696, %v3905
    %v3907 = vpop.f32.mrb[0].mxu0
    %v3908 = vadd.f32 %v3692, %v3907
    %v3909 = vpop.f32.mrb[0].mxu0
    %v3910 = vadd.f32 %v3696, %v3909
    %3911 = vmatprep.mubr.bf16.mxu0 %v3628
    %3912 = vmatmul.mubr.bf16.gmra.mrb[0].mxu0 %v3627
    %v3913 = vpop.f32.mrb[0].mxu0
    %v3914 = vadd.f32 %v3692, %v3913
    %v3915 = vpop.f32.mrb[0].mxu0
    %v3916 = vadd.f32 %v3696, %v3915
    %v3917 = vpop.f32.mrb[0].mxu0
    %v3918 = vadd.f32 %v3692, %v3917
    %v3919 = vpop.f32.mrb[0].mxu0
    %v3920 = vadd.f32 %v3696, %v3919
    %3921 = vmatprep.mubr.bf16.mxu0 %v3630
    %3922 = vmatmul.mubr.bf16.gmra.mrb[0].mxu0 %v3629
    %v3923 = vpop.f32.mrb[0].mxu0
    %v3924 = vadd.f32 %v3692, %v3923
    %v3925 = vpop.f32.mrb[0].mxu0
    %v3926 = vadd.f32 %v3696, %v3925
    %v3927 = vpop.f32.mrb[0].mxu0
    %v3928 = vadd.f32 %v3692, %v3927
    %v3929 = vpop.f32.mrb[0].mxu0
    %v3930 = vadd.f32 %v3696, %v3929
    %3931 = vmatprep.mubr.bf16.mxu0 %v3632
    %3932 = vmatmul.mubr.bf16.gmra.mrb[0].mxu0 %v3631
    %v3933 = vpop.f32.mrb[0].mxu0
    %v3934 = vadd.f32 %v3692, %v3933
    %v3935 = vpop.f32.mrb[0].mxu0
    %v3936 = vadd.f32 %v3696, %v3935
    %v3937 = vpop.f32.mrb[0].mxu0
    %v3938 = vadd.f32 %v3692, %v3937
    %v3939 = vpop.f32.mrb[0].mxu0
    %v3940 = vadd.f32 %v3696, %v3939
    %3941 = vmatprep.mubr.bf16.mxu0 %v3634
    %3942 = vmatmul.mubr.bf16.gmra.mrb[0].mxu0 %v3633
    %v3943 = vpop.f32.mrb[0].mxu0
    %v3944 = vadd.f32 %v3692, %v3943
    %v3945 = vpop.f32.mrb[0].mxu0
    %v3946 = vadd.f32 %v3696, %v3945
    %v3947 = vpop.f32.mrb[0].mxu0
    %v3948 = vadd.f32 %v3692, %v3947
    %v3949 = vpop.f32.mrb[0].mxu0
    %v3950 = vadd.f32 %v3696, %v3949
    %3951 = vmatprep.mubr.bf16.mxu0 %v3636
    %3952 = vmatmul.mubr.bf16.gmra.mrb[0].mxu0 %v3635
    %v3953 = vpop.f32.mrb[0].mxu0
    %v3954 = vadd.f32 %v3692, %v3953
    %v3955 = vpop.f32.mrb[0].mxu0
    %v3956 = vadd.f32 %v3696, %v3955
    %v3957 = vpop.f32.mrb[0].mxu0
    %v3958 = vadd.f32 %v3692, %v3957
    %v3959 = vpop.f32.mrb[0].mxu0
    %v3960 = vadd.f32 %v3696, %v3959
    %3961 = vmatprep.mubr.bf16.mxu0 %v3638
    %3962 = vmatmul.mubr.bf16.gmra.mrb[0].mxu0 %v3637
    %v3963 = vpop.f32.mrb[0].mxu0
    %v3964 = vadd.f32 %v3692, %v3963
    %v3965 = vpop.f32.mrb[0].mxu0
    %v3966 = vadd.f32 %v3696, %v3965
    %v3967 = vpop.f32.mrb[0].mxu0
    %v3968 = vadd.f32 %v3692, %v3967
    %v3969 = vpop.f32.mrb[0].mxu0
    %v3970 = vadd.f32 %v3696, %v3969
    %3971 = vmatprep.mubr.bf16.mxu0 %v3640
    %3972 = vmatmul.mubr.bf16.gmra.mrb[0].mxu0 %v3639
    %v3973 = vpop.f32.mrb[0].mxu0
    %v3974 = vadd.f32 %v3692, %v3973
    %v3975 = vpop.f32.mrb[0].mxu0
    %v3976 = vadd.f32 %v3696, %v3975
    %v3977 = vpop.f32.mrb[0].mxu0
    %v3978 = vadd.f32 %v3692, %v3977
    %v3979 = vpop.f32.mrb[0].mxu0
    %v3980 = vadd.f32 %v3696, %v3979
    %3981 = vmatprep.mubr.bf16.mxu0 %v3642
    %3982 = vmatmul.mubr.bf16.gmra.mrb[0].mxu0 %v3641
    %v3983 = vpop.f32.mrb[0].mxu0
    %v3984 = vadd.f32 %v3692, %v3983
    %v3985 = vpop.f32.mrb[0].mxu0
    %v3986 = vadd.f32 %v3696, %v3985
    %v3987 = vpop.f32.mrb[0].mxu0
    %v3988 = vadd.f32 %v3692, %v3987
    %v3989 = vpop.f32.mrb[0].mxu0
    %v3990 = vadd.f32 %v3696, %v3989
    %3991 = vmatprep.mubr.bf16.mxu0 %v3644
    %3992 = vmatmul.mubr.bf16.gmra.mrb[0].mxu0 %v3643
    %v3993 = vpop.f32.mrb[0].mxu0
    %v3994 = vadd.f32 %v3692, %v3993
    %v3995 = vpop.f32.mrb[0].mxu0
    %v3996 = vadd.f32 %v3696, %v3995
    %v3997 = vpop.f32.mrb[0].mxu0
    %v3998 = vadd.f32 %v3692, %v3997
    %v3999 = vpop.f32.mrb[0].mxu0
    %v4000 = vadd.f32 %v3696, %v3999
    %4001 = vmatprep.mubr.bf16.mxu0 %v3646
    %4002 = vmatmul.mubr.bf16.gmra.mrb[0].mxu0 %v3645
    %v4003 = vpop.f32.mrb[0].mxu0
    %v4004 = vadd.f32 %v3692, %v4003
    %v4005 = vpop.f32.mrb[0].mxu0
    %v4006 = vadd.f32 %v3696, %v4005
    %v4007 = vpop.f32.mrb[0].mxu0
    %v4008 = vadd.f32 %v3692, %v4007
    %v4009 = vpop.f32.mrb[0].mxu0
    %v4010 = vadd.f32 %v3696, %v4009
    %4011 = vmatprep.mubr.bf16.mxu0 %v3648
    %4012 = vmatmul.mubr.bf16.gmra.mrb[0].mxu0 %v3647
    %v4013 = vpop.f32.mrb[0].mxu0
    %v4014 = vadd.f32 %v3692, %v4013
    %v4015 = vpop.f32.mrb[0].mxu0
    %v4016 = vadd.f32 %v3696, %v4015
    %v4017 = vpop.f32.mrb[0].mxu0
    %v4018 = vadd.f32 %v3692, %v4017
    %v4019 = vpop.f32.mrb[0].mxu0
    %v4020 = vadd.f32 %v3696, %v4019
    %4021 = vmatprep.mubr.bf16.mxu0 %v3650
    %4022 = vmatmul.mubr.bf16.gmra.mrb[0].mxu0 %v3649
    %v4023 = vpop.f32.mrb[0].mxu0
    %v4024 = vadd.f32 %v3692, %v4023
    %v4025 = vpop.f32.mrb[0].mxu0
    %v4026 = vadd.f32 %v3696, %v4025
    %v4027 = vpop.f32.mrb[0].mxu0
    %v4028 = vadd.f32 %v3692, %v4027
    %v4029 = vpop.f32.mrb[0].mxu0
    %v4030 = vadd.f32 %v3696, %v4029
    %4031 = vmatprep.mubr.bf16.mxu0 %v3652
    %4032 = vmatmul.mubr.bf16.gmra.mrb[0].mxu0 %v3651
    %v4033 = vpop.f32.mrb[0].mxu0
    %v4034 = vadd.f32 %v3692, %v4033
    %v4035 = vpop.f32.mrb[0].mxu0
    %v4036 = vadd.f32 %v3696, %v4035
    %v4037 = vpop.f32.mrb[0].mxu0
    %v4038 = vadd.f32 %v3692, %v4037
    %v4039 = vpop.f32.mrb[0].mxu0
    %v4040 = vadd.f32 %v3696, %v4039
    %4041 = vmatprep.mubr.bf16.mxu0 %v3654
    %4042 = vmatmul.mubr.bf16.gmra.mrb[0].mxu0 %v3653
    %v4043 = vpop.f32.mrb[0].mxu0
    %v4044 = vadd.f32 %v3692, %v4043
    %v4045 = vpop.f32.mrb[0].mxu0
    %v4046 = vadd.f32 %v3696, %v4045
    %v4047 = vpop.f32.mrb[0].mxu0
    %v4048 = vadd.f32 %v3692, %v4047
    %v4049 = vpop.f32.mrb[0].mxu0
    %v4050 = vadd.f32 %v3696, %v4049
    %4051 = vdwg.mxu0
    %v4052 = vmax.f32 %v3894, 0.0
    %v4053 = vmax.f32 %v3896, 0.0
    %v4054 = vmax.f32 %v3898, 0.0
    %v4055 = vmax.f32 %v3900, 0.0
    %v4056 = vmax.f32 %v3904, 0.0
    %v4057 = vmax.f32 %v3906, 0.0
    %v4058 = vmax.f32 %v3908, 0.0
    %v4059 = vmax.f32 %v3910, 0.0
    %v4060 = vmax.f32 %v3914, 0.0
    %v4061 = vmax.f32 %v3916, 0.0
    %v4062 = vmax.f32 %v3918, 0.0
    %v4063 = vmax.f32 %v3920, 0.0
    %v4064 = vmax.f32 %v3924, 0.0
    %v4065 = vmax.f32 %v3926, 0.0
    %v4066 = vmax.f32 %v3928, 0.0
    %v4067 = vmax.f32 %v3930, 0.0
    %v4068 = vmax.f32 %v3934, 0.0
    %v4069 = vmax.f32 %v3936, 0.0
    %v4070 = vmax.f32 %v3938, 0.0
    %v4071 = vmax.f32 %v3940, 0.0
    %v4072 = vmax.f32 %v3944, 0.0
    %v4073 = vmax.f32 %v3946, 0.0
    %v4074 = vmax.f32 %v3948, 0.0
    %v4075 = vmax.f32 %v3950, 0.0
    %v4076 = vmax.f32 %v3954, 0.0
    %v4077 = vmax.f32 %v3956, 0.0
    %v4078 = vmax.f32 %v3958, 0.0
    %v4079 = vmax.f32 %v3960, 0.0
    %v4080 = vmax.f32 %v3964, 0.0
    %v4081 = vmax.f32 %v3966, 0.0
    %v4082 = vmax.f32 %v3968, 0.0
    %v4083 = vmax.f32 %v3970, 0.0
    %v4084 = vmax.f32 %v3974, 0.0
    %v4085 = vmax.f32 %v3976, 0.0
    %v4086 = vmax.f32 %v3978, 0.0
    %v4087 = vmax.f32 %v3980, 0.0
    %v4088 = vmax.f32 %v3984, 0.0
    %v4089 = vmax.f32 %v3986, 0.0
    %v4090 = vmax.f32 %v3988, 0.0
    %v4091 = vmax.f32 %v3990, 0.0
    %v4092 = vmax.f32 %v3994, 0.0
    %v4093 = vmax.f32 %v3996, 0.0
    %v4094 = vmax.f32 %v3998, 0.0
    %v4095 = vmax.f32 %v4000, 0.0
    %v4096 = vmax.f32 %v4004, 0.0
    %v4097 = vmax.f32 %v4006, 0.0
    %v4098 = vmax.f32 %v4008, 0.0
    %v4099 = vmax.f32 %v4010, 0.0
    %v4100 = vmax.f32 %v4014, 0.0
    %v4101 = vmax.f32 %v4016, 0.0
    %v4102 = vmax.f32 %v4018, 0.0
    %v4103 = vmax.f32 %v4020, 0.0
    %v4104 = vmax.f32 %v4024, 0.0
    %v4105 = vmax.f32 %v4026, 0.0
    %v4106 = vmax.f32 %v4028, 0.0
    %v4107 = vmax.f32 %v4030, 0.0
    %v4108 = vmax.f32 %v4034, 0.0
    %v4109 = vmax.f32 %v4036, 0.0
    %v4110 = vmax.f32 %v4038, 0.0
    %v4111 = vmax.f32 %v4040, 0.0
    %v4112 = vmax.f32 %v4044, 0.0
    %v4113 = vmax.f32 %v4046, 0.0
    %v4114 = vmax.f32 %v4048, 0.0
    %v4115 = vmax.f32 %v4050, 0.0
    %v4116 = vpack.c.bf16 %v4054, %v4052
    %v4117 = vpack.c.bf16 %v4055, %v4053
    %v4118 = vpack.c.bf16 %v4058, %v4056
    %v4119 = vpack.c.bf16 %v4059, %v4057
    %v4120 = vpack.c.bf16 %v4062, %v4060
    %v4121 = vpack.c.bf16 %v4063, %v4061
    %v4122 = vpack.c.bf16 %v4066, %v4064
    %v4123 = vpack.c.bf16 %v4067, %v4065
    %v4124 = vpack.c.bf16 %v4070, %v4068
    %v4125 = vpack.c.bf16 %v4071, %v4069
    %v4126 = vpack.c.bf16 %v4074, %v4072
    %v4127 = vpack.c.bf16 %v4075, %v4073
    %v4128 = vpack.c.bf16 %v4078, %v4076
    %v4129 = vpack.c.bf16 %v4079, %v4077
    %v4130 = vpack.c.bf16 %v4082, %v4080
    %v4131 = vpack.c.bf16 %v4083, %v4081
    %v4132 = vpack.c.bf16 %v4086, %v4084
    %v4133 = vpack.c.bf16 %v4087, %v4085
    %v4134 = vpack.c.bf16 %v4090, %v4088
    %v4135 = vpack.c.bf16 %v4091, %v4089
    %v4136 = vpack.c.bf16 %v4094, %v4092
    %v4137 = vpack.c.bf16 %v4095, %v4093
    %v4138 = vpack.c.bf16 %v4098, %v4096
    %v4139 = vpack.c.bf16 %v4099, %v4097
    %v4140 = vpack.c.bf16 %v4102, %v4100
    %v4141 = vpack.c.bf16 %v4103, %v4101
    %v4142 = vpack.c.bf16 %v4106, %v4104
    %v4143 = vpack.c.bf16 %v4107, %v4105
    %v4144 = vpack.c.bf16 %v4110, %v4108
    %v4145 = vpack.c.bf16 %v4111, %v4109
    %v4146 = vpack.c.bf16 %v4114, %v4112
    %v4147 = vpack.c.bf16 %v4115, %v4113
    %v4148 = vld [vmem:[#allocation3] sm:$0xff]
    %v4149 = vld [vmem:[#allocation3 + $0x8] sm:$0xff]
    %v4150 = vld [vmem:[#allocation3 + $0x10] sm:$0xff]
    %v4151 = vld [vmem:[#allocation3 + $0x18] sm:$0xff]
    %v4152 = vld [vmem:[#allocation3 + $0x20] sm:$0xff]
    %v4153 = vld [vmem:[#allocation3 + $0x28] sm:$0xff]
    %v4154 = vld [vmem:[#allocation3 + $0x30] sm:$0xff]
    %v4155 = vld [vmem:[#allocation3 + $0x38] sm:$0xff]
    %v4156 = vld [vmem:[#allocation3 + $0x40] sm:$0xff]
    %v4157 = vld [vmem:[#allocation3 + $0x48] sm:$0xff]
    %v4158 = vld [vmem:[#allocation3 + $0x50] sm:$0xff]
    %v4159 = vld [vmem:[#allocation3 + $0x58] sm:$0xff]
    %v4160 = vld [vmem:[#allocation3 + $0x60] sm:$0xff]
    %v4161 = vld [vmem:[#allocation3 + $0x68] sm:$0xff]
    %v4162 = vld [vmem:[#allocation3 + $0x70] sm:$0xff]
    %v4163 = vld [vmem:[#allocation3 + $0x78] sm:$0xff]
    %v4164 = vld [vmem:[#allocation3 + $0x80] sm:$0xff]
    %v4165 = vld [vmem:[#allocation3 + $0x88] sm:$0xff]
    %v4166 = vld [vmem:[#allocation3 + $0x90] sm:$0xff]
    %v4167 = vld [vmem:[#allocation3 + $0x98] sm:$0xff]
    %v4168 = vld [vmem:[#allocation3 + $0xa0] sm:$0xff]
    %v4169 = vld [vmem:[#allocation3 + $0xa8] sm:$0xff]
    %v4170 = vld [vmem:[#allocation3 + $0xb0] sm:$0xff]
    %v4171 = vld [vmem:[#allocation3 + $0xb8] sm:$0xff]
    %v4172 = vld [vmem:[#allocation3 + $0xc0] sm:$0xff]
    %v4173 = vld [vmem:[#allocation3 + $0xc8] sm:$0xff]
    %v4174 = vld [vmem:[#allocation3 + $0xd0] sm:$0xff]
    %v4175 = vld [vmem:[#allocation3 + $0xd8] sm:$0xff]
    %v4176 = vld [vmem:[#allocation3 + $0xe0] sm:$0xff]
    %v4177 = vld [vmem:[#allocation3 + $0xe8] sm:$0xff]
    %v4178 = vld [vmem:[#allocation3 + $0xf0] sm:$0xff]
    %v4179 = vld [vmem:[#allocation3 + $0xf8] sm:$0xff]
    %v4180 = vld [vmem:[%s8] sm:$0x3]
    %v4182 = vlaneseq
    %v4183 = vshrl.u32 %v4182, 7
    %v4184 = vsub.s32 0, %v4183
    %v4185 = vrot.slane %v4180, %v4184
    %v4186 = vlaneseq
    %v4187 = vshrl.u32 %v4186, 7
    %v4188 = vsub.s32 1, %v4187
    %v4189 = vrot.slane %v4180, %v4188
    %v4224 = vunpack.c.l.b16 %v4148
    %v4225 = vunpack.c.h.b16 %v4148
    %v4226 = vunpack.c.l.b16 %v4149
    %v4227 = vunpack.c.h.b16 %v4149
    %v4228 = vunpack.c.l.b16 %v4150
    %v4229 = vunpack.c.h.b16 %v4150
    %v4230 = vunpack.c.l.b16 %v4151
    %v4231 = vunpack.c.h.b16 %v4151
    %v4232 = vunpack.c.l.b16 %v4152
    %v4233 = vunpack.c.h.b16 %v4152
    %v4234 = vunpack.c.l.b16 %v4153
    %v4235 = vunpack.c.h.b16 %v4153
    %v4236 = vunpack.c.l.b16 %v4154
    %v4237 = vunpack.c.h.b16 %v4154
    %v4238 = vunpack.c.l.b16 %v4155
    %v4239 = vunpack.c.h.b16 %v4155
    %v4240 = vunpack.c.l.b16 %v4156
    %v4241 = vunpack.c.h.b16 %v4156
    %v4242 = vunpack.c.l.b16 %v4157
    %v4243 = vunpack.c.h.b16 %v4157
    %v4244 = vunpack.c.l.b16 %v4158
    %v4245 = vunpack.c.h.b16 %v4158
    %v4246 = vunpack.c.l.b16 %v4159
    %v4247 = vunpack.c.h.b16 %v4159
    %v4248 = vunpack.c.l.b16 %v4160
    %v4249 = vunpack.c.h.b16 %v4160
    %v4250 = vunpack.c.l.b16 %v4161
    %v4251 = vunpack.c.h.b16 %v4161
    %v4252 = vunpack.c.l.b16 %v4162
    %v4253 = vunpack.c.h.b16 %v4162
    %v4254 = vunpack.c.l.b16 %v4163
    %v4255 = vunpack.c.h.b16 %v4163
    %v4256 = vunpack.c.l.b16 %v4164
    %v4257 = vunpack.c.h.b16 %v4164
    %v4258 = vunpack.c.l.b16 %v4165
    %v4259 = vunpack.c.h.b16 %v4165
    %v4260 = vunpack.c.l.b16 %v4166
    %v4261 = vunpack.c.h.b16 %v4166
    %v4262 = vunpack.c.l.b16 %v4167
    %v4263 = vunpack.c.h.b16 %v4167
    %v4264 = vunpack.c.l.b16 %v4168
    %v4265 = vunpack.c.h.b16 %v4168
    %v4266 = vunpack.c.l.b16 %v4169
    %v4267 = vunpack.c.h.b16 %v4169
    %v4268 = vunpack.c.l.b16 %v4170
    %v4269 = vunpack.c.h.b16 %v4170
    %v4270 = vunpack.c.l.b16 %v4171
    %v4271 = vunpack.c.h.b16 %v4171
    %v4272 = vunpack.c.l.b16 %v4172
    %v4273 = vunpack.c.h.b16 %v4172
    %v4274 = vunpack.c.l.b16 %v4173
    %v4275 = vunpack.c.h.b16 %v4173
    %v4276 = vunpack.c.l.b16 %v4174
    %v4277 = vunpack.c.h.b16 %v4174
    %v4278 = vunpack.c.l.b16 %v4175
    %v4279 = vunpack.c.h.b16 %v4175
    %v4280 = vunpack.c.l.b16 %v4176
    %v4281 = vunpack.c.h.b16 %v4176
    %v4282 = vunpack.c.l.b16 %v4177
    %v4283 = vunpack.c.h.b16 %v4177
    %v4284 = vunpack.c.l.b16 %v4178
    %v4285 = vunpack.c.h.b16 %v4178
    %v4286 = vunpack.c.l.b16 %v4179
    %v4287 = vunpack.c.h.b16 %v4179
    %v4288 = vpack.c.b16 %v4226, %v4224
    %v4289 = vpack.c.b16 %v4227, %v4225
    %v4290 = vpack.c.b16 %v4230, %v4228
    %v4291 = vpack.c.b16 %v4231, %v4229
    %v4292 = vpack.c.b16 %v4234, %v4232
    %v4293 = vpack.c.b16 %v4235, %v4233
    %v4294 = vpack.c.b16 %v4238, %v4236
    %v4295 = vpack.c.b16 %v4239, %v4237
    %v4296 = vpack.c.b16 %v4242, %v4240
    %v4297 = vpack.c.b16 %v4243, %v4241
    %v4298 = vpack.c.b16 %v4246, %v4244
    %v4299 = vpack.c.b16 %v4247, %v4245
    %v4300 = vpack.c.b16 %v4250, %v4248
    %v4301 = vpack.c.b16 %v4251, %v4249
    %v4302 = vpack.c.b16 %v4254, %v4252
    %v4303 = vpack.c.b16 %v4255, %v4253
    %v4304 = vpack.c.b16 %v4258, %v4256
    %v4305 = vpack.c.b16 %v4259, %v4257
    %v4306 = vpack.c.b16 %v4262, %v4260
    %v4307 = vpack.c.b16 %v4263, %v4261
    %v4308 = vpack.c.b16 %v4266, %v4264
    %v4309 = vpack.c.b16 %v4267, %v4265
    %v4310 = vpack.c.b16 %v4270, %v4268
    %v4311 = vpack.c.b16 %v4271, %v4269
    %v4312 = vpack.c.b16 %v4274, %v4272
    %v4313 = vpack.c.b16 %v4275, %v4273
    %v4314 = vpack.c.b16 %v4278, %v4276
    %v4315 = vpack.c.b16 %v4279, %v4277
    %v4316 = vpack.c.b16 %v4282, %v4280
    %v4317 = vpack.c.b16 %v4283, %v4281
    %v4318 = vpack.c.b16 %v4286, %v4284
    %v4319 = vpack.c.b16 %v4287, %v4285
    %4352 = vmatprep.subr.bf16.mxu0 %v4289
    %4353 = vmatpush1.bf16.msra.mxu0 %v4288
    %4354 = vmatprep.subr.bf16.mxu0 %v4291
    %4355 = vmatpush1.bf16.msra.mxu0 %v4290
    %4356 = vmatprep.subr.bf16.mxu0 %v4293
    %4357 = vmatpush1.bf16.msra.mxu0 %v4292
    %4358 = vmatprep.subr.bf16.mxu0 %v4295
    %4359 = vmatpush1.bf16.msra.mxu0 %v4294
    %4360 = vmatprep.subr.bf16.mxu0 %v4297
    %4361 = vmatpush1.bf16.msra.mxu0 %v4296
    %4362 = vmatprep.subr.bf16.mxu0 %v4299
    %4363 = vmatpush1.bf16.msra.mxu0 %v4298
    %4364 = vmatprep.subr.bf16.mxu0 %v4301
    %4365 = vmatpush1.bf16.msra.mxu0 %v4300
    %4366 = vmatprep.subr.bf16.mxu0 %v4303
    %4367 = vmatpush1.bf16.msra.mxu0 %v4302
    %4368 = vmatprep.subr.bf16.mxu0 %v4305
    %4369 = vmatpush1.bf16.msra.mxu0 %v4304
    %4370 = vmatprep.subr.bf16.mxu0 %v4307
    %4371 = vmatpush1.bf16.msra.mxu0 %v4306
    %4372 = vmatprep.subr.bf16.mxu0 %v4309
    %4373 = vmatpush1.bf16.msra.mxu0 %v4308
    %4374 = vmatprep.subr.bf16.mxu0 %v4311
    %4375 = vmatpush1.bf16.msra.mxu0 %v4310
    %4376 = vmatprep.subr.bf16.mxu0 %v4313
    %4377 = vmatpush1.bf16.msra.mxu0 %v4312
    %4378 = vmatprep.subr.bf16.mxu0 %v4315
    %4379 = vmatpush1.bf16.msra.mxu0 %v4314
    %4380 = vmatprep.subr.bf16.mxu0 %v4317
    %4381 = vmatpush1.bf16.msra.mxu0 %v4316
    %4382 = vmatprep.subr.bf16.mxu0 %v4319
    %4383 = vmatpush1.bf16.msra.mxu0 %v4318
    %4384 = vmatprep.mubr.bf16.mxu0 %v4117
    %4385 = vmatmul.mubr.bf16.gmra.mrb[0].mxu0 %v4116
    %v4386 = vpop.f32.mrb[0].mxu0
    %v4387 = vadd.f32 %v4185, %v4386
    %v4388 = vpop.f32.mrb[0].mxu0
    %v4389 = vadd.f32 %v4189, %v4388
    %v4390 = vpop.f32.mrb[0].mxu0
    %v4391 = vadd.f32 %v4185, %v4390
    %v4392 = vpop.f32.mrb[0].mxu0
    %v4393 = vadd.f32 %v4189, %v4392
    %4394 = vmatprep.mubr.bf16.mxu0 %v4119
    %4395 = vmatmul.mubr.bf16.gmra.mrb[0].mxu0 %v4118
    %v4396 = vpop.f32.mrb[0].mxu0
    %v4397 = vadd.f32 %v4185, %v4396
    %v4398 = vpop.f32.mrb[0].mxu0
    %v4399 = vadd.f32 %v4189, %v4398
    %v4400 = vpop.f32.mrb[0].mxu0
    %v4401 = vadd.f32 %v4185, %v4400
    %v4402 = vpop.f32.mrb[0].mxu0
    %v4403 = vadd.f32 %v4189, %v4402
    %4404 = vmatprep.mubr.bf16.mxu0 %v4121
    %4405 = vmatmul.mubr.bf16.gmra.mrb[0].mxu0 %v4120
    %v4406 = vpop.f32.mrb[0].mxu0
    %v4407 = vadd.f32 %v4185, %v4406
    %v4408 = vpop.f32.mrb[0].mxu0
    %v4409 = vadd.f32 %v4189, %v4408
    %v4410 = vpop.f32.mrb[0].mxu0
    %v4411 = vadd.f32 %v4185, %v4410
    %v4412 = vpop.f32.mrb[0].mxu0
    %v4413 = vadd.f32 %v4189, %v4412
    %4414 = vmatprep.mubr.bf16.mxu0 %v4123
    %4415 = vmatmul.mubr.bf16.gmra.mrb[0].mxu0 %v4122
    %v4416 = vpop.f32.mrb[0].mxu0
    %v4417 = vadd.f32 %v4185, %v4416
    %v4418 = vpop.f32.mrb[0].mxu0
    %v4419 = vadd.f32 %v4189, %v4418
    %v4420 = vpop.f32.mrb[0].mxu0
    %v4421 = vadd.f32 %v4185, %v4420
    %v4422 = vpop.f32.mrb[0].mxu0
    %v4423 = vadd.f32 %v4189, %v4422
    %4424 = vmatprep.mubr.bf16.mxu0 %v4125
    %4425 = vmatmul.mubr.bf16.gmra.mrb[0].mxu0 %v4124
    %v4426 = vpop.f32.mrb[0].mxu0
    %v4427 = vadd.f32 %v4185, %v4426
    %v4428 = vpop.f32.mrb[0].mxu0
    %v4429 = vadd.f32 %v4189, %v4428
    %v4430 = vpop.f32.mrb[0].mxu0
    %v4431 = vadd.f32 %v4185, %v4430
    %v4432 = vpop.f32.mrb[0].mxu0
    %v4433 = vadd.f32 %v4189, %v4432
    %4434 = vmatprep.mubr.bf16.mxu0 %v4127
    %4435 = vmatmul.mubr.bf16.gmra.mrb[0].mxu0 %v4126
    %v4436 = vpop.f32.mrb[0].mxu0
    %v4437 = vadd.f32 %v4185, %v4436
    %v4438 = vpop.f32.mrb[0].mxu0
    %v4439 = vadd.f32 %v4189, %v4438
    %v4440 = vpop.f32.mrb[0].mxu0
    %v4441 = vadd.f32 %v4185, %v4440
    %v4442 = vpop.f32.mrb[0].mxu0
    %v4443 = vadd.f32 %v4189, %v4442
    %4444 = vmatprep.mubr.bf16.mxu0 %v4129
    %4445 = vmatmul.mubr.bf16.gmra.mrb[0].mxu0 %v4128
    %v4446 = vpop.f32.mrb[0].mxu0
    %v4447 = vadd.f32 %v4185, %v4446
    %v4448 = vpop.f32.mrb[0].mxu0
    %v4449 = vadd.f32 %v4189, %v4448
    %v4450 = vpop.f32.mrb[0].mxu0
    %v4451 = vadd.f32 %v4185, %v4450
    %v4452 = vpop.f32.mrb[0].mxu0
    %v4453 = vadd.f32 %v4189, %v4452
    %4454 = vmatprep.mubr.bf16.mxu0 %v4131
    %4455 = vmatmul.mubr.bf16.gmra.mrb[0].mxu0 %v4130
    %v4456 = vpop.f32.mrb[0].mxu0
    %v4457 = vadd.f32 %v4185, %v4456
    %v4458 = vpop.f32.mrb[0].mxu0
    %v4459 = vadd.f32 %v4189, %v4458
    %v4460 = vpop.f32.mrb[0].mxu0
    %v4461 = vadd.f32 %v4185, %v4460
    %v4462 = vpop.f32.mrb[0].mxu0
    %v4463 = vadd.f32 %v4189, %v4462
    %4464 = vmatprep.mubr.bf16.mxu0 %v4133
    %4465 = vmatmul.mubr.bf16.gmra.mrb[0].mxu0 %v4132
    %v4466 = vpop.f32.mrb[0].mxu0
    %v4467 = vadd.f32 %v4185, %v4466
    %v4468 = vpop.f32.mrb[0].mxu0
    %v4469 = vadd.f32 %v4189, %v4468
    %v4470 = vpop.f32.mrb[0].mxu0
    %v4471 = vadd.f32 %v4185, %v4470
    %v4472 = vpop.f32.mrb[0].mxu0
    %v4473 = vadd.f32 %v4189, %v4472
    %4474 = vmatprep.mubr.bf16.mxu0 %v4135
    %4475 = vmatmul.mubr.bf16.gmra.mrb[0].mxu0 %v4134
    %v4476 = vpop.f32.mrb[0].mxu0
    %v4477 = vadd.f32 %v4185, %v4476
    %v4478 = vpop.f32.mrb[0].mxu0
    %v4479 = vadd.f32 %v4189, %v4478
    %v4480 = vpop.f32.mrb[0].mxu0
    %v4481 = vadd.f32 %v4185, %v4480
    %v4482 = vpop.f32.mrb[0].mxu0
    %v4483 = vadd.f32 %v4189, %v4482
    %4484 = vmatprep.mubr.bf16.mxu0 %v4137
    %4485 = vmatmul.mubr.bf16.gmra.mrb[0].mxu0 %v4136
    %v4486 = vpop.f32.mrb[0].mxu0
    %v4487 = vadd.f32 %v4185, %v4486
    %v4488 = vpop.f32.mrb[0].mxu0
    %v4489 = vadd.f32 %v4189, %v4488
    %v4490 = vpop.f32.mrb[0].mxu0
    %v4491 = vadd.f32 %v4185, %v4490
    %v4492 = vpop.f32.mrb[0].mxu0
    %v4493 = vadd.f32 %v4189, %v4492
    %4494 = vmatprep.mubr.bf16.mxu0 %v4139
    %4495 = vmatmul.mubr.bf16.gmra.mrb[0].mxu0 %v4138
    %v4496 = vpop.f32.mrb[0].mxu0
    %v4497 = vadd.f32 %v4185, %v4496
    %v4498 = vpop.f32.mrb[0].mxu0
    %v4499 = vadd.f32 %v4189, %v4498
    %v4500 = vpop.f32.mrb[0].mxu0
    %v4501 = vadd.f32 %v4185, %v4500
    %v4502 = vpop.f32.mrb[0].mxu0
    %v4503 = vadd.f32 %v4189, %v4502
    %4504 = vmatprep.mubr.bf16.mxu0 %v4141
    %4505 = vmatmul.mubr.bf16.gmra.mrb[0].mxu0 %v4140
    %v4506 = vpop.f32.mrb[0].mxu0
    %v4507 = vadd.f32 %v4185, %v4506
    %v4508 = vpop.f32.mrb[0].mxu0
    %v4509 = vadd.f32 %v4189, %v4508
    %v4510 = vpop.f32.mrb[0].mxu0
    %v4511 = vadd.f32 %v4185, %v4510
    %v4512 = vpop.f32.mrb[0].mxu0
    %v4513 = vadd.f32 %v4189, %v4512
    %4514 = vmatprep.mubr.bf16.mxu0 %v4143
    %4515 = vmatmul.mubr.bf16.gmra.mrb[0].mxu0 %v4142
    %v4516 = vpop.f32.mrb[0].mxu0
    %v4517 = vadd.f32 %v4185, %v4516
    %v4518 = vpop.f32.mrb[0].mxu0
    %v4519 = vadd.f32 %v4189, %v4518
    %v4520 = vpop.f32.mrb[0].mxu0
    %v4521 = vadd.f32 %v4185, %v4520
    %v4522 = vpop.f32.mrb[0].mxu0
    %v4523 = vadd.f32 %v4189, %v4522
    %4524 = vmatprep.mubr.bf16.mxu0 %v4145
    %4525 = vmatmul.mubr.bf16.gmra.mrb[0].mxu0 %v4144
    %v4526 = vpop.f32.mrb[0].mxu0
    %v4527 = vadd.f32 %v4185, %v4526
    %v4528 = vpop.f32.mrb[0].mxu0
    %v4529 = vadd.f32 %v4189, %v4528
    %v4530 = vpop.f32.mrb[0].mxu0
    %v4531 = vadd.f32 %v4185, %v4530
    %v4532 = vpop.f32.mrb[0].mxu0
    %v4533 = vadd.f32 %v4189, %v4532
    %4534 = vmatprep.mubr.bf16.mxu0 %v4147
    %4535 = vmatmul.mubr.bf16.gmra.mrb[0].mxu0 %v4146
    %v4536 = vpop.f32.mrb[0].mxu0
    %v4537 = vadd.f32 %v4185, %v4536
    %v4538 = vpop.f32.mrb[0].mxu0
    %v4539 = vadd.f32 %v4189, %v4538
    %v4540 = vpop.f32.mrb[0].mxu0
    %v4541 = vadd.f32 %v4185, %v4540
    %v4542 = vpop.f32.mrb[0].mxu0
    %v4543 = vadd.f32 %v4189, %v4542
    %4544 = vdwg.mxu0
    %v4545 = vmax.f32 %v4387, 0.0
    %v4546 = vmax.f32 %v4389, 0.0
    %v4547 = vmax.f32 %v4391, 0.0
    %v4548 = vmax.f32 %v4393, 0.0
    %v4549 = vmax.f32 %v4397, 0.0
    %v4550 = vmax.f32 %v4399, 0.0
    %v4551 = vmax.f32 %v4401, 0.0
    %v4552 = vmax.f32 %v4403, 0.0
    %v4553 = vmax.f32 %v4407, 0.0
    %v4554 = vmax.f32 %v4409, 0.0
    %v4555 = vmax.f32 %v4411, 0.0
    %v4556 = vmax.f32 %v4413, 0.0
    %v4557 = vmax.f32 %v4417, 0.0
    %v4558 = vmax.f32 %v4419, 0.0
    %v4559 = vmax.f32 %v4421, 0.0
    %v4560 = vmax.f32 %v4423, 0.0
    %v4561 = vmax.f32 %v4427, 0.0
    %v4562 = vmax.f32 %v4429, 0.0
    %v4563 = vmax.f32 %v4431, 0.0
    %v4564 = vmax.f32 %v4433, 0.0
    %v4565 = vmax.f32 %v4437, 0.0
    %v4566 = vmax.f32 %v4439, 0.0
    %v4567 = vmax.f32 %v4441, 0.0
    %v4568 = vmax.f32 %v4443, 0.0
    %v4569 = vmax.f32 %v4447, 0.0
    %v4570 = vmax.f32 %v4449, 0.0
    %v4571 = vmax.f32 %v4451, 0.0
    %v4572 = vmax.f32 %v4453, 0.0
    %v4573 = vmax.f32 %v4457, 0.0
    %v4574 = vmax.f32 %v4459, 0.0
    %v4575 = vmax.f32 %v4461, 0.0
    %v4576 = vmax.f32 %v4463, 0.0
    %v4577 = vmax.f32 %v4467, 0.0
    %v4578 = vmax.f32 %v4469, 0.0
    %v4579 = vmax.f32 %v4471, 0.0
    %v4580 = vmax.f32 %v4473, 0.0
    %v4581 = vmax.f32 %v4477, 0.0
    %v4582 = vmax.f32 %v4479, 0.0
    %v4583 = vmax.f32 %v4481, 0.0
    %v4584 = vmax.f32 %v4483, 0.0
    %v4585 = vmax.f32 %v4487, 0.0
    %v4586 = vmax.f32 %v4489, 0.0
    %v4587 = vmax.f32 %v4491, 0.0
    %v4588 = vmax.f32 %v4493, 0.0
    %v4589 = vmax.f32 %v4497, 0.0
    %v4590 = vmax.f32 %v4499, 0.0
    %v4591 = vmax.f32 %v4501, 0.0
    %v4592 = vmax.f32 %v4503, 0.0
    %v4593 = vmax.f32 %v4507, 0.0
    %v4594 = vmax.f32 %v4509, 0.0
    %v4595 = vmax.f32 %v4511, 0.0
    %v4596 = vmax.f32 %v4513, 0.0
    %v4597 = vmax.f32 %v4517, 0.0
    %v4598 = vmax.f32 %v4519, 0.0
    %v4599 = vmax.f32 %v4521, 0.0
    %v4600 = vmax.f32 %v4523, 0.0
    %v4601 = vmax.f32 %v4527, 0.0
    %v4602 = vmax.f32 %v4529, 0.0
    %v4603 = vmax.f32 %v4531, 0.0
    %v4604 = vmax.f32 %v4533, 0.0
    %v4605 = vmax.f32 %v4537, 0.0
    %v4606 = vmax.f32 %v4539, 0.0
    %v4607 = vmax.f32 %v4541, 0.0
    %v4608 = vmax.f32 %v4543, 0.0
    %v4609 = vld [vmem:[%s9] sm:$0x3]
    %v4611 = vlaneseq
    %v4612 = vshrl.u32 %v4611, 7
    %v4613 = vsub.s32 0, %v4612
    %v4614 = vrot.slane %v4609, %v4613
    %v4615 = vlaneseq
    %v4616 = vshrl.u32 %v4615, 7
    %v4617 = vsub.s32 1, %v4616
    %v4618 = vrot.slane %v4609, %v4617
    %v4621 = vmul.f32 %v4545, %v4614
    %v4622 = vmul.f32 %v4546, %v4618
    %v4623 = vmul.f32 %v4547, %v4614
    %v4624 = vmul.f32 %v4548, %v4618
    %v4625 = vmul.f32 %v4549, %v4614
    %v4626 = vmul.f32 %v4550, %v4618
    %v4627 = vmul.f32 %v4551, %v4614
    %v4628 = vmul.f32 %v4552, %v4618
    %v4629 = vmul.f32 %v4553, %v4614
    %v4630 = vmul.f32 %v4554, %v4618
    %v4631 = vmul.f32 %v4555, %v4614
    %v4632 = vmul.f32 %v4556, %v4618
    %v4633 = vmul.f32 %v4557, %v4614
    %v4634 = vmul.f32 %v4558, %v4618
    %v4635 = vmul.f32 %v4559, %v4614
    %v4636 = vmul.f32 %v4560, %v4618
    %v4637 = vmul.f32 %v4561, %v4614
    %v4638 = vmul.f32 %v4562, %v4618
    %v4639 = vmul.f32 %v4563, %v4614
    %v4640 = vmul.f32 %v4564, %v4618
    %v4641 = vmul.f32 %v4565, %v4614
    %v4642 = vmul.f32 %v4566, %v4618
    %v4643 = vmul.f32 %v4567, %v4614
    %v4644 = vmul.f32 %v4568, %v4618
    %v4645 = vmul.f32 %v4569, %v4614
    %v4646 = vmul.f32 %v4570, %v4618
    %v4647 = vmul.f32 %v4571, %v4614
    %v4648 = vmul.f32 %v4572, %v4618
    %v4649 = vmul.f32 %v4573, %v4614
    %v4650 = vmul.f32 %v4574, %v4618
    %v4651 = vmul.f32 %v4575, %v4614
    %v4652 = vmul.f32 %v4576, %v4618
    %v4653 = vmul.f32 %v4577, %v4614
    %v4654 = vmul.f32 %v4578, %v4618
    %v4655 = vmul.f32 %v4579, %v4614
    %v4656 = vmul.f32 %v4580, %v4618
    %v4657 = vmul.f32 %v4581, %v4614
    %v4658 = vmul.f32 %v4582, %v4618
    %v4659 = vmul.f32 %v4583, %v4614
    %v4660 = vmul.f32 %v4584, %v4618
    %v4661 = vmul.f32 %v4585, %v4614
    %v4662 = vmul.f32 %v4586, %v4618
    %v4663 = vmul.f32 %v4587, %v4614
    %v4664 = vmul.f32 %v4588, %v4618
    %v4665 = vmul.f32 %v4589, %v4614
    %v4666 = vmul.f32 %v4590, %v4618
    %v4667 = vmul.f32 %v4591, %v4614
    %v4668 = vmul.f32 %v4592, %v4618
    %v4669 = vmul.f32 %v4593, %v4614
    %v4670 = vmul.f32 %v4594, %v4618
    %v4671 = vmul.f32 %v4595, %v4614
    %v4672 = vmul.f32 %v4596, %v4618
    %v4673 = vmul.f32 %v4597, %v4614
    %v4674 = vmul.f32 %v4598, %v4618
    %v4675 = vmul.f32 %v4599, %v4614
    %v4676 = vmul.f32 %v4600, %v4618
    %v4677 = vmul.f32 %v4601, %v4614
    %v4678 = vmul.f32 %v4602, %v4618
    %v4679 = vmul.f32 %v4603, %v4614
    %v4680 = vmul.f32 %v4604, %v4618
    %v4681 = vmul.f32 %v4605, %v4614
    %v4682 = vmul.f32 %v4606, %v4618
    %v4683 = vmul.f32 %v4607, %v4614
    %v4684 = vmul.f32 %v4608, %v4618
    %v4685 = vadd.f32 %v4621, %v4622
    %4686 = vadd.xlane.f32.xlu0 %v4685
    %v4687 = vpop.xlane.xlu0 %4686
    %v4688 = vadd.f32 %v4623, %v4624
    %4689 = vadd.xlane.f32.xlu0 %v4688
    %v4690 = vpop.xlane.xlu0 %4689
    %v4691 = vadd.f32 %v4625, %v4626
    %4692 = vadd.xlane.f32.xlu0 %v4691
    %v4693 = vpop.xlane.xlu0 %4692
    %v4694 = vadd.f32 %v4627, %v4628
    %4695 = vadd.xlane.f32.xlu0 %v4694
    %v4696 = vpop.xlane.xlu0 %4695
    %v4697 = vadd.f32 %v4629, %v4630
    %4698 = vadd.xlane.f32.xlu0 %v4697
    %v4699 = vpop.xlane.xlu0 %4698
    %v4700 = vadd.f32 %v4631, %v4632
    %4701 = vadd.xlane.f32.xlu0 %v4700
    %v4702 = vpop.xlane.xlu0 %4701
    %v4703 = vadd.f32 %v4633, %v4634
    %4704 = vadd.xlane.f32.xlu0 %v4703
    %v4705 = vpop.xlane.xlu0 %4704
    %v4706 = vadd.f32 %v4635, %v4636
    %4707 = vadd.xlane.f32.xlu0 %v4706
    %v4708 = vpop.xlane.xlu0 %4707
    %v4709 = vadd.f32 %v4637, %v4638
    %4710 = vadd.xlane.f32.xlu0 %v4709
    %v4711 = vpop.xlane.xlu0 %4710
    %v4712 = vadd.f32 %v4639, %v4640
    %4713 = vadd.xlane.f32.xlu0 %v4712
    %v4714 = vpop.xlane.xlu0 %4713
    %v4715 = vadd.f32 %v4641, %v4642
    %4716 = vadd.xlane.f32.xlu0 %v4715
    %v4717 = vpop.xlane.xlu0 %4716
    %v4718 = vadd.f32 %v4643, %v4644
    %4719 = vadd.xlane.f32.xlu0 %v4718
    %v4720 = vpop.xlane.xlu0 %4719
    %v4721 = vadd.f32 %v4645, %v4646
    %4722 = vadd.xlane.f32.xlu0 %v4721
    %v4723 = vpop.xlane.xlu0 %4722
    %v4724 = vadd.f32 %v4647, %v4648
    %4725 = vadd.xlane.f32.xlu0 %v4724
    %v4726 = vpop.xlane.xlu0 %4725
    %v4727 = vadd.f32 %v4649, %v4650
    %4728 = vadd.xlane.f32.xlu0 %v4727
    %v4729 = vpop.xlane.xlu0 %4728
    %v4730 = vadd.f32 %v4651, %v4652
    %4731 = vadd.xlane.f32.xlu0 %v4730
    %v4732 = vpop.xlane.xlu0 %4731
    %v4733 = vadd.f32 %v4653, %v4654
    %4734 = vadd.xlane.f32.xlu0 %v4733
    %v4735 = vpop.xlane.xlu0 %4734
    %v4736 = vadd.f32 %v4655, %v4656
    %4737 = vadd.xlane.f32.xlu0 %v4736
    %v4738 = vpop.xlane.xlu0 %4737
    %v4739 = vadd.f32 %v4657, %v4658
    %4740 = vadd.xlane.f32.xlu0 %v4739
    %v4741 = vpop.xlane.xlu0 %4740
    %v4742 = vadd.f32 %v4659, %v4660
    %4743 = vadd.xlane.f32.xlu0 %v4742
    %v4744 = vpop.xlane.xlu0 %4743
    %v4745 = vadd.f32 %v4661, %v4662
    %4746 = vadd.xlane.f32.xlu0 %v4745
    %v4747 = vpop.xlane.xlu0 %4746
    %v4748 = vadd.f32 %v4663, %v4664
    %4749 = vadd.xlane.f32.xlu0 %v4748
    %v4750 = vpop.xlane.xlu0 %4749
    %v4751 = vadd.f32 %v4665, %v4666
    %4752 = vadd.xlane.f32.xlu0 %v4751
    %v4753 = vpop.xlane.xlu0 %4752
    %v4754 = vadd.f32 %v4667, %v4668
    %4755 = vadd.xlane.f32.xlu0 %v4754
    %v4756 = vpop.xlane.xlu0 %4755
    %v4757 = vadd.f32 %v4669, %v4670
    %4758 = vadd.xlane.f32.xlu0 %v4757
    %v4759 = vpop.xlane.xlu0 %4758
    %v4760 = vadd.f32 %v4671, %v4672
    %4761 = vadd.xlane.f32.xlu0 %v4760
    %v4762 = vpop.xlane.xlu0 %4761
    %v4763 = vadd.f32 %v4673, %v4674
    %4764 = vadd.xlane.f32.xlu0 %v4763
    %v4765 = vpop.xlane.xlu0 %4764
    %v4766 = vadd.f32 %v4675, %v4676
    %4767 = vadd.xlane.f32.xlu0 %v4766
    %v4768 = vpop.xlane.xlu0 %4767
    %v4769 = vadd.f32 %v4677, %v4678
    %4770 = vadd.xlane.f32.xlu0 %v4769
    %v4771 = vpop.xlane.xlu0 %4770
    %v4772 = vadd.f32 %v4679, %v4680
    %4773 = vadd.xlane.f32.xlu0 %v4772
    %v4774 = vpop.xlane.xlu0 %4773
    %v4775 = vadd.f32 %v4681, %v4682
    %4776 = vadd.xlane.f32.xlu0 %v4775
    %v4777 = vpop.xlane.xlu0 %4776
    %v4778 = vadd.f32 %v4683, %v4684
    %4779 = vadd.xlane.f32.xlu0 %v4778
    %v4780 = vpop.xlane.xlu0 %4779
    %v4781 = vld [vmem:[#allocation2] sm:$0x1]
    %v4783 = vlaneseq
    %v4784 = vshrl.u32 %v4783, 7
    %v4785 = vsub.s32 0, %v4784
    %v4786 = vrot.slane %v4781, %v4785
    %v4788 = vadd.f32 %v4687, %v4786
    %v4789 = vadd.f32 %v4690, %v4786
    %v4790 = vadd.f32 %v4693, %v4786
    %v4791 = vadd.f32 %v4696, %v4786
    %v4792 = vadd.f32 %v4699, %v4786
    %v4793 = vadd.f32 %v4702, %v4786
    %v4794 = vadd.f32 %v4705, %v4786
    %v4795 = vadd.f32 %v4708, %v4786
    %v4796 = vadd.f32 %v4711, %v4786
    %v4797 = vadd.f32 %v4714, %v4786
    %v4798 = vadd.f32 %v4717, %v4786
    %v4799 = vadd.f32 %v4720, %v4786
    %v4800 = vadd.f32 %v4723, %v4786
    %v4801 = vadd.f32 %v4726, %v4786
    %v4802 = vadd.f32 %v4729, %v4786
    %v4803 = vadd.f32 %v4732, %v4786
    %v4804 = vadd.f32 %v4735, %v4786
    %v4805 = vadd.f32 %v4738, %v4786
    %v4806 = vadd.f32 %v4741, %v4786
    %v4807 = vadd.f32 %v4744, %v4786
    %v4808 = vadd.f32 %v4747, %v4786
    %v4809 = vadd.f32 %v4750, %v4786
    %v4810 = vadd.f32 %v4753, %v4786
    %v4811 = vadd.f32 %v4756, %v4786
    %v4812 = vadd.f32 %v4759, %v4786
    %v4813 = vadd.f32 %v4762, %v4786
    %v4814 = vadd.f32 %v4765, %v4786
    %v4815 = vadd.f32 %v4768, %v4786
    %v4816 = vadd.f32 %v4771, %v4786
    %v4817 = vadd.f32 %v4774, %v4786
    %v4818 = vadd.f32 %v4777, %v4786
    %v4819 = vadd.f32 %v4780, %v4786
    %4820 = vst.msk [vmem:[%s11 + $0x100] sm:$0xff] %vm2421, %v4788
    %4821 = vst.msk [vmem:[%s11 + $0x108] sm:$0xff] %vm2421, %v4789
    %4822 = vst.msk [vmem:[%s11 + $0x110] sm:$0xff] %vm2421, %v4790
    %4823 = vst.msk [vmem:[%s11 + $0x118] sm:$0xff] %vm2421, %v4791
    %4824 = vst.msk [vmem:[%s11 + $0x120] sm:$0xff] %vm2421, %v4792
    %4825 = vst.msk [vmem:[%s11 + $0x128] sm:$0xff] %vm2421, %v4793
    %4826 = vst.msk [vmem:[%s11 + $0x130] sm:$0xff] %vm2421, %v4794
    %4827 = vst.msk [vmem:[%s11 + $0x138] sm:$0xff] %vm2421, %v4795
    %4828 = vst.msk [vmem:[%s11 + $0x140] sm:$0xff] %vm2421, %v4796
    %4829 = vst.msk [vmem:[%s11 + $0x148] sm:$0xff] %vm2421, %v4797
    %4830 = vst.msk [vmem:[%s11 + $0x150] sm:$0xff] %vm2421, %v4798
    %4831 = vst.msk [vmem:[%s11 + $0x158] sm:$0xff] %vm2421, %v4799
    %4832 = vst.msk [vmem:[%s11 + $0x160] sm:$0xff] %vm2421, %v4800
    %4833 = vst.msk [vmem:[%s11 + $0x168] sm:$0xff] %vm2421, %v4801
    %4834 = vst.msk [vmem:[%s11 + $0x170] sm:$0xff] %vm2421, %v4802
    %4835 = vst.msk [vmem:[%s11 + $0x178] sm:$0xff] %vm2421, %v4803
    %4836 = vst.msk [vmem:[%s11 + $0x180] sm:$0xff] %vm2421, %v4804
    %4837 = vst.msk [vmem:[%s11 + $0x188] sm:$0xff] %vm2421, %v4805
    %4838 = vst.msk [vmem:[%s11 + $0x190] sm:$0xff] %vm2421, %v4806
    %4839 = vst.msk [vmem:[%s11 + $0x198] sm:$0xff] %vm2421, %v4807
    %4840 = vst.msk [vmem:[%s11 + $0x1a0] sm:$0xff] %vm2421, %v4808
    %4841 = vst.msk [vmem:[%s11 + $0x1a8] sm:$0xff] %vm2421, %v4809
    %4842 = vst.msk [vmem:[%s11 + $0x1b0] sm:$0xff] %vm2421, %v4810
    %4843 = vst.msk [vmem:[%s11 + $0x1b8] sm:$0xff] %vm2421, %v4811
    %4844 = vst.msk [vmem:[%s11 + $0x1c0] sm:$0xff] %vm2421, %v4812
    %4845 = vst.msk [vmem:[%s11 + $0x1c8] sm:$0xff] %vm2421, %v4813
    %4846 = vst.msk [vmem:[%s11 + $0x1d0] sm:$0xff] %vm2421, %v4814
    %4847 = vst.msk [vmem:[%s11 + $0x1d8] sm:$0xff] %vm2421, %v4815
    %4848 = vst.msk [vmem:[%s11 + $0x1e0] sm:$0xff] %vm2421, %v4816
    %4849 = vst.msk [vmem:[%s11 + $0x1e8] sm:$0xff] %vm2421, %v4817
    %4850 = vst.msk [vmem:[%s11 + $0x1f0] sm:$0xff] %vm2421, %v4818
    %4851 = vst.msk [vmem:[%s11 + $0x1f8] sm:$0xff] %vm2421, %v4819
    // Predicated region
    $region50: #{tpu_custom_call.1} parent=1 // pred_check
      _
    $region51: #{tpu_custom_call.1} parent=1 // pred_check_branch
      %4853 = sbr.rel (0) target = $region53
    $region52: #{tpu_custom_call.1} parent=1 // pred_region
      _
    $region53: #{tpu_custom_call.1} parent=1 // pred_fallthru
      _
    // Predicated region
    $region54: #{tpu_custom_call.1} parent=1 // pred_check
      _
    $region55: #{tpu_custom_call.1} parent=1 // pred_check_branch
      %4855 = sbr.rel (0) target = $region57
    $region56: #{tpu_custom_call.1} parent=1 // pred_region
      _
    $region57: #{tpu_custom_call.1} parent=1 // pred_fallthru
      _
    %4856 = vsyncpa [#allocation4], 1

</llo_original>
